<compile_context>
chip_gen: v5e
topology: v5e:2x2
jax: 0.10.0
libtpu: 0.0.40
codegen_flags: <defaults>
</compile_context>

<pallas_src>
import numpy as np
import jax
import jax.numpy as jnp
from jax import lax
from jax.experimental import pallas as pl
from jax.experimental.pallas import tpu as pltpu

jax.config.update("jax_default_matmul_precision", "highest")

EPS_RMS = 1e-5
EPS_NORM = 1e-5
N_BLOCKS = 3


# ----------------------------- kernel helpers -----------------------------

def _silu(x):
    return x * jax.nn.sigmoid(x)


def _softplus(x):
    # matches torch.nn.functional.softplus (threshold=20)
    return jnp.where(x > 20.0, x, jnp.log1p(jnp.exp(jnp.minimum(x, 20.0))))


# ----------------------------- fused model kernel ---------------------------

def fused_model_kernel(x_ref,                      # (B*F, P)  raw (un-normalized)
                       mask_ref,                   # (B*F, 1)  1.0 on raw-feature rows
                       normw_ref,                  # (3, 1, P)
                       w4_ref, b4_ref,             # (3, P, 8P), (3, 1, 8P)   [tm1|inp|tp1|D]
                       convw_ref, convb_ref,       # (3, B*F, 3*B*F), (3, B*F, 1)
                       clw_ref, clb_ref,           # (3, 2P, 2P), (3, 1, 2P)
                       fcw_ref, fcb_ref,           # (3, 2P, 4P), (3, 1, 4P)  [fc1|fc2|fc3]
                       opw_ref, opb_ref,           # (3, 2P, P),  (3, 1, P)
                       projw_ref, projb_ref,       # (P, P), (1, P)
                       o_ref):                     # (B*F, P)
    f32 = jnp.float32
    P = o_ref.shape[1]
    T = 2 * P

    x_raw = x_ref[...]                                          # (BF, P)
    mask = mask_ref[...]                                        # (BF, 1)

    # ---- instance norm over the pred_len axis (raw-feature rows only) ----
    mu = jnp.mean(x_raw, axis=-1, keepdims=True) * mask         # 0 on time-mark rows
    xcen = x_raw - mu
    var = jnp.mean(xcen * xcen, axis=-1, keepdims=True)
    stdev = jnp.where(mask > 0.0, jnp.sqrt(var + EPS_NORM), 1.0)
    x = xcen / stdev                                            # (BF, P)

    for i in range(N_BLOCKS):                                   # unrolled; x stays on-chip
        # RMSNorm (with learned scale)
        ms = jnp.mean(x * x, axis=-1, keepdims=True)
        xn = x * lax.rsqrt(ms + EPS_RMS) * normw_ref[i]         # (BF, P)

        # One 128-lane matmul producing [x(t-1) | x(t) | x(t+1) | D] chunks.
        # The Conv1d "padding=1" time shifts were folded into the weights on
        # the host, so the padding columns are exact zeros.
        xbig = jnp.dot(xn, w4_ref[i], preferred_element_type=f32) + b4_ref[i]   # (BF, 8P)
        d_pre = xbig[:, 3 * T:4 * T]                            # (BF, 2P)

        # Conv1d(F, F, k=3, padding=1): fuse the 3 tap matmuls into one.
        # Row-stack the three shifted operands (tap order t-1, t, t+1) and
        # multiply by the horizontally-stacked block-diagonal channel weights.
        stacked = jnp.concatenate(
            [xbig[:, 0:T], xbig[:, T:2 * T], xbig[:, 2 * T:3 * T]], axis=0)     # (3BF, 2P)
        xc = (jnp.dot(convw_ref[i], stacked, preferred_element_type=f32)
              + convb_ref[i])                                    # (BF, 2P)

        xca = _silu(xc)
        xco = jnp.dot(xca, clw_ref[i], preferred_element_type=f32) + clb_ref[i]

        # S6: h is freshly zeroed every forward, so the dA*h term vanishes and
        #   y[l, d] = x[l, d] * delta[l, d] * sum_n B[l, n] * C[l, n]
        # fc1 | fc2 | fc3 fused into one (2P, 4P) matmul.
        f = jnp.dot(xco, fcw_ref[i], preferred_element_type=f32) + fcb_ref[i]   # (BF, 4P)
        delta = _softplus(f[:, 0:T])
        bm = f[:, T:T + P]
        cm = f[:, T + P:T + 2 * P]
        bc = jnp.sum(bm * cm, axis=-1, keepdims=True)            # (BF, 1)
        y_ssm = xco * delta * bc                                 # (BF, 2P)

        comb = _silu(y_ssm) * _silu(d_pre)
        x = jnp.dot(comb, opw_ref[i], preferred_element_type=f32) + opb_ref[i]

    # Final projector (pred_len -> pred_len) + de-normalization, all in-kernel.
    dec = jnp.dot(x, projw_ref[...], preferred_element_type=f32) + projb_ref[...]
    o_ref[...] = dec * stdev + mu


def fused_mamba_forward(x2d, mask, packed):
    """x2d: (B*F, P) float32 raw features; mask: (B*F, 1); packed: weights."""
    BF, P = x2d.shape
    T = 2 * P
    vmem = pl.BlockSpec(memory_space=pltpu.MemorySpace.VMEM)

    matmul_flops = 2 * N_BLOCKS * (BF * P * 8 * P       # fused inp/tm1/tp1/D projection
                                   + BF * 3 * BF * T    # fused conv taps
                                   + BF * T * T         # conv_linear
                                   + BF * T * 4 * P     # fused fc1|fc2|fc3
                                   + BF * T * P)        # out_proj
    matmul_flops += 2 * BF * P * P                       # final projector
    weight_elems = sum(int(np.prod(a.shape)) for a in packed)
    cost = pl.CostEstimate(
        flops=int(matmul_flops),
        transcendentals=int(N_BLOCKS * 7 * BF * T),
        bytes_accessed=int(4 * (weight_elems + 2 * BF * P + BF)))

    return pl.pallas_call(
        fused_model_kernel,
        out_shape=jax.ShapeDtypeStruct((BF, P), jnp.float32),
        in_specs=[vmem] * (2 + len(packed)),
        out_specs=vmem,
        cost_estimate=cost,
    )(x2d, mask, *packed)


# ----------------------------- parameters ----------------------------------

def init_mamba_block_params(key, F_, P):
    """Deterministic synthetic init.  Linear weights stored pre-transposed as
    (in, out) so kernels compute x @ W + b.  Conv weight as (tap, out_ch, in_ch).
    S6.A is never materialized: with h freshly zeroed, dA*h == 0."""
    TwoP = 2 * P
    ks = jax.random.split(key, 16)

    def w(k, shape, scale=0.1):
        return jax.random.normal(k, shape, jnp.float32) * scale

    return dict(
        norm_w=1.0 + 0.05 * jax.random.normal(ks[15], (P,), jnp.float32),
        inp_w=w(ks[0], (P, TwoP)),    inp_b=w(ks[1], (1, TwoP)),
        conv_w=w(ks[2], (3, F_, F_)), conv_b=w(ks[3], (F_, 1)),
        cl_w=w(ks[4], (TwoP, TwoP)),  cl_b=w(ks[5], (1, TwoP)),
        fc1_w=w(ks[6], (TwoP, TwoP)), fc1_b=w(ks[7], (1, TwoP)),
        fc2_w=w(ks[8], (TwoP, P)),    fc2_b=w(ks[9], (1, P)),
        fc3_w=w(ks[10], (TwoP, P)),   fc3_b=w(ks[11], (1, P)),
        d_w=w(ks[12], (P, TwoP)),     d_b=w(ks[13], (1, TwoP)),
        op_w=w(ks[14], (TwoP, P)),    op_b=jnp.ones((1, P), jnp.float32),  # bias=1.0
    )


def pack_params(params_blocks, proj_w, proj_b, B):
    """Host-side precomputation (done once):
       * fold the Conv1d time-shifts into the inp_proj weights and hstack the
         4 projections sharing xn into one (P, 8P) weight,
       * hstack the 3 block-diagonal conv channel-mixing taps into (BF, 3BF),
       * hstack fc1|fc2|fc3 into one (2P, 4P) weight,
       * stack per-block params along a leading block axis."""
    P = proj_w.shape[0]
    T = 2 * P
    s_prev = jnp.eye(T, k=1,  dtype=jnp.float32)   # xp @ s_prev -> x[:, t-1], 0 at t=0
    s_next = jnp.eye(T, k=-1, dtype=jnp.float32)   # xp @ s_next -> x[:, t+1], 0 at t=T-1
    eye_b = jnp.eye(B, dtype=jnp.float32)

    normw, w4, b4, convw, convb = [], [], [], [], []
    clw, clb, fcw, fcb, opw, opb = [], [], [], [], [], []

    for p in params_blocks:
        normw.append(p['norm_w'].reshape(1, P))
        # lane order: [tm1 | inp | tp1 | D] -> matches in-kernel slicing
        w4.append(jnp.concatenate([p['inp_w'] @ s_prev, p['inp_w'],
                                   p['inp_w'] @ s_next, p['d_w']], axis=1))
        b4.append(jnp.concatenate([p['inp_b'] @ s_prev, p['inp_b'],
                                   p['inp_b'] @ s_next, p['d_b']], axis=1))
        # conv taps 0,1,2 (t-1, t, t+1) hstacked; each is block-diag over batch
        convw.append(jnp.concatenate(
            [jnp.kron(eye_b, p['conv_w'][k]) for k in range(3)], axis=1))   # (BF, 3BF)
        convb.append(jnp.tile(p['conv_b'], (B, 1)))                          # (BF, 1)
        clw.append(p['cl_w']);  clb.append(p['cl_b'])
        fcw.append(jnp.concatenate([p['fc1_w'], p['fc2_w'], p['fc3_w']], axis=1))
        fcb.append(jnp.concatenate([p['fc1_b'], p['fc2_b'], p['fc3_b']], axis=1))
        opw.append(p['op_w']);  opb.append(p['op_b'])

    stacks = [jnp.stack(v) for v in
              (normw, w4, b4, convw, convb, clw, clb, fcw, fcb, opw, opb)]
    return stacks + [proj_w, proj_b]


# ----------------------------- full model forward --------------------------

def model_forward(x_enc, x_mark_enc, x_dec, x_mark_dec, packed, use_norm=True):
    del x_dec, x_mark_dec  # unused, as in the PyTorch forecast()
    B, P, N = x_enc.shape
    x = jnp.concatenate([x_enc, x_mark_enc], axis=2)           # (B, P, F)
    F_ = x.shape[2]
    x2d = jnp.transpose(x, (0, 2, 1)).reshape(B * F_, P)       # batch folded into rows
    if use_norm:
        feat_mask = (jnp.arange(F_) < N).astype(jnp.float32)   # normalize raw rows only
    else:
        feat_mask = jnp.zeros((F_,), jnp.float32)
    mask = jnp.tile(feat_mask, (B,)).reshape(B * F_, 1)
    dec2d = fused_mamba_forward(x2d, mask, packed)             # ONE pallas_call
    dec = jnp.transpose(dec2d.reshape(B, F_, P), (0, 2, 1))    # (B, P, F)
    return dec[:, :, :N]                                       # == out[:, -P:, :]


# ----------------------------- pure-JAX reference --------------------------

def _ref_block(x, p):
    ms = jnp.mean(x * x, axis=-1, keepdims=True)
    xn = x * lax.rsqrt(ms + EPS_RMS) * p['norm_w']
    xp = xn @ p['inp_w'] + p['inp_b']
    xpad = jnp.pad(xp, ((0, 0), (0, 0), (1, 1)))
    xc = (jnp.einsum('of,bft->bot', p['conv_w'][0], xpad[:, :, 0:-2])
          + jnp.einsum('of,bft->bot', p['conv_w'][1], xpad[:, :, 1:-1])
          + jnp.einsum('of,bft->bot', p['conv_w'][2], xpad[:, :, 2:])
          + p['conv_b'][None, :, :])
    xca = jax.nn.silu(xc)
    xco = xca @ p['cl_w'] + p['cl_b']
    Bm = xco @ p['fc2_w'] + p['fc2_b']
    Cm = xco @ p['fc3_w'] + p['fc3_b']
    delta = jax.nn.softplus(xco @ p['fc1_w'] + p['fc1_b'])
    bc = jnp.sum(Bm * Cm, axis=-1, keepdims=True)
    y = xco * delta * bc
    return (jax.nn.silu(y) * jax.nn.silu(xn @ p['d_w'] + p['d_b'])) @ p['op_w'] + p['op_b']


def ref_forward(x_enc, x_mark_enc, params_blocks, proj_w, proj_b, use_norm=True):
    if use_norm:
        means = jnp.mean(x_enc, axis=1, keepdims=True)
        x_enc = x_enc - means
        stdev = jnp.sqrt(jnp.var(x_enc, axis=1, keepdims=True) + 1e-5)
        x_enc = x_enc / stdev
    N = x_enc.shape[2]
    x = jnp.transpose(jnp.concatenate([x_enc, x_mark_enc], axis=2), (0, 2, 1))
    for p in params_blocks:
        x = _ref_block(x, p)
    dec = jnp.transpose(x @ proj_w + proj_b, (0, 2, 1))[:, :, :N]
    if use_norm:
        dec = dec * stdev[:, 0:1, :] + means[:, 0:1, :]
    return dec


# ----------------------------- main -----------------------------------------

if __name__ == "__main__":
    B = 2        # configs.batch_size
    P = 16       # configs.pred_len  (== d_model == state_size)
    F_ = 8       # configs.feature_dim (N raw features + M time marks)
    N = 6
    M = F_ - N

    key = jax.random.PRNGKey(0)
    k_in, k_mark, kb1, kb2, kb3, k_proj = jax.random.split(key, 6)

    x_enc = jax.random.normal(k_in, (B, P, N), jnp.float32)
    x_mark_enc = jax.random.normal(k_mark, (B, P, M), jnp.float32)
    x_dec = jnp.zeros((B, P, N), jnp.float32)        # unused by forecast()
    x_mark_dec = jnp.zeros((B, P, M), jnp.float32)   # unused by forecast()

    params_blocks = [init_mamba_block_params(k, F_, P) for k in (kb1, kb2, kb3)]
    kpw, kpb = jax.random.split(k_proj)
    proj_w = jax.random.normal(kpw, (P, P), jnp.float32) * 0.1
    proj_b = jax.random.normal(kpb, (1, P), jnp.float32) * 0.1

    packed = pack_params(params_blocks, proj_w, proj_b, B)

    fwd = jax.jit(lambda xe, xm, xd, xmd:
                  model_forward(xe, xm, xd, xmd, packed, use_norm=True))
    out = fwd(x_enc, x_mark_enc, x_dec, x_mark_dec)
    out = jax.block_until_ready(out)
    assert out.shape == (B, P, N), out.shape

    ref = ref_forward(x_enc, x_mark_enc, params_blocks, proj_w, proj_b, use_norm=True)
    np.testing.assert_allclose(np.asarray(out), np.asarray(ref),
                               rtol=1e-4, atol=1e-4)
    print("KERNEL_OK")
</pallas_src>

<mosaic_0001>
module attributes {stable_mosaic.version = 11 : i64} {
  func.func @fused_model_kernel(%arg0: memref<16x16xf32, #tpu.memory_space<vmem>>, %arg1: memref<16x1xf32, #tpu.memory_space<vmem>>, %arg2: memref<3x1x16xf32, #tpu.memory_space<vmem>>, %arg3: memref<3x16x128xf32, #tpu.memory_space<vmem>>, %arg4: memref<3x1x128xf32, #tpu.memory_space<vmem>>, %arg5: memref<3x16x48xf32, #tpu.memory_space<vmem>>, %arg6: memref<3x16x1xf32, #tpu.memory_space<vmem>>, %arg7: memref<3x32x32xf32, #tpu.memory_space<vmem>>, %arg8: memref<3x1x32xf32, #tpu.memory_space<vmem>>, %arg9: memref<3x32x64xf32, #tpu.memory_space<vmem>>, %arg10: memref<3x1x64xf32, #tpu.memory_space<vmem>>, %arg11: memref<3x32x16xf32, #tpu.memory_space<vmem>>, %arg12: memref<3x1x16xf32, #tpu.memory_space<vmem>>, %arg13: memref<16x16xf32, #tpu.memory_space<vmem>>, %arg14: memref<1x16xf32, #tpu.memory_space<vmem>>, %arg15: memref<16x16xf32, #tpu.memory_space<vmem>>) attributes {dimension_semantics = [], scalar_prefetch = 0 : i64, scratch_operands = 0 : i64, tpu.core_type = #tpu.core_type<tc>} {
    %c0 = arith.constant 0 : index
    %c0_0 = arith.constant 0 : index
    %0 = vector.load %arg0[%c0, %c0_0] : memref<16x16xf32, #tpu.memory_space<vmem>>, vector<16x16xf32>
    %c0_1 = arith.constant 0 : index
    %c0_2 = arith.constant 0 : index
    %1 = vector.load %arg1[%c0_1, %c0_2] : memref<16x1xf32, #tpu.memory_space<vmem>>, vector<16x1xf32>
    %cst = arith.constant dense<0.000000e+00> : vector<16xf32>
    %2 = vector.multi_reduction <add>, %0, %cst [1] : vector<16x16xf32> to vector<16xf32>
    %3 = vector.shape_cast %2 : vector<16xf32> to vector<16x1xf32>
    %cst_3 = arith.constant 1.600000e+01 : f32
    %4 = vector.broadcast %cst_3 : f32 to vector<16x1xf32>
    %5 = arith.divf %3, %4 : vector<16x1xf32>
    %6 = arith.mulf %5, %1 : vector<16x1xf32>
    %7 = vector.broadcast %6 : vector<16x1xf32> to vector<16x16xf32>
    %8 = arith.subf %0, %7 : vector<16x16xf32>
    %9 = arith.mulf %8, %8 : vector<16x16xf32>
    %cst_4 = arith.constant dense<0.000000e+00> : vector<16xf32>
    %10 = vector.multi_reduction <add>, %9, %cst_4 [1] : vector<16x16xf32> to vector<16xf32>
    %11 = vector.shape_cast %10 : vector<16xf32> to vector<16x1xf32>
    %cst_5 = arith.constant 1.600000e+01 : f32
    %12 = vector.broadcast %cst_5 : f32 to vector<16x1xf32>
    %13 = arith.divf %11, %12 : vector<16x1xf32>
    %cst_6 = arith.constant 0.000000e+00 : f32
    %14 = vector.broadcast %cst_6 : f32 to vector<16x1xf32>
    %15 = arith.cmpf ogt, %1, %14 : vector<16x1xf32>
    %cst_7 = arith.constant 9.99999974E-6 : f32
    %16 = vector.broadcast %cst_7 : f32 to vector<16x1xf32>
    %17 = arith.addf %13, %16 : vector<16x1xf32>
    %18 = math.sqrt %17 : vector<16x1xf32>
    %cst_8 = arith.constant 1.000000e+00 : f32
    %19 = vector.broadcast %cst_8 : f32 to vector<16x1xf32>
    %20 = arith.select %15, %18, %19 : vector<16x1xi1>, vector<16x1xf32>
    %21 = vector.broadcast %20 : vector<16x1xf32> to vector<16x16xf32>
    %22 = arith.divf %8, %21 : vector<16x16xf32>
    %23 = arith.mulf %22, %22 : vector<16x16xf32>
    %cst_9 = arith.constant dense<0.000000e+00> : vector<16xf32>
    %24 = vector.multi_reduction <add>, %23, %cst_9 [1] : vector<16x16xf32> to vector<16xf32>
    %25 = vector.shape_cast %24 : vector<16xf32> to vector<16x1xf32>
    %cst_10 = arith.constant 1.600000e+01 : f32
    %26 = vector.broadcast %cst_10 : f32 to vector<16x1xf32>
    %27 = arith.divf %25, %26 : vector<16x1xf32>
    %cst_11 = arith.constant 9.99999974E-6 : f32
    %28 = vector.broadcast %cst_11 : f32 to vector<16x1xf32>
    %29 = arith.addf %27, %28 : vector<16x1xf32>
    %30 = math.rsqrt %29 : vector<16x1xf32>
    %31 = vector.broadcast %30 : vector<16x1xf32> to vector<16x16xf32>
    %32 = arith.mulf %22, %31 : vector<16x16xf32>
    %c0_12 = arith.constant 0 : index
    %c0_13 = arith.constant 0 : index
    %c0_14 = arith.constant 0 : index
    %33 = vector.load %arg2[%c0_12, %c0_13, %c0_14] : memref<3x1x16xf32, #tpu.memory_space<vmem>>, vector<1x1x16xf32>
    %34 = vector.shape_cast %33 : vector<1x1x16xf32> to vector<1x16xf32>
    %35 = vector.broadcast %34 : vector<1x16xf32> to vector<16x16xf32>
    %36 = arith.mulf %32, %35 : vector<16x16xf32>
    %c0_15 = arith.constant 0 : index
    %c0_16 = arith.constant 0 : index
    %c0_17 = arith.constant 0 : index
    %37 = vector.load %arg3[%c0_15, %c0_16, %c0_17] : memref<3x16x128xf32, #tpu.memory_space<vmem>>, vector<1x16x128xf32>
    %38 = vector.shape_cast %37 : vector<1x16x128xf32> to vector<16x128xf32>
    %cst_18 = arith.constant dense<0.000000e+00> : vector<16x128xf32>
    %39 = tpu.matmul %36, %38, %cst_18 {dimension_numbers = #tpu.dot_dimension_numbers<[1], [0], [0], [1], [0, 0, 1, 1], [], []>, precision = #tpu.contract_precision<fp32>} : vector<16x16xf32>, vector<16x128xf32>, vector<16x128xf32> -> vector<16x128xf32>
    %c0_19 = arith.constant 0 : index
    %c0_20 = arith.constant 0 : index
    %c0_21 = arith.constant 0 : index
    %40 = vector.load %arg4[%c0_19, %c0_20, %c0_21] : memref<3x1x128xf32, #tpu.memory_space<vmem>>, vector<1x1x128xf32>
    %41 = vector.shape_cast %40 : vector<1x1x128xf32> to vector<1x128xf32>
    %42 = vector.broadcast %41 : vector<1x128xf32> to vector<16x128xf32>
    %43 = arith.addf %39, %42 : vector<16x128xf32>
    %44 = vector.extract_strided_slice %43 {offsets = [0, 96], sizes = [16, 32], strides = [1, 1]} : vector<16x128xf32> to vector<16x32xf32>
    %45 = vector.extract_strided_slice %43 {offsets = [0, 0], sizes = [16, 32], strides = [1, 1]} : vector<16x128xf32> to vector<16x32xf32>
    %46 = vector.extract_strided_slice %43 {offsets = [0, 32], sizes = [16, 32], strides = [1, 1]} : vector<16x128xf32> to vector<16x32xf32>
    %47 = vector.extract_strided_slice %43 {offsets = [0, 64], sizes = [16, 32], strides = [1, 1]} : vector<16x128xf32> to vector<16x32xf32>
    %48 = tpu.concatenate %45, %46, %47 in 0 : vector<16x32xf32>, vector<16x32xf32>, vector<16x32xf32> -> vector<48x32xf32>
    %c0_22 = arith.constant 0 : index
    %c0_23 = arith.constant 0 : index
    %c0_24 = arith.constant 0 : index
    %49 = vector.load %arg5[%c0_22, %c0_23, %c0_24] : memref<3x16x48xf32, #tpu.memory_space<vmem>>, vector<1x16x48xf32>
    %50 = vector.shape_cast %49 : vector<1x16x48xf32> to vector<16x48xf32>
    %cst_25 = arith.constant dense<0.000000e+00> : vector<16x32xf32>
    %51 = tpu.matmul %50, %48, %cst_25 {dimension_numbers = #tpu.dot_dimension_numbers<[1], [0], [0], [1], [0, 0, 1, 1], [], []>, precision = #tpu.contract_precision<fp32>} : vector<16x48xf32>, vector<48x32xf32>, vector<16x32xf32> -> vector<16x32xf32>
    %c0_26 = arith.constant 0 : index
    %c0_27 = arith.constant 0 : index
    %c0_28 = arith.constant 0 : index
    %52 = vector.load %arg6[%c0_26, %c0_27, %c0_28] : memref<3x16x1xf32, #tpu.memory_space<vmem>>, vector<1x16x1xf32>
    %53 = vector.shape_cast %52 : vector<1x16x1xf32> to vector<16x1xf32>
    %54 = vector.broadcast %53 : vector<16x1xf32> to vector<16x32xf32>
    %55 = arith.addf %51, %54 : vector<16x32xf32>
    %56 = arith.negf %55 : vector<16x32xf32>
    %57 = math.exp %56 : vector<16x32xf32>
    %cst_29 = arith.constant 1.000000e+00 : f32
    %58 = vector.broadcast %cst_29 : f32 to vector<16x32xf32>
    %59 = arith.addf %58, %57 : vector<16x32xf32>
    %60 = arith.divf %58, %59 : vector<16x32xf32>
    %61 = arith.mulf %55, %60 : vector<16x32xf32>
    %c0_30 = arith.constant 0 : index
    %c0_31 = arith.constant 0 : index
    %c0_32 = arith.constant 0 : index
    %62 = vector.load %arg7[%c0_30, %c0_31, %c0_32] : memref<3x32x32xf32, #tpu.memory_space<vmem>>, vector<1x32x32xf32>
    %63 = vector.shape_cast %62 : vector<1x32x32xf32> to vector<32x32xf32>
    %cst_33 = arith.constant dense<0.000000e+00> : vector<16x32xf32>
    %64 = tpu.matmul %61, %63, %cst_33 {dimension_numbers = #tpu.dot_dimension_numbers<[1], [0], [0], [1], [0, 0, 1, 1], [], []>, precision = #tpu.contract_precision<fp32>} : vector<16x32xf32>, vector<32x32xf32>, vector<16x32xf32> -> vector<16x32xf32>
    %c0_34 = arith.constant 0 : index
    %c0_35 = arith.constant 0 : index
    %c0_36 = arith.constant 0 : index
    %65 = vector.load %arg8[%c0_34, %c0_35, %c0_36] : memref<3x1x32xf32, #tpu.memory_space<vmem>>, vector<1x1x32xf32>
    %66 = vector.shape_cast %65 : vector<1x1x32xf32> to vector<1x32xf32>
    %67 = vector.broadcast %66 : vector<1x32xf32> to vector<16x32xf32>
    %68 = arith.addf %64, %67 : vector<16x32xf32>
    %c0_37 = arith.constant 0 : index
    %c0_38 = arith.constant 0 : index
    %c0_39 = arith.constant 0 : index
    %69 = vector.load %arg9[%c0_37, %c0_38, %c0_39] : memref<3x32x64xf32, #tpu.memory_space<vmem>>, vector<1x32x64xf32>
    %70 = vector.shape_cast %69 : vector<1x32x64xf32> to vector<32x64xf32>
    %cst_40 = arith.constant dense<0.000000e+00> : vector<16x64xf32>
    %71 = tpu.matmul %68, %70, %cst_40 {dimension_numbers = #tpu.dot_dimension_numbers<[1], [0], [0], [1], [0, 0, 1, 1], [], []>, precision = #tpu.contract_precision<fp32>} : vector<16x32xf32>, vector<32x64xf32>, vector<16x64xf32> -> vector<16x64xf32>
    %c0_41 = arith.constant 0 : index
    %c0_42 = arith.constant 0 : index
    %c0_43 = arith.constant 0 : index
    %72 = vector.load %arg10[%c0_41, %c0_42, %c0_43] : memref<3x1x64xf32, #tpu.memory_space<vmem>>, vector<1x1x64xf32>
    %73 = vector.shape_cast %72 : vector<1x1x64xf32> to vector<1x64xf32>
    %74 = vector.broadcast %73 : vector<1x64xf32> to vector<16x64xf32>
    %75 = arith.addf %71, %74 : vector<16x64xf32>
    %76 = vector.extract_strided_slice %75 {offsets = [0, 0], sizes = [16, 32], strides = [1, 1]} : vector<16x64xf32> to vector<16x32xf32>
    %cst_44 = arith.constant 2.000000e+01 : f32
    %77 = vector.broadcast %cst_44 : f32 to vector<16x32xf32>
    %78 = arith.cmpf ogt, %76, %77 : vector<16x32xf32>
    %cst_45 = arith.constant 2.000000e+01 : f32
    %79 = vector.broadcast %cst_45 : f32 to vector<16x32xf32>
    %80 = arith.minimumf %76, %79 : vector<16x32xf32>
    %81 = math.exp %80 : vector<16x32xf32>
    %82 = math.log1p %81 : vector<16x32xf32>
    %83 = arith.select %78, %76, %82 : vector<16x32xi1>, vector<16x32xf32>
    %84 = vector.extract_strided_slice %75 {offsets = [0, 32], sizes = [16, 16], strides = [1, 1]} : vector<16x64xf32> to vector<16x16xf32>
    %85 = vector.extract_strided_slice %75 {offsets = [0, 48], sizes = [16, 16], strides = [1, 1]} : vector<16x64xf32> to vector<16x16xf32>
    %86 = arith.mulf %84, %85 : vector<16x16xf32>
    %cst_46 = arith.constant dense<0.000000e+00> : vector<16xf32>
    %87 = vector.multi_reduction <add>, %86, %cst_46 [1] : vector<16x16xf32> to vector<16xf32>
    %88 = vector.shape_cast %87 : vector<16xf32> to vector<16x1xf32>
    %89 = arith.mulf %68, %83 : vector<16x32xf32>
    %90 = vector.broadcast %88 : vector<16x1xf32> to vector<16x32xf32>
    %91 = arith.mulf %89, %90 : vector<16x32xf32>
    %92 = arith.negf %91 : vector<16x32xf32>
    %93 = math.exp %92 : vector<16x32xf32>
    %cst_47 = arith.constant 1.000000e+00 : f32
    %94 = vector.broadcast %cst_47 : f32 to vector<16x32xf32>
    %95 = arith.addf %94, %93 : vector<16x32xf32>
    %96 = arith.divf %94, %95 : vector<16x32xf32>
    %97 = arith.mulf %91, %96 : vector<16x32xf32>
    %98 = arith.negf %44 : vector<16x32xf32>
    %99 = math.exp %98 : vector<16x32xf32>
    %cst_48 = arith.constant 1.000000e+00 : f32
    %100 = vector.broadcast %cst_48 : f32 to vector<16x32xf32>
    %101 = arith.addf %100, %99 : vector<16x32xf32>
    %102 = arith.divf %100, %101 : vector<16x32xf32>
    %103 = arith.mulf %44, %102 : vector<16x32xf32>
    %104 = arith.mulf %97, %103 : vector<16x32xf32>
    %c0_49 = arith.constant 0 : index
    %c0_50 = arith.constant 0 : index
    %c0_51 = arith.constant 0 : index
    %105 = vector.load %arg11[%c0_49, %c0_50, %c0_51] : memref<3x32x16xf32, #tpu.memory_space<vmem>>, vector<1x32x16xf32>
    %106 = vector.shape_cast %105 : vector<1x32x16xf32> to vector<32x16xf32>
    %cst_52 = arith.constant dense<0.000000e+00> : vector<16x16xf32>
    %107 = tpu.matmul %104, %106, %cst_52 {dimension_numbers = #tpu.dot_dimension_numbers<[1], [0], [0], [1], [0, 0, 1, 1], [], []>, precision = #tpu.contract_precision<fp32>} : vector<16x32xf32>, vector<32x16xf32>, vector<16x16xf32> -> vector<16x16xf32>
    %c0_53 = arith.constant 0 : index
    %c0_54 = arith.constant 0 : index
    %c0_55 = arith.constant 0 : index
    %108 = vector.load %arg12[%c0_53, %c0_54, %c0_55] : memref<3x1x16xf32, #tpu.memory_space<vmem>>, vector<1x1x16xf32>
    %109 = vector.shape_cast %108 : vector<1x1x16xf32> to vector<1x16xf32>
    %110 = vector.broadcast %109 : vector<1x16xf32> to vector<16x16xf32>
    %111 = arith.addf %107, %110 : vector<16x16xf32>
    %112 = arith.mulf %111, %111 : vector<16x16xf32>
    %cst_56 = arith.constant dense<0.000000e+00> : vector<16xf32>
    %113 = vector.multi_reduction <add>, %112, %cst_56 [1] : vector<16x16xf32> to vector<16xf32>
    %114 = vector.shape_cast %113 : vector<16xf32> to vector<16x1xf32>
    %cst_57 = arith.constant 1.600000e+01 : f32
    %115 = vector.broadcast %cst_57 : f32 to vector<16x1xf32>
    %116 = arith.divf %114, %115 : vector<16x1xf32>
    %cst_58 = arith.constant 9.99999974E-6 : f32
    %117 = vector.broadcast %cst_58 : f32 to vector<16x1xf32>
    %118 = arith.addf %116, %117 : vector<16x1xf32>
    %119 = math.rsqrt %118 : vector<16x1xf32>
    %120 = vector.broadcast %119 : vector<16x1xf32> to vector<16x16xf32>
    %121 = arith.mulf %111, %120 : vector<16x16xf32>
    %c1 = arith.constant 1 : index
    %c0_59 = arith.constant 0 : index
    %c0_60 = arith.constant 0 : index
    %122 = vector.load %arg2[%c1, %c0_59, %c0_60] : memref<3x1x16xf32, #tpu.memory_space<vmem>>, vector<1x1x16xf32>
    %123 = vector.shape_cast %122 : vector<1x1x16xf32> to vector<1x16xf32>
    %124 = vector.broadcast %123 : vector<1x16xf32> to vector<16x16xf32>
    %125 = arith.mulf %121, %124 : vector<16x16xf32>
    %c1_61 = arith.constant 1 : index
    %c0_62 = arith.constant 0 : index
    %c0_63 = arith.constant 0 : index
    %126 = vector.load %arg3[%c1_61, %c0_62, %c0_63] : memref<3x16x128xf32, #tpu.memory_space<vmem>>, vector<1x16x128xf32>
    %127 = vector.shape_cast %126 : vector<1x16x128xf32> to vector<16x128xf32>
    %cst_64 = arith.constant dense<0.000000e+00> : vector<16x128xf32>
    %128 = tpu.matmul %125, %127, %cst_64 {dimension_numbers = #tpu.dot_dimension_numbers<[1], [0], [0], [1], [0, 0, 1, 1], [], []>, precision = #tpu.contract_precision<fp32>} : vector<16x16xf32>, vector<16x128xf32>, vector<16x128xf32> -> vector<16x128xf32>
    %c1_65 = arith.constant 1 : index
    %c0_66 = arith.constant 0 : index
    %c0_67 = arith.constant 0 : index
    %129 = vector.load %arg4[%c1_65, %c0_66, %c0_67] : memref<3x1x128xf32, #tpu.memory_space<vmem>>, vector<1x1x128xf32>
    %130 = vector.shape_cast %129 : vector<1x1x128xf32> to vector<1x128xf32>
    %131 = vector.broadcast %130 : vector<1x128xf32> to vector<16x128xf32>
    %132 = arith.addf %128, %131 : vector<16x128xf32>
    %133 = vector.extract_strided_slice %132 {offsets = [0, 96], sizes = [16, 32], strides = [1, 1]} : vector<16x128xf32> to vector<16x32xf32>
    %134 = vector.extract_strided_slice %132 {offsets = [0, 0], sizes = [16, 32], strides = [1, 1]} : vector<16x128xf32> to vector<16x32xf32>
    %135 = vector.extract_strided_slice %132 {offsets = [0, 32], sizes = [16, 32], strides = [1, 1]} : vector<16x128xf32> to vector<16x32xf32>
    %136 = vector.extract_strided_slice %132 {offsets = [0, 64], sizes = [16, 32], strides = [1, 1]} : vector<16x128xf32> to vector<16x32xf32>
    %137 = tpu.concatenate %134, %135, %136 in 0 : vector<16x32xf32>, vector<16x32xf32>, vector<16x32xf32> -> vector<48x32xf32>
    %c1_68 = arith.constant 1 : index
    %c0_69 = arith.constant 0 : index
    %c0_70 = arith.constant 0 : index
    %138 = vector.load %arg5[%c1_68, %c0_69, %c0_70] : memref<3x16x48xf32, #tpu.memory_space<vmem>>, vector<1x16x48xf32>
    %139 = vector.shape_cast %138 : vector<1x16x48xf32> to vector<16x48xf32>
    %cst_71 = arith.constant dense<0.000000e+00> : vector<16x32xf32>
    %140 = tpu.matmul %139, %137, %cst_71 {dimension_numbers = #tpu.dot_dimension_numbers<[1], [0], [0], [1], [0, 0, 1, 1], [], []>, precision = #tpu.contract_precision<fp32>} : vector<16x48xf32>, vector<48x32xf32>, vector<16x32xf32> -> vector<16x32xf32>
    %c1_72 = arith.constant 1 : index
    %c0_73 = arith.constant 0 : index
    %c0_74 = arith.constant 0 : index
    %141 = vector.load %arg6[%c1_72, %c0_73, %c0_74] : memref<3x16x1xf32, #tpu.memory_space<vmem>>, vector<1x16x1xf32>
    %142 = vector.shape_cast %141 : vector<1x16x1xf32> to vector<16x1xf32>
    %143 = vector.broadcast %142 : vector<16x1xf32> to vector<16x32xf32>
    %144 = arith.addf %140, %143 : vector<16x32xf32>
    %145 = arith.negf %144 : vector<16x32xf32>
    %146 = math.exp %145 : vector<16x32xf32>
    %cst_75 = arith.constant 1.000000e+00 : f32
    %147 = vector.broadcast %cst_75 : f32 to vector<16x32xf32>
    %148 = arith.addf %147, %146 : vector<16x32xf32>
    %149 = arith.divf %147, %148 : vector<16x32xf32>
    %150 = arith.mulf %144, %149 : vector<16x32xf32>
    %c1_76 = arith.constant 1 : index
    %c0_77 = arith.constant 0 : index
    %c0_78 = arith.constant 0 : index
    %151 = vector.load %arg7[%c1_76, %c0_77, %c0_78] : memref<3x32x32xf32, #tpu.memory_space<vmem>>, vector<1x32x32xf32>
    %152 = vector.shape_cast %151 : vector<1x32x32xf32> to vector<32x32xf32>
    %cst_79 = arith.constant dense<0.000000e+00> : vector<16x32xf32>
    %153 = tpu.matmul %150, %152, %cst_79 {dimension_numbers = #tpu.dot_dimension_numbers<[1], [0], [0], [1], [0, 0, 1, 1], [], []>, precision = #tpu.contract_precision<fp32>} : vector<16x32xf32>, vector<32x32xf32>, vector<16x32xf32> -> vector<16x32xf32>
    %c1_80 = arith.constant 1 : index
    %c0_81 = arith.constant 0 : index
    %c0_82 = arith.constant 0 : index
    %154 = vector.load %arg8[%c1_80, %c0_81, %c0_82] : memref<3x1x32xf32, #tpu.memory_space<vmem>>, vector<1x1x32xf32>
    %155 = vector.shape_cast %154 : vector<1x1x32xf32> to vector<1x32xf32>
    %156 = vector.broadcast %155 : vector<1x32xf32> to vector<16x32xf32>
    %157 = arith.addf %153, %156 : vector<16x32xf32>
    %c1_83 = arith.constant 1 : index
    %c0_84 = arith.constant 0 : index
    %c0_85 = arith.constant 0 : index
    %158 = vector.load %arg9[%c1_83, %c0_84, %c0_85] : memref<3x32x64xf32, #tpu.memory_space<vmem>>, vector<1x32x64xf32>
    %159 = vector.shape_cast %158 : vector<1x32x64xf32> to vector<32x64xf32>
    %cst_86 = arith.constant dense<0.000000e+00> : vector<16x64xf32>
    %160 = tpu.matmul %157, %159, %cst_86 {dimension_numbers = #tpu.dot_dimension_numbers<[1], [0], [0], [1], [0, 0, 1, 1], [], []>, precision = #tpu.contract_precision<fp32>} : vector<16x32xf32>, vector<32x64xf32>, vector<16x64xf32> -> vector<16x64xf32>
    %c1_87 = arith.constant 1 : index
    %c0_88 = arith.constant 0 : index
    %c0_89 = arith.constant 0 : index
    %161 = vector.load %arg10[%c1_87, %c0_88, %c0_89] : memref<3x1x64xf32, #tpu.memory_space<vmem>>, vector<1x1x64xf32>
    %162 = vector.shape_cast %161 : vector<1x1x64xf32> to vector<1x64xf32>
    %163 = vector.broadcast %162 : vector<1x64xf32> to vector<16x64xf32>
    %164 = arith.addf %160, %163 : vector<16x64xf32>
    %165 = vector.extract_strided_slice %164 {offsets = [0, 0], sizes = [16, 32], strides = [1, 1]} : vector<16x64xf32> to vector<16x32xf32>
    %cst_90 = arith.constant 2.000000e+01 : f32
    %166 = vector.broadcast %cst_90 : f32 to vector<16x32xf32>
    %167 = arith.cmpf ogt, %165, %166 : vector<16x32xf32>
    %cst_91 = arith.constant 2.000000e+01 : f32
    %168 = vector.broadcast %cst_91 : f32 to vector<16x32xf32>
    %169 = arith.minimumf %165, %168 : vector<16x32xf32>
    %170 = math.exp %169 : vector<16x32xf32>
    %171 = math.log1p %170 : vector<16x32xf32>
    %172 = arith.select %167, %165, %171 : vector<16x32xi1>, vector<16x32xf32>
    %173 = vector.extract_strided_slice %164 {offsets = [0, 32], sizes = [16, 16], strides = [1, 1]} : vector<16x64xf32> to vector<16x16xf32>
    %174 = vector.extract_strided_slice %164 {offsets = [0, 48], sizes = [16, 16], strides = [1, 1]} : vector<16x64xf32> to vector<16x16xf32>
    %175 = arith.mulf %173, %174 : vector<16x16xf32>
    %cst_92 = arith.constant dense<0.000000e+00> : vector<16xf32>
    %176 = vector.multi_reduction <add>, %175, %cst_92 [1] : vector<16x16xf32> to vector<16xf32>
    %177 = vector.shape_cast %176 : vector<16xf32> to vector<16x1xf32>
    %178 = arith.mulf %157, %172 : vector<16x32xf32>
    %179 = vector.broadcast %177 : vector<16x1xf32> to vector<16x32xf32>
    %180 = arith.mulf %178, %179 : vector<16x32xf32>
    %181 = arith.negf %180 : vector<16x32xf32>
    %182 = math.exp %181 : vector<16x32xf32>
    %cst_93 = arith.constant 1.000000e+00 : f32
    %183 = vector.broadcast %cst_93 : f32 to vector<16x32xf32>
    %184 = arith.addf %183, %182 : vector<16x32xf32>
    %185 = arith.divf %183, %184 : vector<16x32xf32>
    %186 = arith.mulf %180, %185 : vector<16x32xf32>
    %187 = arith.negf %133 : vector<16x32xf32>
    %188 = math.exp %187 : vector<16x32xf32>
    %cst_94 = arith.constant 1.000000e+00 : f32
    %189 = vector.broadcast %cst_94 : f32 to vector<16x32xf32>
    %190 = arith.addf %189, %188 : vector<16x32xf32>
    %191 = arith.divf %189, %190 : vector<16x32xf32>
    %192 = arith.mulf %133, %191 : vector<16x32xf32>
    %193 = arith.mulf %186, %192 : vector<16x32xf32>
    %c1_95 = arith.constant 1 : index
    %c0_96 = arith.constant 0 : index
    %c0_97 = arith.constant 0 : index
    %194 = vector.load %arg11[%c1_95, %c0_96, %c0_97] : memref<3x32x16xf32, #tpu.memory_space<vmem>>, vector<1x32x16xf32>
    %195 = vector.shape_cast %194 : vector<1x32x16xf32> to vector<32x16xf32>
    %cst_98 = arith.constant dense<0.000000e+00> : vector<16x16xf32>
    %196 = tpu.matmul %193, %195, %cst_98 {dimension_numbers = #tpu.dot_dimension_numbers<[1], [0], [0], [1], [0, 0, 1, 1], [], []>, precision = #tpu.contract_precision<fp32>} : vector<16x32xf32>, vector<32x16xf32>, vector<16x16xf32> -> vector<16x16xf32>
    %c1_99 = arith.constant 1 : index
    %c0_100 = arith.constant 0 : index
    %c0_101 = arith.constant 0 : index
    %197 = vector.load %arg12[%c1_99, %c0_100, %c0_101] : memref<3x1x16xf32, #tpu.memory_space<vmem>>, vector<1x1x16xf32>
    %198 = vector.shape_cast %197 : vector<1x1x16xf32> to vector<1x16xf32>
    %199 = vector.broadcast %198 : vector<1x16xf32> to vector<16x16xf32>
    %200 = arith.addf %196, %199 : vector<16x16xf32>
    %201 = arith.mulf %200, %200 : vector<16x16xf32>
    %cst_102 = arith.constant dense<0.000000e+00> : vector<16xf32>
    %202 = vector.multi_reduction <add>, %201, %cst_102 [1] : vector<16x16xf32> to vector<16xf32>
    %203 = vector.shape_cast %202 : vector<16xf32> to vector<16x1xf32>
    %cst_103 = arith.constant 1.600000e+01 : f32
    %204 = vector.broadcast %cst_103 : f32 to vector<16x1xf32>
    %205 = arith.divf %203, %204 : vector<16x1xf32>
    %cst_104 = arith.constant 9.99999974E-6 : f32
    %206 = vector.broadcast %cst_104 : f32 to vector<16x1xf32>
    %207 = arith.addf %205, %206 : vector<16x1xf32>
    %208 = math.rsqrt %207 : vector<16x1xf32>
    %209 = vector.broadcast %208 : vector<16x1xf32> to vector<16x16xf32>
    %210 = arith.mulf %200, %209 : vector<16x16xf32>
    %c2 = arith.constant 2 : index
    %c0_105 = arith.constant 0 : index
    %c0_106 = arith.constant 0 : index
    %211 = vector.load %arg2[%c2, %c0_105, %c0_106] : memref<3x1x16xf32, #tpu.memory_space<vmem>>, vector<1x1x16xf32>
    %212 = vector.shape_cast %211 : vector<1x1x16xf32> to vector<1x16xf32>
    %213 = vector.broadcast %212 : vector<1x16xf32> to vector<16x16xf32>
    %214 = arith.mulf %210, %213 : vector<16x16xf32>
    %c2_107 = arith.constant 2 : index
    %c0_108 = arith.constant 0 : index
    %c0_109 = arith.constant 0 : index
    %215 = vector.load %arg3[%c2_107, %c0_108, %c0_109] : memref<3x16x128xf32, #tpu.memory_space<vmem>>, vector<1x16x128xf32>
    %216 = vector.shape_cast %215 : vector<1x16x128xf32> to vector<16x128xf32>
    %cst_110 = arith.constant dense<0.000000e+00> : vector<16x128xf32>
    %217 = tpu.matmul %214, %216, %cst_110 {dimension_numbers = #tpu.dot_dimension_numbers<[1], [0], [0], [1], [0, 0, 1, 1], [], []>, precision = #tpu.contract_precision<fp32>} : vector<16x16xf32>, vector<16x128xf32>, vector<16x128xf32> -> vector<16x128xf32>
    %c2_111 = arith.constant 2 : index
    %c0_112 = arith.constant 0 : index
    %c0_113 = arith.constant 0 : index
    %218 = vector.load %arg4[%c2_111, %c0_112, %c0_113] : memref<3x1x128xf32, #tpu.memory_space<vmem>>, vector<1x1x128xf32>
    %219 = vector.shape_cast %218 : vector<1x1x128xf32> to vector<1x128xf32>
    %220 = vector.broadcast %219 : vector<1x128xf32> to vector<16x128xf32>
    %221 = arith.addf %217, %220 : vector<16x128xf32>
    %222 = vector.extract_strided_slice %221 {offsets = [0, 96], sizes = [16, 32], strides = [1, 1]} : vector<16x128xf32> to vector<16x32xf32>
    %223 = vector.extract_strided_slice %221 {offsets = [0, 0], sizes = [16, 32], strides = [1, 1]} : vector<16x128xf32> to vector<16x32xf32>
    %224 = vector.extract_strided_slice %221 {offsets = [0, 32], sizes = [16, 32], strides = [1, 1]} : vector<16x128xf32> to vector<16x32xf32>
    %225 = vector.extract_strided_slice %221 {offsets = [0, 64], sizes = [16, 32], strides = [1, 1]} : vector<16x128xf32> to vector<16x32xf32>
    %226 = tpu.concatenate %223, %224, %225 in 0 : vector<16x32xf32>, vector<16x32xf32>, vector<16x32xf32> -> vector<48x32xf32>
    %c2_114 = arith.constant 2 : index
    %c0_115 = arith.constant 0 : index
    %c0_116 = arith.constant 0 : index
    %227 = vector.load %arg5[%c2_114, %c0_115, %c0_116] : memref<3x16x48xf32, #tpu.memory_space<vmem>>, vector<1x16x48xf32>
    %228 = vector.shape_cast %227 : vector<1x16x48xf32> to vector<16x48xf32>
    %cst_117 = arith.constant dense<0.000000e+00> : vector<16x32xf32>
    %229 = tpu.matmul %228, %226, %cst_117 {dimension_numbers = #tpu.dot_dimension_numbers<[1], [0], [0], [1], [0, 0, 1, 1], [], []>, precision = #tpu.contract_precision<fp32>} : vector<16x48xf32>, vector<48x32xf32>, vector<16x32xf32> -> vector<16x32xf32>
    %c2_118 = arith.constant 2 : index
    %c0_119 = arith.constant 0 : index
    %c0_120 = arith.constant 0 : index
    %230 = vector.load %arg6[%c2_118, %c0_119, %c0_120] : memref<3x16x1xf32, #tpu.memory_space<vmem>>, vector<1x16x1xf32>
    %231 = vector.shape_cast %230 : vector<1x16x1xf32> to vector<16x1xf32>
    %232 = vector.broadcast %231 : vector<16x1xf32> to vector<16x32xf32>
    %233 = arith.addf %229, %232 : vector<16x32xf32>
    %234 = arith.negf %233 : vector<16x32xf32>
    %235 = math.exp %234 : vector<16x32xf32>
    %cst_121 = arith.constant 1.000000e+00 : f32
    %236 = vector.broadcast %cst_121 : f32 to vector<16x32xf32>
    %237 = arith.addf %236, %235 : vector<16x32xf32>
    %238 = arith.divf %236, %237 : vector<16x32xf32>
    %239 = arith.mulf %233, %238 : vector<16x32xf32>
    %c2_122 = arith.constant 2 : index
    %c0_123 = arith.constant 0 : index
    %c0_124 = arith.constant 0 : index
    %240 = vector.load %arg7[%c2_122, %c0_123, %c0_124] : memref<3x32x32xf32, #tpu.memory_space<vmem>>, vector<1x32x32xf32>
    %241 = vector.shape_cast %240 : vector<1x32x32xf32> to vector<32x32xf32>
    %cst_125 = arith.constant dense<0.000000e+00> : vector<16x32xf32>
    %242 = tpu.matmul %239, %241, %cst_125 {dimension_numbers = #tpu.dot_dimension_numbers<[1], [0], [0], [1], [0, 0, 1, 1], [], []>, precision = #tpu.contract_precision<fp32>} : vector<16x32xf32>, vector<32x32xf32>, vector<16x32xf32> -> vector<16x32xf32>
    %c2_126 = arith.constant 2 : index
    %c0_127 = arith.constant 0 : index
    %c0_128 = arith.constant 0 : index
    %243 = vector.load %arg8[%c2_126, %c0_127, %c0_128] : memref<3x1x32xf32, #tpu.memory_space<vmem>>, vector<1x1x32xf32>
    %244 = vector.shape_cast %243 : vector<1x1x32xf32> to vector<1x32xf32>
    %245 = vector.broadcast %244 : vector<1x32xf32> to vector<16x32xf32>
    %246 = arith.addf %242, %245 : vector<16x32xf32>
    %c2_129 = arith.constant 2 : index
    %c0_130 = arith.constant 0 : index
    %c0_131 = arith.constant 0 : index
    %247 = vector.load %arg9[%c2_129, %c0_130, %c0_131] : memref<3x32x64xf32, #tpu.memory_space<vmem>>, vector<1x32x64xf32>
    %248 = vector.shape_cast %247 : vector<1x32x64xf32> to vector<32x64xf32>
    %cst_132 = arith.constant dense<0.000000e+00> : vector<16x64xf32>
    %249 = tpu.matmul %246, %248, %cst_132 {dimension_numbers = #tpu.dot_dimension_numbers<[1], [0], [0], [1], [0, 0, 1, 1], [], []>, precision = #tpu.contract_precision<fp32>} : vector<16x32xf32>, vector<32x64xf32>, vector<16x64xf32> -> vector<16x64xf32>
    %c2_133 = arith.constant 2 : index
    %c0_134 = arith.constant 0 : index
    %c0_135 = arith.constant 0 : index
    %250 = vector.load %arg10[%c2_133, %c0_134, %c0_135] : memref<3x1x64xf32, #tpu.memory_space<vmem>>, vector<1x1x64xf32>
    %251 = vector.shape_cast %250 : vector<1x1x64xf32> to vector<1x64xf32>
    %252 = vector.broadcast %251 : vector<1x64xf32> to vector<16x64xf32>
    %253 = arith.addf %249, %252 : vector<16x64xf32>
    %254 = vector.extract_strided_slice %253 {offsets = [0, 0], sizes = [16, 32], strides = [1, 1]} : vector<16x64xf32> to vector<16x32xf32>
    %cst_136 = arith.constant 2.000000e+01 : f32
    %255 = vector.broadcast %cst_136 : f32 to vector<16x32xf32>
    %256 = arith.cmpf ogt, %254, %255 : vector<16x32xf32>
    %cst_137 = arith.constant 2.000000e+01 : f32
    %257 = vector.broadcast %cst_137 : f32 to vector<16x32xf32>
    %258 = arith.minimumf %254, %257 : vector<16x32xf32>
    %259 = math.exp %258 : vector<16x32xf32>
    %260 = math.log1p %259 : vector<16x32xf32>
    %261 = arith.select %256, %254, %260 : vector<16x32xi1>, vector<16x32xf32>
    %262 = vector.extract_strided_slice %253 {offsets = [0, 32], sizes = [16, 16], strides = [1, 1]} : vector<16x64xf32> to vector<16x16xf32>
    %263 = vector.extract_strided_slice %253 {offsets = [0, 48], sizes = [16, 16], strides = [1, 1]} : vector<16x64xf32> to vector<16x16xf32>
    %264 = arith.mulf %262, %263 : vector<16x16xf32>
    %cst_138 = arith.constant dense<0.000000e+00> : vector<16xf32>
    %265 = vector.multi_reduction <add>, %264, %cst_138 [1] : vector<16x16xf32> to vector<16xf32>
    %266 = vector.shape_cast %265 : vector<16xf32> to vector<16x1xf32>
    %267 = arith.mulf %246, %261 : vector<16x32xf32>
    %268 = vector.broadcast %266 : vector<16x1xf32> to vector<16x32xf32>
    %269 = arith.mulf %267, %268 : vector<16x32xf32>
    %270 = arith.negf %269 : vector<16x32xf32>
    %271 = math.exp %270 : vector<16x32xf32>
    %cst_139 = arith.constant 1.000000e+00 : f32
    %272 = vector.broadcast %cst_139 : f32 to vector<16x32xf32>
    %273 = arith.addf %272, %271 : vector<16x32xf32>
    %274 = arith.divf %272, %273 : vector<16x32xf32>
    %275 = arith.mulf %269, %274 : vector<16x32xf32>
    %276 = arith.negf %222 : vector<16x32xf32>
    %277 = math.exp %276 : vector<16x32xf32>
    %cst_140 = arith.constant 1.000000e+00 : f32
    %278 = vector.broadcast %cst_140 : f32 to vector<16x32xf32>
    %279 = arith.addf %278, %277 : vector<16x32xf32>
    %280 = arith.divf %278, %279 : vector<16x32xf32>
    %281 = arith.mulf %222, %280 : vector<16x32xf32>
    %282 = arith.mulf %275, %281 : vector<16x32xf32>
    %c2_141 = arith.constant 2 : index
    %c0_142 = arith.constant 0 : index
    %c0_143 = arith.constant 0 : index
    %283 = vector.load %arg11[%c2_141, %c0_142, %c0_143] : memref<3x32x16xf32, #tpu.memory_space<vmem>>, vector<1x32x16xf32>
    %284 = vector.shape_cast %283 : vector<1x32x16xf32> to vector<32x16xf32>
    %cst_144 = arith.constant dense<0.000000e+00> : vector<16x16xf32>
    %285 = tpu.matmul %282, %284, %cst_144 {dimension_numbers = #tpu.dot_dimension_numbers<[1], [0], [0], [1], [0, 0, 1, 1], [], []>, precision = #tpu.contract_precision<fp32>} : vector<16x32xf32>, vector<32x16xf32>, vector<16x16xf32> -> vector<16x16xf32>
    %c2_145 = arith.constant 2 : index
    %c0_146 = arith.constant 0 : index
    %c0_147 = arith.constant 0 : index
    %286 = vector.load %arg12[%c2_145, %c0_146, %c0_147] : memref<3x1x16xf32, #tpu.memory_space<vmem>>, vector<1x1x16xf32>
    %287 = vector.shape_cast %286 : vector<1x1x16xf32> to vector<1x16xf32>
    %288 = vector.broadcast %287 : vector<1x16xf32> to vector<16x16xf32>
    %289 = arith.addf %285, %288 : vector<16x16xf32>
    %c0_148 = arith.constant 0 : index
    %c0_149 = arith.constant 0 : index
    %290 = vector.load %arg13[%c0_148, %c0_149] : memref<16x16xf32, #tpu.memory_space<vmem>>, vector<16x16xf32>
    %cst_150 = arith.constant dense<0.000000e+00> : vector<16x16xf32>
    %291 = tpu.matmul %289, %290, %cst_150 {dimension_numbers = #tpu.dot_dimension_numbers<[1], [0], [0], [1], [0, 0, 1, 1], [], []>, precision = #tpu.contract_precision<fp32>} : vector<16x16xf32>, vector<16x16xf32>, vector<16x16xf32> -> vector<16x16xf32>
    %c0_151 = arith.constant 0 : index
    %c0_152 = arith.constant 0 : index
    %292 = vector.load %arg14[%c0_151, %c0_152] : memref<1x16xf32, #tpu.memory_space<vmem>>, vector<1x16xf32>
    %293 = vector.broadcast %292 : vector<1x16xf32> to vector<16x16xf32>
    %294 = arith.addf %291, %293 : vector<16x16xf32>
    %295 = vector.broadcast %20 : vector<16x1xf32> to vector<16x16xf32>
    %296 = arith.mulf %294, %295 : vector<16x16xf32>
    %297 = vector.broadcast %6 : vector<16x1xf32> to vector<16x16xf32>
    %298 = arith.addf %296, %297 : vector<16x16xf32>
    %c0_153 = arith.constant 0 : index
    %c0_154 = arith.constant 0 : index
    %299 = vector.load %arg15[%c0_153, %c0_154] : memref<16x16xf32, #tpu.memory_space<vmem>>, vector<16x16xf32>
    tpu.vector_store %arg15[%c0_153, %c0_154], %298 {strides = array<i32>} : memref<16x16xf32, #tpu.memory_space<vmem>>, vector<16x16xf32>,
    return
  }
}

</mosaic_0001>

<llo_original>
// kernel: tile.8
$region0: #{tile.8}
  #allocation0 [shape = 's32[1]{0}', space=sflag, size = 0x4, scoped, tag = 'scoped memory for tile.8']
  %s0 = inlined_call_operand.vmem [shape: f32[8], index: 0, kind: input, shape index: {}]
  %s1 = inlined_call_operand.vmem [shape: f32[2,8], index: 1, kind: output, shape index: {}]
  // Predicated region
  $region2: #{tile.8} parent=0 // pred_check
    _
  $region3: #{tile.8} parent=0 // pred_check_branch
    %3 = sbr.rel (0) target = $region5
  $region4: #{tile.8} parent=0 // pred_region
    _
  $region5: #{tile.8} parent=0 // pred_fallthru
    _
  %v4 = vld [vmem:[%s0] ss:$0 sm:$0xff]
  %5 = vst [vmem:[%s1] sm:$0x3] %v4

// kernel: tile.0
$region0: #{tile.0}
  %s0 = inlined_call_operand.vmem [shape: f32[2,8], index: 0, kind: input, shape index: {}]
  %s1 = inlined_call_operand.vmem [shape: f32[16,1], index: 1, kind: output, shape index: {}]
  $region1: #{tile.0} parent=0
    #allocation0 [shape = 'u8[4096]{0}', space=vmem, size = 0x1000, scoped, tag = 'scoped mem for input reshape']
    %s3 = ssub.s32 4, 1
    %v4 = vld [vmem:[%s0] sm:%s3]
    %5 = vst [vmem:[#allocation0] sm:%s3] %v4
    %v6 = vld [vmem:[#allocation0] sm:$0x3]
    %vm7 = vcmask 7168
    %8 = vst.msk [vmem:[%s1] ss:$8 sm:$0x3] %vm7, %v6
    %v9 = vld [vmem:[#allocation0] sm:$0x3]
    %10 = vrot.lane.b32.xlu0 %v9, 127
    %v11 = vpop.permute.xlu0 %10
    %vm12 = vcmask 7168
    %s13 = scalar_lea.vmem %s1, 1
    %14 = vst.msk [vmem:[%s13] ss:$8 sm:$0x3] %vm12, %v11
    %v15 = vld [vmem:[#allocation0] sm:$0x3]
    %16 = vrot.lane.b32.xlu0 %v15, 126
    %v17 = vpop.permute.xlu0 %16
    %vm18 = vcmask 7168
    %s19 = scalar_lea.vmem %s1, 2
    %20 = vst.msk [vmem:[%s19] ss:$8 sm:$0x3] %vm18, %v17
    %v21 = vld [vmem:[#allocation0] sm:$0x3]
    %22 = vrot.lane.b32.xlu0 %v21, 125
    %v23 = vpop.permute.xlu0 %22
    %vm24 = vcmask 7168
    %s25 = scalar_lea.vmem %s1, 3
    %26 = vst.msk [vmem:[%s25] ss:$8 sm:$0x3] %vm24, %v23
    %v27 = vld [vmem:[#allocation0] sm:$0x3]
    %28 = vrot.lane.b32.xlu0 %v27, 124
    %v29 = vpop.permute.xlu0 %28
    %vm30 = vcmask 7168
    %s31 = scalar_lea.vmem %s1, 4
    %32 = vst.msk [vmem:[%s31] ss:$8 sm:$0x3] %vm30, %v29
    %v33 = vld [vmem:[#allocation0] sm:$0x3]
    %34 = vrot.lane.b32.xlu0 %v33, 123
    %v35 = vpop.permute.xlu0 %34
    %vm36 = vcmask 7168
    %s37 = scalar_lea.vmem %s1, 5
    %38 = vst.msk [vmem:[%s37] ss:$8 sm:$0x3] %vm36, %v35
    %v39 = vld [vmem:[#allocation0] sm:$0x3]
    %40 = vrot.lane.b32.xlu0 %v39, 122
    %v41 = vpop.permute.xlu0 %40
    %vm42 = vcmask 7168
    %s43 = scalar_lea.vmem %s1, 6
    %44 = vst.msk [vmem:[%s43] ss:$8 sm:$0x3] %vm42, %v41
    %v45 = vld [vmem:[#allocation0] sm:$0x3]
    %46 = vrot.lane.b32.xlu0 %v45, 121
    %v47 = vpop.permute.xlu0 %46
    %vm48 = vcmask 7168
    %s49 = scalar_lea.vmem %s1, 7
    %50 = vst.msk [vmem:[%s49] ss:$8 sm:$0x3] %vm48, %v47

// kernel: _lambda_.1
$region0: #{_lambda_.1}
  #allocation0 [shape = 'u32[]', space=smem, size = 0x4, offset = 0x4, fixed_abs, tag = 'smem constant byte address 0x4 - core index']
  #allocation1 [shape = 'u32[72,128]{1,0:T(1,128)}', space=vmem, size = 0x9000, scoped, tag = 'internal scratch']
  %s0 = inlined_call_operand.vmem [shape: f32[16,16], index: 0, kind: input, shape index: {}]
  %s1 = inlined_call_operand.vmem [shape: f32[16,1], index: 1, kind: input, shape index: {}]
  %s2 = inlined_call_operand.vmem [shape: f32[3,1,16], index: 2, kind: input, shape index: {}]
  %s3 = inlined_call_operand.hbm [shape: f32[3,16,128], index: 3, kind: input, shape index: {}]
  %s4 = inlined_call_operand.vmem [shape: f32[3,1,128], index: 4, kind: input, shape index: {}]
  %s5 = inlined_call_operand.hbm [shape: f32[3,16,48], index: 5, kind: input, shape index: {}]
  %s6 = inlined_call_operand.hbm [shape: f32[3,16,1], index: 6, kind: input, shape index: {}]
  %s7 = inlined_call_operand.hbm [shape: f32[3,32,32], index: 7, kind: input, shape index: {}]
  %s8 = inlined_call_operand.vmem [shape: f32[3,1,32], index: 8, kind: input, shape index: {}]
  %s9 = inlined_call_operand.hbm [shape: f32[3,32,64], index: 9, kind: input, shape index: {}]
  %s10 = inlined_call_operand.vmem [shape: f32[3,1,64], index: 10, kind: input, shape index: {}]
  %s11 = inlined_call_operand.vmem [shape: f32[3,32,16], index: 11, kind: input, shape index: {}]
  %s12 = inlined_call_operand.vmem [shape: f32[3,1,16], index: 12, kind: input, shape index: {}]
  %s13 = inlined_call_operand.hbm [shape: f32[16,16], index: 13, kind: input, shape index: {}]
  %s14 = inlined_call_operand.vmem [shape: f32[1,16], index: 14, kind: input, shape index: {}]
  %s15 = inlined_call_operand.vmem [shape: f32[16,16], index: 15, kind: output, shape index: {}]
  %s16 = sld [smem:[#allocation0]]
  $region94: #{_lambda_.1} parent=0
    _
  %s18 = ssub.s32 1, %s16
  %s19 = scalar_select 0, %s18, %s16
  $region1: #{_lambda_.1} parent=0
    #allocation2 [shape = 'u8[24576]{0}', space=vmem, size = 0x6000, scoped, tag = 'input window, operand 3, single buffered']
    #allocation3 [shape = 's32[1]{0}', space=sflag, size = 0x4, scoped, tag = 'scoped memory for _lambda_.1']
    #allocation4 [shape = 'u8[24576]{0}', space=vmem, size = 0x6000, scoped, tag = 'input window, operand 5, single buffered']
    #allocation5 [shape = 's32[1]{0}', space=sflag, size = 0x4, scoped, tag = 'scoped memory for _lambda_.1']
    #allocation6 [shape = 'u8[24576]{0}', space=vmem, size = 0x6000, scoped, tag = 'input window, operand 6, single buffered']
    #allocation7 [shape = 'u8[49152]{0}', space=vmem, size = 0xc000, scoped, tag = 'input window, operand 7, single buffered']
    #allocation8 [shape = 's32[1]{0}', space=sflag, size = 0x4, scoped, tag = 'scoped memory for _lambda_.1']
    #allocation9 [shape = 'u8[49152]{0}', space=vmem, size = 0xc000, scoped, tag = 'input window, operand 9, single buffered']
    #allocation10 [shape = 'u8[8192]{0}', space=vmem, size = 0x2000, scoped, tag = 'input window, operand 13, single buffered']
    #allocation11 [shape = 's32[1]{0}', space=sflag, size = 0x4, scoped, tag = 'scoped memory for _lambda_.1']
    %20 = vsyncpa [#allocation3], 0
    %21 = vsyncpa [#allocation5], 0
    %22 = vsyncpa [#allocation8], 0
    %23 = vsyncpa [#allocation11], 0
    // Predicated region
    $region2: #{_lambda_.1} parent=1 // pred_check
      _
    $region3: #{_lambda_.1} parent=1 // pred_check_branch
      %25 = sbr.rel (0) target = $region5
    $region4: #{_lambda_.1} parent=1 // pred_region
      _
    $region5: #{_lambda_.1} parent=1 // pred_fallthru
      _
    // Predicated region
    $region6: #{_lambda_.1} parent=1 // pred_check
      _
    $region7: #{_lambda_.1} parent=1 // pred_check_branch
      %27 = sbr.rel (0) target = $region9
    $region8: #{_lambda_.1} parent=1 // pred_region
      _
    $region9: #{_lambda_.1} parent=1 // pred_fallthru
      _
    // Predicated region
    $region10: #{_lambda_.1} parent=1 // pred_check
      _
    $region11: #{_lambda_.1} parent=1 // pred_check_branch
      %29 = sbr.rel (0) target = $region13
    $region12: #{_lambda_.1} parent=1 // pred_region
      _
    $region13: #{_lambda_.1} parent=1 // pred_fallthru
      _
    // Predicated region
    $region14: #{_lambda_.1} parent=1 // pred_check
      _
    $region15: #{_lambda_.1} parent=1 // pred_check_branch
      %31 = sbr.rel (0) target = $region17
    $region16: #{_lambda_.1} parent=1 // pred_region
      %33 = vsyncadd [#allocation3], 0
      %s34 = sshll.u32 %s3, 4
      %s35 = int_to_ptr.hbm [resolvable:$true] %s34
      %s36 = sshll.u32 [#allocation2], 4
      %s37 = int_to_ptr.vmem [resolvable:$true] %s36
      %42 = dma.hbm_to_vmem [thread:$0]  %s35, 768, %s37, [#allocation3], 128, 128, 8
    $region17: #{_lambda_.1} parent=1 // pred_fallthru
      _
    // Predicated region
    $region18: #{_lambda_.1} parent=1 // pred_check
      _
    $region19: #{_lambda_.1} parent=1 // pred_check_branch
      %44 = sbr.rel (0) target = $region21
    $region20: #{_lambda_.1} parent=1 // pred_region
      _
    $region21: #{_lambda_.1} parent=1 // pred_fallthru
      _
    // Predicated region
    $region22: #{_lambda_.1} parent=1 // pred_check
      _
    $region23: #{_lambda_.1} parent=1 // pred_check_branch
      %46 = sbr.rel (0) target = $region25
    $region24: #{_lambda_.1} parent=1 // pred_region
      %48 = vsyncadd [#allocation5], 0
      %s49 = sshll.u32 %s5, 4
      %s50 = int_to_ptr.hbm [resolvable:$true] %s49
      %s51 = sshll.u32 [#allocation4], 4
      %s52 = int_to_ptr.vmem [resolvable:$true] %s51
      %57 = dma.hbm_to_vmem [thread:$0]  %s50, 768, %s52, [#allocation5], 128, 128, 8
    $region25: #{_lambda_.1} parent=1 // pred_fallthru
      _
    // Predicated region
    $region26: #{_lambda_.1} parent=1 // pred_check
      _
    $region27: #{_lambda_.1} parent=1 // pred_check_branch
      %59 = sbr.rel (0) target = $region29
    $region28: #{_lambda_.1} parent=1 // pred_region
      %61 = vsyncadd [#allocation5], 0
      %s62 = sshll.u32 %s6, 4
      %s63 = int_to_ptr.hbm [resolvable:$true] %s62
      %s64 = sshll.u32 [#allocation6], 4
      %s65 = int_to_ptr.vmem [resolvable:$true] %s64
      %70 = dma.hbm_to_vmem [thread:$0]  %s63, 768, %s65, [#allocation5], 128, 128, 8
    $region29: #{_lambda_.1} parent=1 // pred_fallthru
      _
    // Predicated region
    $region30: #{_lambda_.1} parent=1 // pred_check
      _
    $region31: #{_lambda_.1} parent=1 // pred_check_branch
      %72 = sbr.rel (0) target = $region33
    $region32: #{_lambda_.1} parent=1 // pred_region
      %74 = vsyncadd [#allocation8], 0
      %s75 = sshll.u32 %s7, 4
      %s76 = int_to_ptr.hbm [resolvable:$true] %s75
      %s77 = sshll.u32 [#allocation7], 4
      %s78 = int_to_ptr.vmem [resolvable:$true] %s77
      %83 = dma.hbm_to_vmem [thread:$0]  %s76, 1536, %s78, [#allocation8], 128, 128, 8
    $region33: #{_lambda_.1} parent=1 // pred_fallthru
      _
    // Predicated region
    $region34: #{_lambda_.1} parent=1 // pred_check
      _
    $region35: #{_lambda_.1} parent=1 // pred_check_branch
      %85 = sbr.rel (0) target = $region37
    $region36: #{_lambda_.1} parent=1 // pred_region
      _
    $region37: #{_lambda_.1} parent=1 // pred_fallthru
      _
    // Predicated region
    $region38: #{_lambda_.1} parent=1 // pred_check
      _
    $region39: #{_lambda_.1} parent=1 // pred_check_branch
      %87 = sbr.rel (0) target = $region41
    $region40: #{_lambda_.1} parent=1 // pred_region
      %89 = vsyncadd [#allocation8], 0
      %s90 = sshll.u32 %s9, 4
      %s91 = int_to_ptr.hbm [resolvable:$true] %s90
      %s92 = sshll.u32 [#allocation9], 4
      %s93 = int_to_ptr.vmem [resolvable:$true] %s92
      %98 = dma.hbm_to_vmem [thread:$0]  %s91, 1536, %s93, [#allocation8], 128, 128, 8
    $region41: #{_lambda_.1} parent=1 // pred_fallthru
      _
    // Predicated region
    $region42: #{_lambda_.1} parent=1 // pred_check
      _
    $region43: #{_lambda_.1} parent=1 // pred_check_branch
      %100 = sbr.rel (0) target = $region45
    $region44: #{_lambda_.1} parent=1 // pred_region
      _
    $region45: #{_lambda_.1} parent=1 // pred_fallthru
      _
    // Predicated region
    $region46: #{_lambda_.1} parent=1 // pred_check
      _
    $region47: #{_lambda_.1} parent=1 // pred_check_branch
      %102 = sbr.rel (0) target = $region49
    $region48: #{_lambda_.1} parent=1 // pred_region
      _
    $region49: #{_lambda_.1} parent=1 // pred_fallthru
      _
    // Predicated region
    $region50: #{_lambda_.1} parent=1 // pred_check
      _
    $region51: #{_lambda_.1} parent=1 // pred_check_branch
      %104 = sbr.rel (0) target = $region53
    $region52: #{_lambda_.1} parent=1 // pred_region
      _
    $region53: #{_lambda_.1} parent=1 // pred_fallthru
      _
    // Predicated region
    $region54: #{_lambda_.1} parent=1 // pred_check
      _
    $region55: #{_lambda_.1} parent=1 // pred_check_branch
      %106 = sbr.rel (0) target = $region57
    $region56: #{_lambda_.1} parent=1 // pred_region
      %108 = vsyncadd [#allocation11], 0
      %s109 = sshll.u32 %s13, 4
      %s110 = int_to_ptr.hbm [resolvable:$true] %s109
      %s111 = sshll.u32 [#allocation10], 4
      %s112 = int_to_ptr.vmem [resolvable:$true] %s111
      %117 = dma.hbm_to_vmem [thread:$0]  %s110, 256, %s112, [#allocation11], 128, 128, 8
    $region57: #{_lambda_.1} parent=1 // pred_fallthru
      _
    // Predicated region
    $region58: #{_lambda_.1} parent=1 // pred_check
      _
    $region59: #{_lambda_.1} parent=1 // pred_check_branch
      %119 = sbr.rel (0) target = $region61
    $region60: #{_lambda_.1} parent=1 // pred_region
      _
    $region61: #{_lambda_.1} parent=1 // pred_fallthru
      _
    // Predicated region
    $region62: #{_lambda_.1} parent=1 // pred_check
      _
    $region63: #{_lambda_.1} parent=1 // pred_check_branch
      %121 = sbr.rel (0) target = $region65
    $region64: #{_lambda_.1} parent=1 // pred_region
      %123 = dma.done [#allocation3], 768
    $region65: #{_lambda_.1} parent=1 // pred_fallthru
      _
    // Predicated region
    $region66: #{_lambda_.1} parent=1 // pred_check
      _
    $region67: #{_lambda_.1} parent=1 // pred_check_branch
      %125 = sbr.rel (0) target = $region69
    $region68: #{_lambda_.1} parent=1 // pred_region
      %127 = dma.done [#allocation5], 768
    $region69: #{_lambda_.1} parent=1 // pred_fallthru
      _
    // Predicated region
    $region70: #{_lambda_.1} parent=1 // pred_check
      _
    $region71: #{_lambda_.1} parent=1 // pred_check_branch
      %129 = sbr.rel (0) target = $region73
    $region72: #{_lambda_.1} parent=1 // pred_region
      %131 = dma.done [#allocation5], 768
    $region73: #{_lambda_.1} parent=1 // pred_fallthru
      _
    // Predicated region
    $region74: #{_lambda_.1} parent=1 // pred_check
      _
    $region75: #{_lambda_.1} parent=1 // pred_check_branch
      %133 = sbr.rel (0) target = $region77
    $region76: #{_lambda_.1} parent=1 // pred_region
      %135 = dma.done [#allocation8], 1536
    $region77: #{_lambda_.1} parent=1 // pred_fallthru
      _
    // Predicated region
    $region78: #{_lambda_.1} parent=1 // pred_check
      _
    $region79: #{_lambda_.1} parent=1 // pred_check_branch
      %137 = sbr.rel (0) target = $region81
    $region80: #{_lambda_.1} parent=1 // pred_region
      %139 = dma.done [#allocation8], 1536
    $region81: #{_lambda_.1} parent=1 // pred_fallthru
      _
    // Predicated region
    $region82: #{_lambda_.1} parent=1 // pred_check
      _
    $region83: #{_lambda_.1} parent=1 // pred_check_branch
      %141 = sbr.rel (0) target = $region85
    $region84: #{_lambda_.1} parent=1 // pred_region
      %143 = dma.done [#allocation11], 256
    $region85: #{_lambda_.1} parent=1 // pred_fallthru
      _
    %v144 = vld [vmem:[%s0] sm:$0xff]
    %v145 = vld [vmem:[%s0 + $0x8] sm:$0xff]
    %v146 = vld [vmem:[%s1] sm:$0xff]
    %v147 = vld [vmem:[%s1 + $0x8] sm:$0xff]
    %vm148 = vcmask 130048
    %v149 = vsel %vm148, %v144, 0.0
    %150 = vadd.xlane.f32.xlu0 %v149
    %v151 = vpop.xlane.xlu0 %150
    %v152 = vsel %vm148, %v145, 0.0
    %153 = vadd.xlane.f32.xlu0 %v152
    %v154 = vpop.xlane.xlu0 %153
    %v155 = vrcp.pop 16.0
    %v156 = vmul.f32 16.0, %v155
    %v157 = vsub.f32 1.0, %v156
    %v158 = vmul.f32 %v155, %v157
    %v159 = vadd.f32 %v155, %v158
    %vm160 = vweird.f32 %v155
    %v161 = vsel %vm160, %v155, %v159
    %v162 = vmul.f32 %v151, %v161
    %v163 = vmul.f32 %v154, %v161
    %v164 = vmul.f32 %v162, %v146
    %v165 = vmul.f32 %v163, %v147
    %167 = vset.pattern.permute.xlu0 0
    %168 = vperm.xlu0 %167, %v164
    %v169 = vpop.permute.xlu0 %168
    %172 = vset.pattern.permute.xlu0 0
    %173 = vperm.xlu0 %172, %v165
    %v174 = vpop.permute.xlu0 %173
    %v176 = vsub.f32 %v144, %v169
    %v177 = vsub.f32 %v145, %v174
    %v178 = vmul.f32 %v176, %v176
    %v179 = vmul.f32 %v177, %v177
    %v180 = vsel %vm148, %v178, 0.0
    %181 = vadd.xlane.f32.xlu0 %v180
    %v182 = vpop.xlane.xlu0 %181
    %v183 = vsel %vm148, %v179, 0.0
    %184 = vadd.xlane.f32.xlu0 %v183
    %v185 = vpop.xlane.xlu0 %184
    %v186 = vmul.f32 %v182, %v161
    %v187 = vmul.f32 %v185, %v161
    %vm188 = vcmp.gt.f32.partialorder %v146, 0.0
    %vm189 = vcmp.gt.f32.partialorder %v147, 0.0
    %v190 = vadd.f32 %v186, 1e-05
    %v191 = vadd.f32 %v187, 1e-05
    %v192 = vrsqrt.pop %v190
    %v193 = vmul.f32 %v192, %v190
    %v194 = vmul.f32 %v193, %v192
    %v195 = vmul.f32 0.5, %v194
    %v196 = vsub.f32 1.5, %v195
    %v197 = vmul.f32 %v192, %v196
    %v198 = vmul.f32 %v190, %v197
    %vm199 = vcmp.eq.f32.partialorder %v190, inf
    %v200 = vsel %vm199, %v190, %v198
    %vm201 = vcmp.eq.f32.partialorder %v190, 0.0
    %v202 = vand.u32 %v190, 2147483648
    %v203 = vsel %vm201, %v202, %v200
    %v204 = vrsqrt.pop %v191
    %v205 = vmul.f32 %v204, %v191
    %v206 = vmul.f32 %v205, %v204
    %v207 = vmul.f32 0.5, %v206
    %v208 = vsub.f32 1.5, %v207
    %v209 = vmul.f32 %v204, %v208
    %v210 = vmul.f32 %v191, %v209
    %vm211 = vcmp.eq.f32.partialorder %v191, inf
    %v212 = vsel %vm211, %v191, %v210
    %vm213 = vcmp.eq.f32.partialorder %v191, 0.0
    %v214 = vand.u32 %v191, 2147483648
    %v215 = vsel %vm213, %v214, %v212
    %v216 = vsel %vm188, %v203, 1.0
    %v217 = vsel %vm189, %v215, 1.0
    %219 = vset.pattern.permute.xlu0 0
    %220 = vperm.xlu0 %219, %v216
    %v221 = vpop.permute.xlu0 %220
    %224 = vset.pattern.permute.xlu0 0
    %225 = vperm.xlu0 %224, %v217
    %v226 = vpop.permute.xlu0 %225
    %v228 = vrcp.pop %v221
    %v229 = vmul.f32 %v221, %v228
    %v230 = vsub.f32 1.0, %v229
    %v231 = vmul.f32 %v228, %v230
    %v232 = vadd.f32 %v228, %v231
    %vm233 = vweird.f32 %v221
    %vm234 = vweird.f32 %v228
    %vm235 = vmor %vm233, %vm234
    %v236 = vsel %vm235, %v228, %v232
    %v237 = vand.u32 2147483647, %v221
    %vm238 = vcmp.eq.f32.partialorder %v237, 8.507059e+37
    %v239 = vand.u32 %v221, 2147483648
    %v240 = vor.u32 1.1754944e-38, %v239
    %v241 = vsel %vm238, %v240, %v236
    %v242 = vmul.f32 %v176, %v241
    %v243 = vrcp.pop %v226
    %v244 = vmul.f32 %v226, %v243
    %v245 = vsub.f32 1.0, %v244
    %v246 = vmul.f32 %v243, %v245
    %v247 = vadd.f32 %v243, %v246
    %vm248 = vweird.f32 %v226
    %vm249 = vweird.f32 %v243
    %vm250 = vmor %vm248, %vm249
    %v251 = vsel %vm250, %v243, %v247
    %v252 = vand.u32 2147483647, %v226
    %vm253 = vcmp.eq.f32.partialorder %v252, 8.507059e+37
    %v254 = vand.u32 %v226, 2147483648
    %v255 = vor.u32 1.1754944e-38, %v254
    %v256 = vsel %vm253, %v255, %v251
    %v257 = vmul.f32 %v177, %v256
    %v258 = vmul.f32 %v242, %v242
    %v259 = vmul.f32 %v257, %v257
    %v260 = vsel %vm148, %v258, 0.0
    %261 = vadd.xlane.f32.xlu0 %v260
    %v262 = vpop.xlane.xlu0 %261
    %v263 = vsel %vm148, %v259, 0.0
    %264 = vadd.xlane.f32.xlu0 %v263
    %v265 = vpop.xlane.xlu0 %264
    %v266 = vmul.f32 %v262, %v161
    %v267 = vmul.f32 %v265, %v161
    %v268 = vadd.f32 %v266, 1e-05
    %v269 = vadd.f32 %v267, 1e-05
    %v270 = vrsqrt.pop %v268
    %v271 = vmul.f32 %v270, %v268
    %v272 = vmul.f32 %v271, %v270
    %v273 = vmul.f32 0.5, %v272
    %v274 = vsub.f32 1.5, %v273
    %v275 = vmul.f32 %v270, %v274
    %vm276 = vweird.f32 %v268
    %vm277 = vweird.f32 %v270
    %vm278 = vmor %vm276, %vm277
    %v279 = vsel %vm278, %v270, %v275
    %v280 = vrsqrt.pop %v269
    %v281 = vmul.f32 %v280, %v269
    %v282 = vmul.f32 %v281, %v280
    %v283 = vmul.f32 0.5, %v282
    %v284 = vsub.f32 1.5, %v283
    %v285 = vmul.f32 %v280, %v284
    %vm286 = vweird.f32 %v269
    %vm287 = vweird.f32 %v280
    %vm288 = vmor %vm286, %vm287
    %v289 = vsel %vm288, %v280, %v285
    %v290 = vmul.f32 %v242, %v279
    %v291 = vmul.f32 %v257, %v289
    %v292 = vld [vmem:[%s2] sm:$0x1]
    %v294 = vperm.slane %v292, 0
    %v296 = vmul.f32 %v290, %v294
    %v297 = vmul.f32 %v291, %v294
    %v298 = vld [vmem:[#allocation2] sm:$0xff]
    %v299 = vld [vmem:[#allocation2 + $0x8] sm:$0xff]
    %v300 = vld [vmem:[%s4] sm:$0x1]
    %v302 = vperm.slane %v300, 0
    %v305 = vsel %vm148, %v296, 0
    %v308 = vsel %vm148, %v297, 0
    %310 = vmatpush.msra.mxu0 0.0
    %311 = vmatpush.msra.mxu0 0.0
    %312 = vmatpush.msra.mxu0 0.0
    %313 = vmatpush.msra.mxu0 0.0
    %314 = vmatpush.msra.mxu0 0.0
    %315 = vmatpush.msra.mxu0 0.0
    %316 = vmatpush.msra.mxu0 0.0
    %317 = vmatpush.msra.mxu0 0.0
    %318 = vmatpush.msra.mxu0 0.0
    %319 = vmatpush.msra.mxu0 0.0
    %320 = vmatpush.msra.mxu0 0.0
    %321 = vmatpush.msra.mxu0 0.0
    %322 = vmatpush.msra.mxu0 0.0
    %323 = vmatpush.msra.mxu0 0.0
    %v324 = vand.u32 %v299, 4294901760
    %325 = vmatpush.msra.mxu0 %v324
    %v326 = vand.u32 %v298, 4294901760
    %327 = vmatpush.msra.mxu0 %v326
    %v328 = vand.u32 %v305, 4294901760
    %v329 = vsub.f32 %v305, %v328
    %v330 = vand.u32 %v329, 4294901760
    %v331 = vsub.f32 %v329, %v330
    %v332 = vand.u32 %v331, 4294901760
    %333 = vmatmul.f32.gmra.mxu0 %v332
    %v334 = vpop.f32.mrf.mxu0
    %v335 = vadd.f32 %v302, %v334
    %v336 = vand.u32 %v308, 4294901760
    %v337 = vsub.f32 %v308, %v336
    %v338 = vand.u32 %v337, 4294901760
    %v339 = vsub.f32 %v337, %v338
    %v340 = vand.u32 %v339, 4294901760
    %341 = vmatmul.f32.gmra.mxu0 %v340
    %v342 = vpop.f32.mrf.mxu0
    %v343 = vadd.f32 %v302, %v342
    %344 = vdwg.mxu0
    %345 = vmatpush.msra.mxu0 0.0
    %346 = vmatpush.msra.mxu0 0.0
    %347 = vmatpush.msra.mxu0 0.0
    %348 = vmatpush.msra.mxu0 0.0
    %349 = vmatpush.msra.mxu0 0.0
    %350 = vmatpush.msra.mxu0 0.0
    %351 = vmatpush.msra.mxu0 0.0
    %352 = vmatpush.msra.mxu0 0.0
    %353 = vmatpush.msra.mxu0 0.0
    %354 = vmatpush.msra.mxu0 0.0
    %355 = vmatpush.msra.mxu0 0.0
    %356 = vmatpush.msra.mxu0 0.0
    %357 = vmatpush.msra.mxu0 0.0
    %358 = vmatpush.msra.mxu0 0.0
    %v359 = vand.u32 %v299, 4294901760
    %v360 = vsub.f32 %v299, %v359
    %v361 = vand.u32 %v360, 4294901760
    %v362 = vsub.f32 %v360, %v361
    %v363 = vand.u32 %v362, 4294901760
    %364 = vmatpush.msra.mxu0 %v363
    %v365 = vand.u32 %v298, 4294901760
    %v366 = vsub.f32 %v298, %v365
    %v367 = vand.u32 %v366, 4294901760
    %v368 = vsub.f32 %v366, %v367
    %v369 = vand.u32 %v368, 4294901760
    %370 = vmatpush.msra.mxu0 %v369
    %v371 = vand.u32 %v305, 4294901760
    %372 = vmatmul.f32.gmra.mxu0 %v371
    %v373 = vpop.f32.mrf.mxu0
    %v374 = vadd.f32 %v335, %v373
    %v375 = vand.u32 %v308, 4294901760
    %376 = vmatmul.f32.gmra.mxu0 %v375
    %v377 = vpop.f32.mrf.mxu0
    %v378 = vadd.f32 %v343, %v377
    %379 = vdwg.mxu0
    %380 = vmatpush.msra.mxu0 0.0
    %381 = vmatpush.msra.mxu0 0.0
    %382 = vmatpush.msra.mxu0 0.0
    %383 = vmatpush.msra.mxu0 0.0
    %384 = vmatpush.msra.mxu0 0.0
    %385 = vmatpush.msra.mxu0 0.0
    %386 = vmatpush.msra.mxu0 0.0
    %387 = vmatpush.msra.mxu0 0.0
    %388 = vmatpush.msra.mxu0 0.0
    %389 = vmatpush.msra.mxu0 0.0
    %390 = vmatpush.msra.mxu0 0.0
    %391 = vmatpush.msra.mxu0 0.0
    %392 = vmatpush.msra.mxu0 0.0
    %393 = vmatpush.msra.mxu0 0.0
    %v394 = vand.u32 %v299, 4294901760
    %v395 = vsub.f32 %v299, %v394
    %396 = vmatpush.msra.mxu0 %v395
    %v397 = vand.u32 %v298, 4294901760
    %v398 = vsub.f32 %v298, %v397
    %399 = vmatpush.msra.mxu0 %v398
    %v400 = vand.u32 %v305, 4294901760
    %v401 = vsub.f32 %v305, %v400
    %402 = vmatmul.f32.gmra.mxu0 %v401
    %v403 = vpop.f32.mrf.mxu0
    %v404 = vadd.f32 %v374, %v403
    %v405 = vand.u32 %v308, 4294901760
    %v406 = vsub.f32 %v308, %v405
    %407 = vmatmul.f32.gmra.mxu0 %v406
    %v408 = vpop.f32.mrf.mxu0
    %v409 = vadd.f32 %v378, %v408
    %410 = vdwg.mxu0
    %411 = vmatpush.msra.mxu0 0.0
    %412 = vmatpush.msra.mxu0 0.0
    %413 = vmatpush.msra.mxu0 0.0
    %414 = vmatpush.msra.mxu0 0.0
    %415 = vmatpush.msra.mxu0 0.0
    %416 = vmatpush.msra.mxu0 0.0
    %417 = vmatpush.msra.mxu0 0.0
    %418 = vmatpush.msra.mxu0 0.0
    %419 = vmatpush.msra.mxu0 0.0
    %420 = vmatpush.msra.mxu0 0.0
    %421 = vmatpush.msra.mxu0 0.0
    %422 = vmatpush.msra.mxu0 0.0
    %423 = vmatpush.msra.mxu0 0.0
    %424 = vmatpush.msra.mxu0 0.0
    %v425 = vand.u32 %v299, 4294901760
    %426 = vmatpush.msra.mxu0 %v425
    %v427 = vand.u32 %v298, 4294901760
    %428 = vmatpush.msra.mxu0 %v427
    %v429 = vand.u32 %v305, 4294901760
    %v430 = vsub.f32 %v305, %v429
    %v431 = vand.u32 %v430, 4294901760
    %432 = vmatmul.f32.gmra.mxu0 %v431
    %v433 = vpop.f32.mrf.mxu0
    %v434 = vadd.f32 %v404, %v433
    %v435 = vand.u32 %v308, 4294901760
    %v436 = vsub.f32 %v308, %v435
    %v437 = vand.u32 %v436, 4294901760
    %438 = vmatmul.f32.gmra.mxu0 %v437
    %v439 = vpop.f32.mrf.mxu0
    %v440 = vadd.f32 %v409, %v439
    %441 = vdwg.mxu0
    %442 = vmatpush.msra.mxu0 0.0
    %443 = vmatpush.msra.mxu0 0.0
    %444 = vmatpush.msra.mxu0 0.0
    %445 = vmatpush.msra.mxu0 0.0
    %446 = vmatpush.msra.mxu0 0.0
    %447 = vmatpush.msra.mxu0 0.0
    %448 = vmatpush.msra.mxu0 0.0
    %449 = vmatpush.msra.mxu0 0.0
    %450 = vmatpush.msra.mxu0 0.0
    %451 = vmatpush.msra.mxu0 0.0
    %452 = vmatpush.msra.mxu0 0.0
    %453 = vmatpush.msra.mxu0 0.0
    %454 = vmatpush.msra.mxu0 0.0
    %455 = vmatpush.msra.mxu0 0.0
    %v456 = vand.u32 %v299, 4294901760
    %v457 = vsub.f32 %v299, %v456
    %v458 = vand.u32 %v457, 4294901760
    %459 = vmatpush.msra.mxu0 %v458
    %v460 = vand.u32 %v298, 4294901760
    %v461 = vsub.f32 %v298, %v460
    %v462 = vand.u32 %v461, 4294901760
    %463 = vmatpush.msra.mxu0 %v462
    %v464 = vand.u32 %v305, 4294901760
    %465 = vmatmul.f32.gmra.mxu0 %v464
    %v466 = vpop.f32.mrf.mxu0
    %v467 = vadd.f32 %v434, %v466
    %v468 = vand.u32 %v308, 4294901760
    %469 = vmatmul.f32.gmra.mxu0 %v468
    %v470 = vpop.f32.mrf.mxu0
    %v471 = vadd.f32 %v440, %v470
    %472 = vdwg.mxu0
    %473 = vmatpush.msra.mxu0 0.0
    %474 = vmatpush.msra.mxu0 0.0
    %475 = vmatpush.msra.mxu0 0.0
    %476 = vmatpush.msra.mxu0 0.0
    %477 = vmatpush.msra.mxu0 0.0
    %478 = vmatpush.msra.mxu0 0.0
    %479 = vmatpush.msra.mxu0 0.0
    %480 = vmatpush.msra.mxu0 0.0
    %481 = vmatpush.msra.mxu0 0.0
    %482 = vmatpush.msra.mxu0 0.0
    %483 = vmatpush.msra.mxu0 0.0
    %484 = vmatpush.msra.mxu0 0.0
    %485 = vmatpush.msra.mxu0 0.0
    %486 = vmatpush.msra.mxu0 0.0
    %v487 = vand.u32 %v299, 4294901760
    %488 = vmatpush.msra.mxu0 %v487
    %v489 = vand.u32 %v298, 4294901760
    %490 = vmatpush.msra.mxu0 %v489
    %v491 = vand.u32 %v305, 4294901760
    %492 = vmatmul.f32.gmra.mxu0 %v491
    %v493 = vpop.f32.mrf.mxu0
    %v494 = vadd.f32 %v467, %v493
    %v495 = vand.u32 %v308, 4294901760
    %496 = vmatmul.f32.gmra.mxu0 %v495
    %v497 = vpop.f32.mrf.mxu0
    %v498 = vadd.f32 %v471, %v497
    %499 = vdwg.mxu0
    %502 = vrot.lane.b32.xlu0 %v494, 96
    %v503 = vpop.permute.xlu0 %502
    %504 = vrot.lane.b32.xlu0 %v498, 96
    %v505 = vpop.permute.xlu0 %504
    %508 = vrot.lane.b32.xlu0 %v494, 64
    %v509 = vpop.permute.xlu0 %508
    %510 = vrot.lane.b32.xlu0 %v498, 64
    %v511 = vpop.permute.xlu0 %510
    %v514 = vld [vmem:[#allocation4] sm:$0xff]
    %v515 = vld [vmem:[#allocation4 + $0x8] sm:$0xff]
    %v516 = vld [vmem:[#allocation6] sm:$0xff]
    %v517 = vld [vmem:[#allocation6 + $0x8] sm:$0xff]
    %519 = vset.pattern.permute.xlu0 0
    %520 = vperm.xlu0 %519, %v516
    %v521 = vpop.permute.xlu0 %520
    %524 = vset.pattern.permute.xlu0 0
    %525 = vperm.xlu0 %524, %v517
    %v526 = vpop.permute.xlu0 %525
    %vm528 = vcmask 392192
    %v530 = vsel %vm528, %v514, 0
    %v533 = vsel %vm528, %v515, 0
    %535 = vmatpush.msra.mxu0 0.0
    %536 = vmatpush.msra.mxu0 0.0
    %537 = vmatpush.msra.mxu0 0.0
    %538 = vmatpush.msra.mxu0 0.0
    %539 = vmatpush.msra.mxu0 0.0
    %540 = vmatpush.msra.mxu0 0.0
    %541 = vmatpush.msra.mxu0 0.0
    %542 = vmatpush.msra.mxu0 0.0
    %543 = vmatpush.msra.mxu0 0.0
    %544 = vmatpush.msra.mxu0 0.0
    %v545 = vand.u32 %v511, 4294901760
    %546 = vmatpush.msra.mxu0 %v545
    %v547 = vand.u32 %v509, 4294901760
    %548 = vmatpush.msra.mxu0 %v547
    %v549 = vand.u32 %v505, 4294901760
    %550 = vmatpush.msra.mxu0 %v549
    %v551 = vand.u32 %v503, 4294901760
    %552 = vmatpush.msra.mxu0 %v551
    %v553 = vand.u32 %v498, 4294901760
    %554 = vmatpush.msra.mxu0 %v553
    %v555 = vand.u32 %v494, 4294901760
    %556 = vmatpush.msra.mxu0 %v555
    %v557 = vand.u32 %v530, 4294901760
    %v558 = vsub.f32 %v530, %v557
    %v559 = vand.u32 %v558, 4294901760
    %v560 = vsub.f32 %v558, %v559
    %v561 = vand.u32 %v560, 4294901760
    %562 = vmatmul.f32.gmra.mxu0 %v561
    %v563 = vpop.f32.mrf.mxu0
    %v564 = vadd.f32 %v521, %v563
    %v565 = vand.u32 %v533, 4294901760
    %v566 = vsub.f32 %v533, %v565
    %v567 = vand.u32 %v566, 4294901760
    %v568 = vsub.f32 %v566, %v567
    %v569 = vand.u32 %v568, 4294901760
    %570 = vmatmul.f32.gmra.mxu0 %v569
    %v571 = vpop.f32.mrf.mxu0
    %v572 = vadd.f32 %v526, %v571
    %573 = vdwg.mxu0
    %574 = vmatpush.msra.mxu0 0.0
    %575 = vmatpush.msra.mxu0 0.0
    %576 = vmatpush.msra.mxu0 0.0
    %577 = vmatpush.msra.mxu0 0.0
    %578 = vmatpush.msra.mxu0 0.0
    %579 = vmatpush.msra.mxu0 0.0
    %580 = vmatpush.msra.mxu0 0.0
    %581 = vmatpush.msra.mxu0 0.0
    %582 = vmatpush.msra.mxu0 0.0
    %583 = vmatpush.msra.mxu0 0.0
    %v584 = vand.u32 %v511, 4294901760
    %v585 = vsub.f32 %v511, %v584
    %v586 = vand.u32 %v585, 4294901760
    %v587 = vsub.f32 %v585, %v586
    %v588 = vand.u32 %v587, 4294901760
    %589 = vmatpush.msra.mxu0 %v588
    %v590 = vand.u32 %v509, 4294901760
    %v591 = vsub.f32 %v509, %v590
    %v592 = vand.u32 %v591, 4294901760
    %v593 = vsub.f32 %v591, %v592
    %v594 = vand.u32 %v593, 4294901760
    %595 = vmatpush.msra.mxu0 %v594
    %v596 = vand.u32 %v505, 4294901760
    %v597 = vsub.f32 %v505, %v596
    %v598 = vand.u32 %v597, 4294901760
    %v599 = vsub.f32 %v597, %v598
    %v600 = vand.u32 %v599, 4294901760
    %601 = vmatpush.msra.mxu0 %v600
    %v602 = vand.u32 %v503, 4294901760
    %v603 = vsub.f32 %v503, %v602
    %v604 = vand.u32 %v603, 4294901760
    %v605 = vsub.f32 %v603, %v604
    %v606 = vand.u32 %v605, 4294901760
    %607 = vmatpush.msra.mxu0 %v606
    %v608 = vand.u32 %v498, 4294901760
    %v609 = vsub.f32 %v498, %v608
    %v610 = vand.u32 %v609, 4294901760
    %v611 = vsub.f32 %v609, %v610
    %v612 = vand.u32 %v611, 4294901760
    %613 = vmatpush.msra.mxu0 %v612
    %v614 = vand.u32 %v494, 4294901760
    %v615 = vsub.f32 %v494, %v614
    %v616 = vand.u32 %v615, 4294901760
    %v617 = vsub.f32 %v615, %v616
    %v618 = vand.u32 %v617, 4294901760
    %619 = vmatpush.msra.mxu0 %v618
    %v620 = vand.u32 %v530, 4294901760
    %621 = vmatmul.f32.gmra.mxu0 %v620
    %v622 = vpop.f32.mrf.mxu0
    %v623 = vadd.f32 %v564, %v622
    %v624 = vand.u32 %v533, 4294901760
    %625 = vmatmul.f32.gmra.mxu0 %v624
    %v626 = vpop.f32.mrf.mxu0
    %v627 = vadd.f32 %v572, %v626
    %628 = vdwg.mxu0
    %629 = vmatpush.msra.mxu0 0.0
    %630 = vmatpush.msra.mxu0 0.0
    %631 = vmatpush.msra.mxu0 0.0
    %632 = vmatpush.msra.mxu0 0.0
    %633 = vmatpush.msra.mxu0 0.0
    %634 = vmatpush.msra.mxu0 0.0
    %635 = vmatpush.msra.mxu0 0.0
    %636 = vmatpush.msra.mxu0 0.0
    %637 = vmatpush.msra.mxu0 0.0
    %638 = vmatpush.msra.mxu0 0.0
    %v639 = vand.u32 %v511, 4294901760
    %v640 = vsub.f32 %v511, %v639
    %641 = vmatpush.msra.mxu0 %v640
    %v642 = vand.u32 %v509, 4294901760
    %v643 = vsub.f32 %v509, %v642
    %644 = vmatpush.msra.mxu0 %v643
    %v645 = vand.u32 %v505, 4294901760
    %v646 = vsub.f32 %v505, %v645
    %647 = vmatpush.msra.mxu0 %v646
    %v648 = vand.u32 %v503, 4294901760
    %v649 = vsub.f32 %v503, %v648
    %650 = vmatpush.msra.mxu0 %v649
    %v651 = vand.u32 %v498, 4294901760
    %v652 = vsub.f32 %v498, %v651
    %653 = vmatpush.msra.mxu0 %v652
    %v654 = vand.u32 %v494, 4294901760
    %v655 = vsub.f32 %v494, %v654
    %656 = vmatpush.msra.mxu0 %v655
    %v657 = vand.u32 %v530, 4294901760
    %v658 = vsub.f32 %v530, %v657
    %659 = vmatmul.f32.gmra.mxu0 %v658
    %v660 = vpop.f32.mrf.mxu0
    %v661 = vadd.f32 %v623, %v660
    %v662 = vand.u32 %v533, 4294901760
    %v663 = vsub.f32 %v533, %v662
    %664 = vmatmul.f32.gmra.mxu0 %v663
    %v665 = vpop.f32.mrf.mxu0
    %v666 = vadd.f32 %v627, %v665
    %667 = vdwg.mxu0
    %668 = vmatpush.msra.mxu0 0.0
    %669 = vmatpush.msra.mxu0 0.0
    %670 = vmatpush.msra.mxu0 0.0
    %671 = vmatpush.msra.mxu0 0.0
    %672 = vmatpush.msra.mxu0 0.0
    %673 = vmatpush.msra.mxu0 0.0
    %674 = vmatpush.msra.mxu0 0.0
    %675 = vmatpush.msra.mxu0 0.0
    %676 = vmatpush.msra.mxu0 0.0
    %677 = vmatpush.msra.mxu0 0.0
    %v678 = vand.u32 %v511, 4294901760
    %679 = vmatpush.msra.mxu0 %v678
    %v680 = vand.u32 %v509, 4294901760
    %681 = vmatpush.msra.mxu0 %v680
    %v682 = vand.u32 %v505, 4294901760
    %683 = vmatpush.msra.mxu0 %v682
    %v684 = vand.u32 %v503, 4294901760
    %685 = vmatpush.msra.mxu0 %v684
    %v686 = vand.u32 %v498, 4294901760
    %687 = vmatpush.msra.mxu0 %v686
    %v688 = vand.u32 %v494, 4294901760
    %689 = vmatpush.msra.mxu0 %v688
    %v690 = vand.u32 %v530, 4294901760
    %v691 = vsub.f32 %v530, %v690
    %v692 = vand.u32 %v691, 4294901760
    %693 = vmatmul.f32.gmra.mxu0 %v692
    %v694 = vpop.f32.mrf.mxu0
    %v695 = vadd.f32 %v661, %v694
    %v696 = vand.u32 %v533, 4294901760
    %v697 = vsub.f32 %v533, %v696
    %v698 = vand.u32 %v697, 4294901760
    %699 = vmatmul.f32.gmra.mxu0 %v698
    %v700 = vpop.f32.mrf.mxu0
    %v701 = vadd.f32 %v666, %v700
    %702 = vdwg.mxu0
    %703 = vmatpush.msra.mxu0 0.0
    %704 = vmatpush.msra.mxu0 0.0
    %705 = vmatpush.msra.mxu0 0.0
    %706 = vmatpush.msra.mxu0 0.0
    %707 = vmatpush.msra.mxu0 0.0
    %708 = vmatpush.msra.mxu0 0.0
    %709 = vmatpush.msra.mxu0 0.0
    %710 = vmatpush.msra.mxu0 0.0
    %711 = vmatpush.msra.mxu0 0.0
    %712 = vmatpush.msra.mxu0 0.0
    %v713 = vand.u32 %v511, 4294901760
    %v714 = vsub.f32 %v511, %v713
    %v715 = vand.u32 %v714, 4294901760
    %716 = vmatpush.msra.mxu0 %v715
    %v717 = vand.u32 %v509, 4294901760
    %v718 = vsub.f32 %v509, %v717
    %v719 = vand.u32 %v718, 4294901760
    %720 = vmatpush.msra.mxu0 %v719
    %v721 = vand.u32 %v505, 4294901760
    %v722 = vsub.f32 %v505, %v721
    %v723 = vand.u32 %v722, 4294901760
    %724 = vmatpush.msra.mxu0 %v723
    %v725 = vand.u32 %v503, 4294901760
    %v726 = vsub.f32 %v503, %v725
    %v727 = vand.u32 %v726, 4294901760
    %728 = vmatpush.msra.mxu0 %v727
    %v729 = vand.u32 %v498, 4294901760
    %v730 = vsub.f32 %v498, %v729
    %v731 = vand.u32 %v730, 4294901760
    %732 = vmatpush.msra.mxu0 %v731
    %v733 = vand.u32 %v494, 4294901760
    %v734 = vsub.f32 %v494, %v733
    %v735 = vand.u32 %v734, 4294901760
    %736 = vmatpush.msra.mxu0 %v735
    %v737 = vand.u32 %v530, 4294901760
    %738 = vmatmul.f32.gmra.mxu0 %v737
    %v739 = vpop.f32.mrf.mxu0
    %v740 = vadd.f32 %v695, %v739
    %v741 = vand.u32 %v533, 4294901760
    %742 = vmatmul.f32.gmra.mxu0 %v741
    %v743 = vpop.f32.mrf.mxu0
    %v744 = vadd.f32 %v701, %v743
    %745 = vdwg.mxu0
    %746 = vmatpush.msra.mxu0 0.0
    %747 = vmatpush.msra.mxu0 0.0
    %748 = vmatpush.msra.mxu0 0.0
    %749 = vmatpush.msra.mxu0 0.0
    %750 = vmatpush.msra.mxu0 0.0
    %751 = vmatpush.msra.mxu0 0.0
    %752 = vmatpush.msra.mxu0 0.0
    %753 = vmatpush.msra.mxu0 0.0
    %754 = vmatpush.msra.mxu0 0.0
    %755 = vmatpush.msra.mxu0 0.0
    %v756 = vand.u32 %v511, 4294901760
    %757 = vmatpush.msra.mxu0 %v756
    %v758 = vand.u32 %v509, 4294901760
    %759 = vmatpush.msra.mxu0 %v758
    %v760 = vand.u32 %v505, 4294901760
    %761 = vmatpush.msra.mxu0 %v760
    %v762 = vand.u32 %v503, 4294901760
    %763 = vmatpush.msra.mxu0 %v762
    %v764 = vand.u32 %v498, 4294901760
    %765 = vmatpush.msra.mxu0 %v764
    %v766 = vand.u32 %v494, 4294901760
    %767 = vmatpush.msra.mxu0 %v766
    %v768 = vand.u32 %v530, 4294901760
    %769 = vmatmul.f32.gmra.mxu0 %v768
    %v770 = vpop.f32.mrf.mxu0
    %v771 = vadd.f32 %v740, %v770
    %v772 = vand.u32 %v533, 4294901760
    %773 = vmatmul.f32.gmra.mxu0 %v772
    %v774 = vpop.f32.mrf.mxu0
    %v775 = vadd.f32 %v744, %v774
    %776 = vdwg.mxu0
    %v777 = vxor.u32 %v771, 2147483648
    %v778 = vxor.u32 %v775, 2147483648
    %v779 = vmul.f32 %v777, 1.442695
    %v780 = vpow.pop %v779
    %v781 = vmul.f32 %v778, 1.442695
    %v782 = vpow.pop %v781
    %v783 = vadd.f32 %v780, 1.0
    %v784 = vadd.f32 %v782, 1.0
    %v785 = vrcp.pop %v783
    %v786 = vmul.f32 %v783, %v785
    %v787 = vsub.f32 1.0, %v786
    %v788 = vmul.f32 %v785, %v787
    %v789 = vadd.f32 %v785, %v788
    %vm790 = vweird.f32 %v783
    %vm791 = vweird.f32 %v785
    %vm792 = vmor %vm790, %vm791
    %v793 = vsel %vm792, %v785, %v789
    %v794 = vand.u32 2147483647, %v783
    %vm795 = vcmp.eq.f32.partialorder %v794, 8.507059e+37
    %v796 = vand.u32 %v783, 2147483648
    %v797 = vor.u32 1.1754944e-38, %v796
    %v798 = vsel %vm795, %v797, %v793
    %v799 = vmul.f32 1.0, %v798
    %v800 = vrcp.pop %v784
    %v801 = vmul.f32 %v784, %v800
    %v802 = vsub.f32 1.0, %v801
    %v803 = vmul.f32 %v800, %v802
    %v804 = vadd.f32 %v800, %v803
    %vm805 = vweird.f32 %v784
    %vm806 = vweird.f32 %v800
    %vm807 = vmor %vm805, %vm806
    %v808 = vsel %vm807, %v800, %v804
    %v809 = vand.u32 2147483647, %v784
    %vm810 = vcmp.eq.f32.partialorder %v809, 8.507059e+37
    %v811 = vand.u32 %v784, 2147483648
    %v812 = vor.u32 1.1754944e-38, %v811
    %v813 = vsel %vm810, %v812, %v808
    %v814 = vmul.f32 1.0, %v813
    %v815 = vmul.f32 %v771, %v799
    %v816 = vmul.f32 %v775, %v814
    %v817 = vld [vmem:[#allocation7] sm:$0xff]
    %v818 = vld [vmem:[#allocation7 + $0x8] sm:$0xff]
    %v819 = vld [vmem:[#allocation7 + $0x10] sm:$0xff]
    %v820 = vld [vmem:[#allocation7 + $0x18] sm:$0xff]
    %v821 = vld [vmem:[%s8] sm:$0x1]
    %v823 = vperm.slane %v821, 0
    %vm825 = vcmask 261120
    %v827 = vsel %vm825, %v815, 0
    %v830 = vsel %vm825, %v816, 0
    %832 = vmatpush.msra.mxu0 0.0
    %833 = vmatpush.msra.mxu0 0.0
    %834 = vmatpush.msra.mxu0 0.0
    %835 = vmatpush.msra.mxu0 0.0
    %836 = vmatpush.msra.mxu0 0.0
    %837 = vmatpush.msra.mxu0 0.0
    %838 = vmatpush.msra.mxu0 0.0
    %839 = vmatpush.msra.mxu0 0.0
    %840 = vmatpush.msra.mxu0 0.0
    %841 = vmatpush.msra.mxu0 0.0
    %842 = vmatpush.msra.mxu0 0.0
    %843 = vmatpush.msra.mxu0 0.0
    %v844 = vand.u32 %v820, 4294901760
    %845 = vmatpush.msra.mxu0 %v844
    %v846 = vand.u32 %v819, 4294901760
    %847 = vmatpush.msra.mxu0 %v846
    %v848 = vand.u32 %v818, 4294901760
    %849 = vmatpush.msra.mxu0 %v848
    %v850 = vand.u32 %v817, 4294901760
    %851 = vmatpush.msra.mxu0 %v850
    %v852 = vand.u32 %v827, 4294901760
    %v853 = vsub.f32 %v827, %v852
    %v854 = vand.u32 %v853, 4294901760
    %v855 = vsub.f32 %v853, %v854
    %v856 = vand.u32 %v855, 4294901760
    %857 = vmatmul.f32.gmra.mxu0 %v856
    %v858 = vpop.f32.mrf.mxu0
    %v859 = vadd.f32 %v823, %v858
    %v860 = vand.u32 %v830, 4294901760
    %v861 = vsub.f32 %v830, %v860
    %v862 = vand.u32 %v861, 4294901760
    %v863 = vsub.f32 %v861, %v862
    %v864 = vand.u32 %v863, 4294901760
    %865 = vmatmul.f32.gmra.mxu0 %v864
    %v866 = vpop.f32.mrf.mxu0
    %v867 = vadd.f32 %v823, %v866
    %868 = vdwg.mxu0
    %869 = vmatpush.msra.mxu0 0.0
    %870 = vmatpush.msra.mxu0 0.0
    %871 = vmatpush.msra.mxu0 0.0
    %872 = vmatpush.msra.mxu0 0.0
    %873 = vmatpush.msra.mxu0 0.0
    %874 = vmatpush.msra.mxu0 0.0
    %875 = vmatpush.msra.mxu0 0.0
    %876 = vmatpush.msra.mxu0 0.0
    %877 = vmatpush.msra.mxu0 0.0
    %878 = vmatpush.msra.mxu0 0.0
    %879 = vmatpush.msra.mxu0 0.0
    %880 = vmatpush.msra.mxu0 0.0
    %v881 = vand.u32 %v820, 4294901760
    %v882 = vsub.f32 %v820, %v881
    %v883 = vand.u32 %v882, 4294901760
    %v884 = vsub.f32 %v882, %v883
    %v885 = vand.u32 %v884, 4294901760
    %886 = vmatpush.msra.mxu0 %v885
    %v887 = vand.u32 %v819, 4294901760
    %v888 = vsub.f32 %v819, %v887
    %v889 = vand.u32 %v888, 4294901760
    %v890 = vsub.f32 %v888, %v889
    %v891 = vand.u32 %v890, 4294901760
    %892 = vmatpush.msra.mxu0 %v891
    %v893 = vand.u32 %v818, 4294901760
    %v894 = vsub.f32 %v818, %v893
    %v895 = vand.u32 %v894, 4294901760
    %v896 = vsub.f32 %v894, %v895
    %v897 = vand.u32 %v896, 4294901760
    %898 = vmatpush.msra.mxu0 %v897
    %v899 = vand.u32 %v817, 4294901760
    %v900 = vsub.f32 %v817, %v899
    %v901 = vand.u32 %v900, 4294901760
    %v902 = vsub.f32 %v900, %v901
    %v903 = vand.u32 %v902, 4294901760
    %904 = vmatpush.msra.mxu0 %v903
    %v905 = vand.u32 %v827, 4294901760
    %906 = vmatmul.f32.gmra.mxu0 %v905
    %v907 = vpop.f32.mrf.mxu0
    %v908 = vadd.f32 %v859, %v907
    %v909 = vand.u32 %v830, 4294901760
    %910 = vmatmul.f32.gmra.mxu0 %v909
    %v911 = vpop.f32.mrf.mxu0
    %v912 = vadd.f32 %v867, %v911
    %913 = vdwg.mxu0
    %914 = vmatpush.msra.mxu0 0.0
    %915 = vmatpush.msra.mxu0 0.0
    %916 = vmatpush.msra.mxu0 0.0
    %917 = vmatpush.msra.mxu0 0.0
    %918 = vmatpush.msra.mxu0 0.0
    %919 = vmatpush.msra.mxu0 0.0
    %920 = vmatpush.msra.mxu0 0.0
    %921 = vmatpush.msra.mxu0 0.0
    %922 = vmatpush.msra.mxu0 0.0
    %923 = vmatpush.msra.mxu0 0.0
    %924 = vmatpush.msra.mxu0 0.0
    %925 = vmatpush.msra.mxu0 0.0
    %v926 = vand.u32 %v820, 4294901760
    %v927 = vsub.f32 %v820, %v926
    %928 = vmatpush.msra.mxu0 %v927
    %v929 = vand.u32 %v819, 4294901760
    %v930 = vsub.f32 %v819, %v929
    %931 = vmatpush.msra.mxu0 %v930
    %v932 = vand.u32 %v818, 4294901760
    %v933 = vsub.f32 %v818, %v932
    %934 = vmatpush.msra.mxu0 %v933
    %v935 = vand.u32 %v817, 4294901760
    %v936 = vsub.f32 %v817, %v935
    %937 = vmatpush.msra.mxu0 %v936
    %v938 = vand.u32 %v827, 4294901760
    %v939 = vsub.f32 %v827, %v938
    %940 = vmatmul.f32.gmra.mxu0 %v939
    %v941 = vpop.f32.mrf.mxu0
    %v942 = vadd.f32 %v908, %v941
    %v943 = vand.u32 %v830, 4294901760
    %v944 = vsub.f32 %v830, %v943
    %945 = vmatmul.f32.gmra.mxu0 %v944
    %v946 = vpop.f32.mrf.mxu0
    %v947 = vadd.f32 %v912, %v946
    %948 = vdwg.mxu0
    %949 = vmatpush.msra.mxu0 0.0
    %950 = vmatpush.msra.mxu0 0.0
    %951 = vmatpush.msra.mxu0 0.0
    %952 = vmatpush.msra.mxu0 0.0
    %953 = vmatpush.msra.mxu0 0.0
    %954 = vmatpush.msra.mxu0 0.0
    %955 = vmatpush.msra.mxu0 0.0
    %956 = vmatpush.msra.mxu0 0.0
    %957 = vmatpush.msra.mxu0 0.0
    %958 = vmatpush.msra.mxu0 0.0
    %959 = vmatpush.msra.mxu0 0.0
    %960 = vmatpush.msra.mxu0 0.0
    %v961 = vand.u32 %v820, 4294901760
    %962 = vmatpush.msra.mxu0 %v961
    %v963 = vand.u32 %v819, 4294901760
    %964 = vmatpush.msra.mxu0 %v963
    %v965 = vand.u32 %v818, 4294901760
    %966 = vmatpush.msra.mxu0 %v965
    %v967 = vand.u32 %v817, 4294901760
    %968 = vmatpush.msra.mxu0 %v967
    %v969 = vand.u32 %v827, 4294901760
    %v970 = vsub.f32 %v827, %v969
    %v971 = vand.u32 %v970, 4294901760
    %972 = vmatmul.f32.gmra.mxu0 %v971
    %v973 = vpop.f32.mrf.mxu0
    %v974 = vadd.f32 %v942, %v973
    %v975 = vand.u32 %v830, 4294901760
    %v976 = vsub.f32 %v830, %v975
    %v977 = vand.u32 %v976, 4294901760
    %978 = vmatmul.f32.gmra.mxu0 %v977
    %v979 = vpop.f32.mrf.mxu0
    %v980 = vadd.f32 %v947, %v979
    %981 = vdwg.mxu0
    %982 = vmatpush.msra.mxu0 0.0
    %983 = vmatpush.msra.mxu0 0.0
    %984 = vmatpush.msra.mxu0 0.0
    %985 = vmatpush.msra.mxu0 0.0
    %986 = vmatpush.msra.mxu0 0.0
    %987 = vmatpush.msra.mxu0 0.0
    %988 = vmatpush.msra.mxu0 0.0
    %989 = vmatpush.msra.mxu0 0.0
    %990 = vmatpush.msra.mxu0 0.0
    %991 = vmatpush.msra.mxu0 0.0
    %992 = vmatpush.msra.mxu0 0.0
    %993 = vmatpush.msra.mxu0 0.0
    %v994 = vand.u32 %v820, 4294901760
    %v995 = vsub.f32 %v820, %v994
    %v996 = vand.u32 %v995, 4294901760
    %997 = vmatpush.msra.mxu0 %v996
    %v998 = vand.u32 %v819, 4294901760
    %v999 = vsub.f32 %v819, %v998
    %v1000 = vand.u32 %v999, 4294901760
    %1001 = vmatpush.msra.mxu0 %v1000
    %v1002 = vand.u32 %v818, 4294901760
    %v1003 = vsub.f32 %v818, %v1002
    %v1004 = vand.u32 %v1003, 4294901760
    %1005 = vmatpush.msra.mxu0 %v1004
    %v1006 = vand.u32 %v817, 4294901760
    %v1007 = vsub.f32 %v817, %v1006
    %v1008 = vand.u32 %v1007, 4294901760
    %1009 = vmatpush.msra.mxu0 %v1008
    %v1010 = vand.u32 %v827, 4294901760
    %1011 = vmatmul.f32.gmra.mxu0 %v1010
    %v1012 = vpop.f32.mrf.mxu0
    %v1013 = vadd.f32 %v974, %v1012
    %v1014 = vand.u32 %v830, 4294901760
    %1015 = vmatmul.f32.gmra.mxu0 %v1014
    %v1016 = vpop.f32.mrf.mxu0
    %v1017 = vadd.f32 %v980, %v1016
    %1018 = vdwg.mxu0
    %1019 = vmatpush.msra.mxu0 0.0
    %1020 = vmatpush.msra.mxu0 0.0
    %1021 = vmatpush.msra.mxu0 0.0
    %1022 = vmatpush.msra.mxu0 0.0
    %1023 = vmatpush.msra.mxu0 0.0
    %1024 = vmatpush.msra.mxu0 0.0
    %1025 = vmatpush.msra.mxu0 0.0
    %1026 = vmatpush.msra.mxu0 0.0
    %1027 = vmatpush.msra.mxu0 0.0
    %1028 = vmatpush.msra.mxu0 0.0
    %1029 = vmatpush.msra.mxu0 0.0
    %1030 = vmatpush.msra.mxu0 0.0
    %v1031 = vand.u32 %v820, 4294901760
    %1032 = vmatpush.msra.mxu0 %v1031
    %v1033 = vand.u32 %v819, 4294901760
    %1034 = vmatpush.msra.mxu0 %v1033
    %v1035 = vand.u32 %v818, 4294901760
    %1036 = vmatpush.msra.mxu0 %v1035
    %v1037 = vand.u32 %v817, 4294901760
    %1038 = vmatpush.msra.mxu0 %v1037
    %v1039 = vand.u32 %v827, 4294901760
    %1040 = vmatmul.f32.gmra.mxu0 %v1039
    %v1041 = vpop.f32.mrf.mxu0
    %v1042 = vadd.f32 %v1013, %v1041
    %v1043 = vand.u32 %v830, 4294901760
    %1044 = vmatmul.f32.gmra.mxu0 %v1043
    %v1045 = vpop.f32.mrf.mxu0
    %v1046 = vadd.f32 %v1017, %v1045
    %1047 = vdwg.mxu0
    %v1048 = vld [vmem:[#allocation9] sm:$0xff]
    %v1049 = vld [vmem:[#allocation9 + $0x8] sm:$0xff]
    %v1050 = vld [vmem:[#allocation9 + $0x10] sm:$0xff]
    %v1051 = vld [vmem:[#allocation9 + $0x18] sm:$0xff]
    %v1052 = vld [vmem:[%s10] sm:$0x1]
    %v1054 = vperm.slane %v1052, 0
    %v1057 = vsel %vm825, %v1042, 0
    %v1060 = vsel %vm825, %v1046, 0
    %1062 = vmatpush.msra.mxu0 0.0
    %1063 = vmatpush.msra.mxu0 0.0
    %1064 = vmatpush.msra.mxu0 0.0
    %1065 = vmatpush.msra.mxu0 0.0
    %1066 = vmatpush.msra.mxu0 0.0
    %1067 = vmatpush.msra.mxu0 0.0
    %1068 = vmatpush.msra.mxu0 0.0
    %1069 = vmatpush.msra.mxu0 0.0
    %1070 = vmatpush.msra.mxu0 0.0
    %1071 = vmatpush.msra.mxu0 0.0
    %1072 = vmatpush.msra.mxu0 0.0
    %1073 = vmatpush.msra.mxu0 0.0
    %v1074 = vand.u32 %v1051, 4294901760
    %1075 = vmatpush.msra.mxu0 %v1074
    %v1076 = vand.u32 %v1050, 4294901760
    %1077 = vmatpush.msra.mxu0 %v1076
    %v1078 = vand.u32 %v1049, 4294901760
    %1079 = vmatpush.msra.mxu0 %v1078
    %v1080 = vand.u32 %v1048, 4294901760
    %1081 = vmatpush.msra.mxu0 %v1080
    %v1082 = vand.u32 %v1057, 4294901760
    %v1083 = vsub.f32 %v1057, %v1082
    %v1084 = vand.u32 %v1083, 4294901760
    %v1085 = vsub.f32 %v1083, %v1084
    %v1086 = vand.u32 %v1085, 4294901760
    %1087 = vmatmul.f32.gmra.mxu0 %v1086
    %v1088 = vpop.f32.mrf.mxu0
    %v1089 = vadd.f32 %v1054, %v1088
    %v1090 = vand.u32 %v1060, 4294901760
    %v1091 = vsub.f32 %v1060, %v1090
    %v1092 = vand.u32 %v1091, 4294901760
    %v1093 = vsub.f32 %v1091, %v1092
    %v1094 = vand.u32 %v1093, 4294901760
    %1095 = vmatmul.f32.gmra.mxu0 %v1094
    %v1096 = vpop.f32.mrf.mxu0
    %v1097 = vadd.f32 %v1054, %v1096
    %1098 = vdwg.mxu0
    %1099 = vmatpush.msra.mxu0 0.0
    %1100 = vmatpush.msra.mxu0 0.0
    %1101 = vmatpush.msra.mxu0 0.0
    %1102 = vmatpush.msra.mxu0 0.0
    %1103 = vmatpush.msra.mxu0 0.0
    %1104 = vmatpush.msra.mxu0 0.0
    %1105 = vmatpush.msra.mxu0 0.0
    %1106 = vmatpush.msra.mxu0 0.0
    %1107 = vmatpush.msra.mxu0 0.0
    %1108 = vmatpush.msra.mxu0 0.0
    %1109 = vmatpush.msra.mxu0 0.0
    %1110 = vmatpush.msra.mxu0 0.0
    %v1111 = vand.u32 %v1051, 4294901760
    %v1112 = vsub.f32 %v1051, %v1111
    %v1113 = vand.u32 %v1112, 4294901760
    %v1114 = vsub.f32 %v1112, %v1113
    %v1115 = vand.u32 %v1114, 4294901760
    %1116 = vmatpush.msra.mxu0 %v1115
    %v1117 = vand.u32 %v1050, 4294901760
    %v1118 = vsub.f32 %v1050, %v1117
    %v1119 = vand.u32 %v1118, 4294901760
    %v1120 = vsub.f32 %v1118, %v1119
    %v1121 = vand.u32 %v1120, 4294901760
    %1122 = vmatpush.msra.mxu0 %v1121
    %v1123 = vand.u32 %v1049, 4294901760
    %v1124 = vsub.f32 %v1049, %v1123
    %v1125 = vand.u32 %v1124, 4294901760
    %v1126 = vsub.f32 %v1124, %v1125
    %v1127 = vand.u32 %v1126, 4294901760
    %1128 = vmatpush.msra.mxu0 %v1127
    %v1129 = vand.u32 %v1048, 4294901760
    %v1130 = vsub.f32 %v1048, %v1129
    %v1131 = vand.u32 %v1130, 4294901760
    %v1132 = vsub.f32 %v1130, %v1131
    %v1133 = vand.u32 %v1132, 4294901760
    %1134 = vmatpush.msra.mxu0 %v1133
    %v1135 = vand.u32 %v1057, 4294901760
    %1136 = vmatmul.f32.gmra.mxu0 %v1135
    %v1137 = vpop.f32.mrf.mxu0
    %v1138 = vadd.f32 %v1089, %v1137
    %v1139 = vand.u32 %v1060, 4294901760
    %1140 = vmatmul.f32.gmra.mxu0 %v1139
    %v1141 = vpop.f32.mrf.mxu0
    %v1142 = vadd.f32 %v1097, %v1141
    %1143 = vdwg.mxu0
    %1144 = vmatpush.msra.mxu0 0.0
    %1145 = vmatpush.msra.mxu0 0.0
    %1146 = vmatpush.msra.mxu0 0.0
    %1147 = vmatpush.msra.mxu0 0.0
    %1148 = vmatpush.msra.mxu0 0.0
    %1149 = vmatpush.msra.mxu0 0.0
    %1150 = vmatpush.msra.mxu0 0.0
    %1151 = vmatpush.msra.mxu0 0.0
    %1152 = vmatpush.msra.mxu0 0.0
    %1153 = vmatpush.msra.mxu0 0.0
    %1154 = vmatpush.msra.mxu0 0.0
    %1155 = vmatpush.msra.mxu0 0.0
    %v1156 = vand.u32 %v1051, 4294901760
    %v1157 = vsub.f32 %v1051, %v1156
    %1158 = vmatpush.msra.mxu0 %v1157
    %v1159 = vand.u32 %v1050, 4294901760
    %v1160 = vsub.f32 %v1050, %v1159
    %1161 = vmatpush.msra.mxu0 %v1160
    %v1162 = vand.u32 %v1049, 4294901760
    %v1163 = vsub.f32 %v1049, %v1162
    %1164 = vmatpush.msra.mxu0 %v1163
    %v1165 = vand.u32 %v1048, 4294901760
    %v1166 = vsub.f32 %v1048, %v1165
    %1167 = vmatpush.msra.mxu0 %v1166
    %v1168 = vand.u32 %v1057, 4294901760
    %v1169 = vsub.f32 %v1057, %v1168
    %1170 = vmatmul.f32.gmra.mxu0 %v1169
    %v1171 = vpop.f32.mrf.mxu0
    %v1172 = vadd.f32 %v1138, %v1171
    %v1173 = vand.u32 %v1060, 4294901760
    %v1174 = vsub.f32 %v1060, %v1173
    %1175 = vmatmul.f32.gmra.mxu0 %v1174
    %v1176 = vpop.f32.mrf.mxu0
    %v1177 = vadd.f32 %v1142, %v1176
    %1178 = vdwg.mxu0
    %1179 = vmatpush.msra.mxu0 0.0
    %1180 = vmatpush.msra.mxu0 0.0
    %1181 = vmatpush.msra.mxu0 0.0
    %1182 = vmatpush.msra.mxu0 0.0
    %1183 = vmatpush.msra.mxu0 0.0
    %1184 = vmatpush.msra.mxu0 0.0
    %1185 = vmatpush.msra.mxu0 0.0
    %1186 = vmatpush.msra.mxu0 0.0
    %1187 = vmatpush.msra.mxu0 0.0
    %1188 = vmatpush.msra.mxu0 0.0
    %1189 = vmatpush.msra.mxu0 0.0
    %1190 = vmatpush.msra.mxu0 0.0
    %v1191 = vand.u32 %v1051, 4294901760
    %1192 = vmatpush.msra.mxu0 %v1191
    %v1193 = vand.u32 %v1050, 4294901760
    %1194 = vmatpush.msra.mxu0 %v1193
    %v1195 = vand.u32 %v1049, 4294901760
    %1196 = vmatpush.msra.mxu0 %v1195
    %v1197 = vand.u32 %v1048, 4294901760
    %1198 = vmatpush.msra.mxu0 %v1197
    %v1199 = vand.u32 %v1057, 4294901760
    %v1200 = vsub.f32 %v1057, %v1199
    %v1201 = vand.u32 %v1200, 4294901760
    %1202 = vmatmul.f32.gmra.mxu0 %v1201
    %v1203 = vpop.f32.mrf.mxu0
    %v1204 = vadd.f32 %v1172, %v1203
    %v1205 = vand.u32 %v1060, 4294901760
    %v1206 = vsub.f32 %v1060, %v1205
    %v1207 = vand.u32 %v1206, 4294901760
    %1208 = vmatmul.f32.gmra.mxu0 %v1207
    %v1209 = vpop.f32.mrf.mxu0
    %v1210 = vadd.f32 %v1177, %v1209
    %1211 = vdwg.mxu0
    %1212 = vmatpush.msra.mxu0 0.0
    %1213 = vmatpush.msra.mxu0 0.0
    %1214 = vmatpush.msra.mxu0 0.0
    %1215 = vmatpush.msra.mxu0 0.0
    %1216 = vmatpush.msra.mxu0 0.0
    %1217 = vmatpush.msra.mxu0 0.0
    %1218 = vmatpush.msra.mxu0 0.0
    %1219 = vmatpush.msra.mxu0 0.0
    %1220 = vmatpush.msra.mxu0 0.0
    %1221 = vmatpush.msra.mxu0 0.0
    %1222 = vmatpush.msra.mxu0 0.0
    %1223 = vmatpush.msra.mxu0 0.0
    %v1224 = vand.u32 %v1051, 4294901760
    %v1225 = vsub.f32 %v1051, %v1224
    %v1226 = vand.u32 %v1225, 4294901760
    %1227 = vmatpush.msra.mxu0 %v1226
    %v1228 = vand.u32 %v1050, 4294901760
    %v1229 = vsub.f32 %v1050, %v1228
    %v1230 = vand.u32 %v1229, 4294901760
    %1231 = vmatpush.msra.mxu0 %v1230
    %v1232 = vand.u32 %v1049, 4294901760
    %v1233 = vsub.f32 %v1049, %v1232
    %v1234 = vand.u32 %v1233, 4294901760
    %1235 = vmatpush.msra.mxu0 %v1234
    %v1236 = vand.u32 %v1048, 4294901760
    %v1237 = vsub.f32 %v1048, %v1236
    %v1238 = vand.u32 %v1237, 4294901760
    %1239 = vmatpush.msra.mxu0 %v1238
    %v1240 = vand.u32 %v1057, 4294901760
    %1241 = vmatmul.f32.gmra.mxu0 %v1240
    %v1242 = vpop.f32.mrf.mxu0
    %v1243 = vadd.f32 %v1204, %v1242
    %v1244 = vand.u32 %v1060, 4294901760
    %1245 = vmatmul.f32.gmra.mxu0 %v1244
    %v1246 = vpop.f32.mrf.mxu0
    %v1247 = vadd.f32 %v1210, %v1246
    %1248 = vdwg.mxu0
    %1249 = vmatpush.msra.mxu0 0.0
    %1250 = vmatpush.msra.mxu0 0.0
    %1251 = vmatpush.msra.mxu0 0.0
    %1252 = vmatpush.msra.mxu0 0.0
    %1253 = vmatpush.msra.mxu0 0.0
    %1254 = vmatpush.msra.mxu0 0.0
    %1255 = vmatpush.msra.mxu0 0.0
    %1256 = vmatpush.msra.mxu0 0.0
    %1257 = vmatpush.msra.mxu0 0.0
    %1258 = vmatpush.msra.mxu0 0.0
    %1259 = vmatpush.msra.mxu0 0.0
    %1260 = vmatpush.msra.mxu0 0.0
    %v1261 = vand.u32 %v1051, 4294901760
    %1262 = vmatpush.msra.mxu0 %v1261
    %v1263 = vand.u32 %v1050, 4294901760
    %1264 = vmatpush.msra.mxu0 %v1263
    %v1265 = vand.u32 %v1049, 4294901760
    %1266 = vmatpush.msra.mxu0 %v1265
    %v1267 = vand.u32 %v1048, 4294901760
    %1268 = vmatpush.msra.mxu0 %v1267
    %v1269 = vand.u32 %v1057, 4294901760
    %1270 = vmatmul.f32.gmra.mxu0 %v1269
    %v1271 = vpop.f32.mrf.mxu0
    %v1272 = vadd.f32 %v1243, %v1271
    %v1273 = vand.u32 %v1060, 4294901760
    %1274 = vmatmul.f32.gmra.mxu0 %v1273
    %v1275 = vpop.f32.mrf.mxu0
    %v1276 = vadd.f32 %v1247, %v1275
    %1277 = vdwg.mxu0
    %vm1278 = vcmp.gt.f32.partialorder %v1272, 20.0
    %vm1279 = vcmp.gt.f32.partialorder %v1276, 20.0
    %v1280 = vmin.f32 %v1272, 20.0
    %v1281 = vmin.f32 %v1276, 20.0
    %v1282 = vmul.f32 %v1280, 1.442695
    %v1283 = vpow.pop %v1282
    %v1284 = vmul.f32 %v1281, 1.442695
    %v1285 = vpow.pop %v1284
    %v1286 = vadd.f32 %v1283, 1.0
    %v1287 = vlog2.pop %v1286
    %v1288 = vmul.f32 %v1287, 0.6931472
    %v1289 = vmul.f32 -0.5, %v1283
    %v1290 = vadd.f32 %v1289, 1.0
    %v1291 = vmul.f32 %v1290, %v1283
    %v1292 = vand.u32 2147483647, %v1283
    %vm1293 = vcmp.lt.f32.partialorder %v1292, 0.0004427343
    %v1294 = vsel %vm1293, %v1291, %v1288
    %v1295 = vadd.f32 %v1285, 1.0
    %v1296 = vlog2.pop %v1295
    %v1297 = vmul.f32 %v1296, 0.6931472
    %v1298 = vmul.f32 -0.5, %v1285
    %v1299 = vadd.f32 %v1298, 1.0
    %v1300 = vmul.f32 %v1299, %v1285
    %v1301 = vand.u32 2147483647, %v1285
    %vm1302 = vcmp.lt.f32.partialorder %v1301, 0.0004427343
    %v1303 = vsel %vm1302, %v1300, %v1297
    %v1304 = vsel %vm1278, %v1272, %v1294
    %v1305 = vsel %vm1279, %v1276, %v1303
    %1308 = vrot.lane.b32.xlu0 %v1272, 112
    %v1309 = vpop.permute.xlu0 %1308
    %1310 = vrot.lane.b32.xlu0 %v1276, 112
    %v1311 = vpop.permute.xlu0 %1310
    %v1314 = vmul.f32 %v1272, %v1309
    %v1315 = vmul.f32 %v1276, %v1311
    %1318 = vrot.lane.b32.xlu0 %v1314, 96
    %v1319 = vpop.permute.xlu0 %1318
    %1320 = vrot.lane.b32.xlu0 %v1315, 96
    %v1321 = vpop.permute.xlu0 %1320
    %v1324 = vsel %vm148, %v1319, 0.0
    %1325 = vadd.xlane.f32.xlu0 %v1324
    %v1326 = vpop.xlane.xlu0 %1325
    %v1327 = vsel %vm148, %v1321, 0.0
    %1328 = vadd.xlane.f32.xlu0 %v1327
    %v1329 = vpop.xlane.xlu0 %1328
    %v1330 = vmul.f32 %v1042, %v1304
    %v1331 = vmul.f32 %v1046, %v1305
    %v1332 = vmul.f32 %v1330, %v1326
    %v1333 = vmul.f32 %v1331, %v1329
    %v1334 = vxor.u32 %v1332, 2147483648
    %v1335 = vxor.u32 %v1333, 2147483648
    %v1336 = vmul.f32 %v1334, 1.442695
    %v1337 = vpow.pop %v1336
    %v1338 = vmul.f32 %v1335, 1.442695
    %v1339 = vpow.pop %v1338
    %v1340 = vadd.f32 %v1337, 1.0
    %v1341 = vadd.f32 %v1339, 1.0
    %v1342 = vrcp.pop %v1340
    %v1343 = vmul.f32 %v1340, %v1342
    %v1344 = vsub.f32 1.0, %v1343
    %v1345 = vmul.f32 %v1342, %v1344
    %v1346 = vadd.f32 %v1342, %v1345
    %vm1347 = vweird.f32 %v1340
    %vm1348 = vweird.f32 %v1342
    %vm1349 = vmor %vm1347, %vm1348
    %v1350 = vsel %vm1349, %v1342, %v1346
    %v1351 = vand.u32 2147483647, %v1340
    %vm1352 = vcmp.eq.f32.partialorder %v1351, 8.507059e+37
    %v1353 = vand.u32 %v1340, 2147483648
    %v1354 = vor.u32 1.1754944e-38, %v1353
    %v1355 = vsel %vm1352, %v1354, %v1350
    %v1356 = vmul.f32 1.0, %v1355
    %v1357 = vrcp.pop %v1341
    %v1358 = vmul.f32 %v1341, %v1357
    %v1359 = vsub.f32 1.0, %v1358
    %v1360 = vmul.f32 %v1357, %v1359
    %v1361 = vadd.f32 %v1357, %v1360
    %vm1362 = vweird.f32 %v1341
    %vm1363 = vweird.f32 %v1357
    %vm1364 = vmor %vm1362, %vm1363
    %v1365 = vsel %vm1364, %v1357, %v1361
    %v1366 = vand.u32 2147483647, %v1341
    %vm1367 = vcmp.eq.f32.partialorder %v1366, 8.507059e+37
    %v1368 = vand.u32 %v1341, 2147483648
    %v1369 = vor.u32 1.1754944e-38, %v1368
    %v1370 = vsel %vm1367, %v1369, %v1365
    %v1371 = vmul.f32 1.0, %v1370
    %v1372 = vmul.f32 %v1332, %v1356
    %v1373 = vmul.f32 %v1333, %v1371
    %v1374 = vxor.u32 %v494, 2147483648
    %v1375 = vxor.u32 %v498, 2147483648
    %v1376 = vmul.f32 %v1374, 1.442695
    %v1377 = vpow.pop %v1376
    %v1378 = vmul.f32 %v1375, 1.442695
    %v1379 = vpow.pop %v1378
    %v1380 = vadd.f32 %v1377, 1.0
    %v1381 = vadd.f32 %v1379, 1.0
    %v1382 = vrcp.pop %v1380
    %v1383 = vmul.f32 %v1380, %v1382
    %v1384 = vsub.f32 1.0, %v1383
    %v1385 = vmul.f32 %v1382, %v1384
    %v1386 = vadd.f32 %v1382, %v1385
    %vm1387 = vweird.f32 %v1380
    %vm1388 = vweird.f32 %v1382
    %vm1389 = vmor %vm1387, %vm1388
    %v1390 = vsel %vm1389, %v1382, %v1386
    %v1391 = vand.u32 2147483647, %v1380
    %vm1392 = vcmp.eq.f32.partialorder %v1391, 8.507059e+37
    %v1393 = vand.u32 %v1380, 2147483648
    %v1394 = vor.u32 1.1754944e-38, %v1393
    %v1395 = vsel %vm1392, %v1394, %v1390
    %v1396 = vmul.f32 1.0, %v1395
    %v1397 = vrcp.pop %v1381
    %v1398 = vmul.f32 %v1381, %v1397
    %v1399 = vsub.f32 1.0, %v1398
    %v1400 = vmul.f32 %v1397, %v1399
    %v1401 = vadd.f32 %v1397, %v1400
    %vm1402 = vweird.f32 %v1381
    %vm1403 = vweird.f32 %v1397
    %vm1404 = vmor %vm1402, %vm1403
    %v1405 = vsel %vm1404, %v1397, %v1401
    %v1406 = vand.u32 2147483647, %v1381
    %vm1407 = vcmp.eq.f32.partialorder %v1406, 8.507059e+37
    %v1408 = vand.u32 %v1381, 2147483648
    %v1409 = vor.u32 1.1754944e-38, %v1408
    %v1410 = vsel %vm1407, %v1409, %v1405
    %v1411 = vmul.f32 1.0, %v1410
    %v1412 = vmul.f32 %v494, %v1396
    %v1413 = vmul.f32 %v498, %v1411
    %1416 = vrot.lane.b32.xlu0 %v1412, 32
    %v1417 = vpop.permute.xlu0 %1416
    %1418 = vrot.lane.b32.xlu0 %v1413, 32
    %v1419 = vpop.permute.xlu0 %1418
    %v1422 = vmul.f32 %v1372, %v1417
    %v1423 = vmul.f32 %v1373, %v1419
    %v1424 = vld [vmem:[%s11] sm:$0xff]
    %v1425 = vld [vmem:[%s11 + $0x8] sm:$0xff]
    %v1426 = vld [vmem:[%s11 + $0x10] sm:$0xff]
    %v1427 = vld [vmem:[%s11 + $0x18] sm:$0xff]
    %v1428 = vld [vmem:[%s12] sm:$0x1]
    %v1430 = vperm.slane %v1428, 0
    %v1433 = vsel %vm825, %v1422, 0
    %v1436 = vsel %vm825, %v1423, 0
    %1438 = vmatpush.msra.mxu0 0.0
    %1439 = vmatpush.msra.mxu0 0.0
    %1440 = vmatpush.msra.mxu0 0.0
    %1441 = vmatpush.msra.mxu0 0.0
    %1442 = vmatpush.msra.mxu0 0.0
    %1443 = vmatpush.msra.mxu0 0.0
    %1444 = vmatpush.msra.mxu0 0.0
    %1445 = vmatpush.msra.mxu0 0.0
    %1446 = vmatpush.msra.mxu0 0.0
    %1447 = vmatpush.msra.mxu0 0.0
    %1448 = vmatpush.msra.mxu0 0.0
    %1449 = vmatpush.msra.mxu0 0.0
    %v1450 = vand.u32 %v1427, 4294901760
    %1451 = vmatpush.msra.mxu0 %v1450
    %v1452 = vand.u32 %v1426, 4294901760
    %1453 = vmatpush.msra.mxu0 %v1452
    %v1454 = vand.u32 %v1425, 4294901760
    %1455 = vmatpush.msra.mxu0 %v1454
    %v1456 = vand.u32 %v1424, 4294901760
    %1457 = vmatpush.msra.mxu0 %v1456
    %v1458 = vand.u32 %v1433, 4294901760
    %v1459 = vsub.f32 %v1433, %v1458
    %v1460 = vand.u32 %v1459, 4294901760
    %v1461 = vsub.f32 %v1459, %v1460
    %v1462 = vand.u32 %v1461, 4294901760
    %1463 = vmatmul.f32.gmra.mxu0 %v1462
    %v1464 = vpop.f32.mrf.mxu0
    %v1465 = vadd.f32 %v1430, %v1464
    %v1466 = vand.u32 %v1436, 4294901760
    %v1467 = vsub.f32 %v1436, %v1466
    %v1468 = vand.u32 %v1467, 4294901760
    %v1469 = vsub.f32 %v1467, %v1468
    %v1470 = vand.u32 %v1469, 4294901760
    %1471 = vmatmul.f32.gmra.mxu0 %v1470
    %v1472 = vpop.f32.mrf.mxu0
    %v1473 = vadd.f32 %v1430, %v1472
    %1474 = vdwg.mxu0
    %1475 = vmatpush.msra.mxu0 0.0
    %1476 = vmatpush.msra.mxu0 0.0
    %1477 = vmatpush.msra.mxu0 0.0
    %1478 = vmatpush.msra.mxu0 0.0
    %1479 = vmatpush.msra.mxu0 0.0
    %1480 = vmatpush.msra.mxu0 0.0
    %1481 = vmatpush.msra.mxu0 0.0
    %1482 = vmatpush.msra.mxu0 0.0
    %1483 = vmatpush.msra.mxu0 0.0
    %1484 = vmatpush.msra.mxu0 0.0
    %1485 = vmatpush.msra.mxu0 0.0
    %1486 = vmatpush.msra.mxu0 0.0
    %v1487 = vand.u32 %v1427, 4294901760
    %v1488 = vsub.f32 %v1427, %v1487
    %v1489 = vand.u32 %v1488, 4294901760
    %v1490 = vsub.f32 %v1488, %v1489
    %v1491 = vand.u32 %v1490, 4294901760
    %1492 = vmatpush.msra.mxu0 %v1491
    %v1493 = vand.u32 %v1426, 4294901760
    %v1494 = vsub.f32 %v1426, %v1493
    %v1495 = vand.u32 %v1494, 4294901760
    %v1496 = vsub.f32 %v1494, %v1495
    %v1497 = vand.u32 %v1496, 4294901760
    %1498 = vmatpush.msra.mxu0 %v1497
    %v1499 = vand.u32 %v1425, 4294901760
    %v1500 = vsub.f32 %v1425, %v1499
    %v1501 = vand.u32 %v1500, 4294901760
    %v1502 = vsub.f32 %v1500, %v1501
    %v1503 = vand.u32 %v1502, 4294901760
    %1504 = vmatpush.msra.mxu0 %v1503
    %v1505 = vand.u32 %v1424, 4294901760
    %v1506 = vsub.f32 %v1424, %v1505
    %v1507 = vand.u32 %v1506, 4294901760
    %v1508 = vsub.f32 %v1506, %v1507
    %v1509 = vand.u32 %v1508, 4294901760
    %1510 = vmatpush.msra.mxu0 %v1509
    %v1511 = vand.u32 %v1433, 4294901760
    %1512 = vmatmul.f32.gmra.mxu0 %v1511
    %v1513 = vpop.f32.mrf.mxu0
    %v1514 = vadd.f32 %v1465, %v1513
    %v1515 = vand.u32 %v1436, 4294901760
    %1516 = vmatmul.f32.gmra.mxu0 %v1515
    %v1517 = vpop.f32.mrf.mxu0
    %v1518 = vadd.f32 %v1473, %v1517
    %1519 = vdwg.mxu0
    %1520 = vmatpush.msra.mxu0 0.0
    %1521 = vmatpush.msra.mxu0 0.0
    %1522 = vmatpush.msra.mxu0 0.0
    %1523 = vmatpush.msra.mxu0 0.0
    %1524 = vmatpush.msra.mxu0 0.0
    %1525 = vmatpush.msra.mxu0 0.0
    %1526 = vmatpush.msra.mxu0 0.0
    %1527 = vmatpush.msra.mxu0 0.0
    %1528 = vmatpush.msra.mxu0 0.0
    %1529 = vmatpush.msra.mxu0 0.0
    %1530 = vmatpush.msra.mxu0 0.0
    %1531 = vmatpush.msra.mxu0 0.0
    %v1532 = vand.u32 %v1427, 4294901760
    %v1533 = vsub.f32 %v1427, %v1532
    %1534 = vmatpush.msra.mxu0 %v1533
    %v1535 = vand.u32 %v1426, 4294901760
    %v1536 = vsub.f32 %v1426, %v1535
    %1537 = vmatpush.msra.mxu0 %v1536
    %v1538 = vand.u32 %v1425, 4294901760
    %v1539 = vsub.f32 %v1425, %v1538
    %1540 = vmatpush.msra.mxu0 %v1539
    %v1541 = vand.u32 %v1424, 4294901760
    %v1542 = vsub.f32 %v1424, %v1541
    %1543 = vmatpush.msra.mxu0 %v1542
    %v1544 = vand.u32 %v1433, 4294901760
    %v1545 = vsub.f32 %v1433, %v1544
    %1546 = vmatmul.f32.gmra.mxu0 %v1545
    %v1547 = vpop.f32.mrf.mxu0
    %v1548 = vadd.f32 %v1514, %v1547
    %v1549 = vand.u32 %v1436, 4294901760
    %v1550 = vsub.f32 %v1436, %v1549
    %1551 = vmatmul.f32.gmra.mxu0 %v1550
    %v1552 = vpop.f32.mrf.mxu0
    %v1553 = vadd.f32 %v1518, %v1552
    %1554 = vdwg.mxu0
    %1555 = vmatpush.msra.mxu0 0.0
    %1556 = vmatpush.msra.mxu0 0.0
    %1557 = vmatpush.msra.mxu0 0.0
    %1558 = vmatpush.msra.mxu0 0.0
    %1559 = vmatpush.msra.mxu0 0.0
    %1560 = vmatpush.msra.mxu0 0.0
    %1561 = vmatpush.msra.mxu0 0.0
    %1562 = vmatpush.msra.mxu0 0.0
    %1563 = vmatpush.msra.mxu0 0.0
    %1564 = vmatpush.msra.mxu0 0.0
    %1565 = vmatpush.msra.mxu0 0.0
    %1566 = vmatpush.msra.mxu0 0.0
    %v1567 = vand.u32 %v1427, 4294901760
    %1568 = vmatpush.msra.mxu0 %v1567
    %v1569 = vand.u32 %v1426, 4294901760
    %1570 = vmatpush.msra.mxu0 %v1569
    %v1571 = vand.u32 %v1425, 4294901760
    %1572 = vmatpush.msra.mxu0 %v1571
    %v1573 = vand.u32 %v1424, 4294901760
    %1574 = vmatpush.msra.mxu0 %v1573
    %v1575 = vand.u32 %v1433, 4294901760
    %v1576 = vsub.f32 %v1433, %v1575
    %v1577 = vand.u32 %v1576, 4294901760
    %1578 = vmatmul.f32.gmra.mxu0 %v1577
    %v1579 = vpop.f32.mrf.mxu0
    %v1580 = vadd.f32 %v1548, %v1579
    %v1581 = vand.u32 %v1436, 4294901760
    %v1582 = vsub.f32 %v1436, %v1581
    %v1583 = vand.u32 %v1582, 4294901760
    %1584 = vmatmul.f32.gmra.mxu0 %v1583
    %v1585 = vpop.f32.mrf.mxu0
    %v1586 = vadd.f32 %v1553, %v1585
    %1587 = vdwg.mxu0
    %1588 = vmatpush.msra.mxu0 0.0
    %1589 = vmatpush.msra.mxu0 0.0
    %1590 = vmatpush.msra.mxu0 0.0
    %1591 = vmatpush.msra.mxu0 0.0
    %1592 = vmatpush.msra.mxu0 0.0
    %1593 = vmatpush.msra.mxu0 0.0
    %1594 = vmatpush.msra.mxu0 0.0
    %1595 = vmatpush.msra.mxu0 0.0
    %1596 = vmatpush.msra.mxu0 0.0
    %1597 = vmatpush.msra.mxu0 0.0
    %1598 = vmatpush.msra.mxu0 0.0
    %1599 = vmatpush.msra.mxu0 0.0
    %v1600 = vand.u32 %v1427, 4294901760
    %v1601 = vsub.f32 %v1427, %v1600
    %v1602 = vand.u32 %v1601, 4294901760
    %1603 = vmatpush.msra.mxu0 %v1602
    %v1604 = vand.u32 %v1426, 4294901760
    %v1605 = vsub.f32 %v1426, %v1604
    %v1606 = vand.u32 %v1605, 4294901760
    %1607 = vmatpush.msra.mxu0 %v1606
    %v1608 = vand.u32 %v1425, 4294901760
    %v1609 = vsub.f32 %v1425, %v1608
    %v1610 = vand.u32 %v1609, 4294901760
    %1611 = vmatpush.msra.mxu0 %v1610
    %v1612 = vand.u32 %v1424, 4294901760
    %v1613 = vsub.f32 %v1424, %v1612
    %v1614 = vand.u32 %v1613, 4294901760
    %1615 = vmatpush.msra.mxu0 %v1614
    %v1616 = vand.u32 %v1433, 4294901760
    %1617 = vmatmul.f32.gmra.mxu0 %v1616
    %v1618 = vpop.f32.mrf.mxu0
    %v1619 = vadd.f32 %v1580, %v1618
    %v1620 = vand.u32 %v1436, 4294901760
    %1621 = vmatmul.f32.gmra.mxu0 %v1620
    %v1622 = vpop.f32.mrf.mxu0
    %v1623 = vadd.f32 %v1586, %v1622
    %1624 = vdwg.mxu0
    %1625 = vmatpush.msra.mxu0 0.0
    %1626 = vmatpush.msra.mxu0 0.0
    %1627 = vmatpush.msra.mxu0 0.0
    %1628 = vmatpush.msra.mxu0 0.0
    %1629 = vmatpush.msra.mxu0 0.0
    %1630 = vmatpush.msra.mxu0 0.0
    %1631 = vmatpush.msra.mxu0 0.0
    %1632 = vmatpush.msra.mxu0 0.0
    %1633 = vmatpush.msra.mxu0 0.0
    %1634 = vmatpush.msra.mxu0 0.0
    %1635 = vmatpush.msra.mxu0 0.0
    %1636 = vmatpush.msra.mxu0 0.0
    %v1637 = vand.u32 %v1427, 4294901760
    %1638 = vmatpush.msra.mxu0 %v1637
    %v1639 = vand.u32 %v1426, 4294901760
    %1640 = vmatpush.msra.mxu0 %v1639
    %v1641 = vand.u32 %v1425, 4294901760
    %1642 = vmatpush.msra.mxu0 %v1641
    %v1643 = vand.u32 %v1424, 4294901760
    %1644 = vmatpush.msra.mxu0 %v1643
    %v1645 = vand.u32 %v1433, 4294901760
    %1646 = vmatmul.f32.gmra.mxu0 %v1645
    %v1647 = vpop.f32.mrf.mxu0
    %v1648 = vadd.f32 %v1619, %v1647
    %v1649 = vand.u32 %v1436, 4294901760
    %1650 = vmatmul.f32.gmra.mxu0 %v1649
    %v1651 = vpop.f32.mrf.mxu0
    %v1652 = vadd.f32 %v1623, %v1651
    %1653 = vdwg.mxu0
    %v1654 = vmul.f32 %v1648, %v1648
    %v1655 = vmul.f32 %v1652, %v1652
    %v1656 = vsel %vm148, %v1654, 0.0
    %1657 = vadd.xlane.f32.xlu0 %v1656
    %v1658 = vpop.xlane.xlu0 %1657
    %v1659 = vsel %vm148, %v1655, 0.0
    %1660 = vadd.xlane.f32.xlu0 %v1659
    %v1661 = vpop.xlane.xlu0 %1660
    %v1662 = vmul.f32 %v1658, %v161
    %v1663 = vmul.f32 %v1661, %v161
    %v1664 = vadd.f32 %v1662, 1e-05
    %v1665 = vadd.f32 %v1663, 1e-05
    %v1666 = vrsqrt.pop %v1664
    %v1667 = vmul.f32 %v1666, %v1664
    %v1668 = vmul.f32 %v1667, %v1666
    %v1669 = vmul.f32 0.5, %v1668
    %v1670 = vsub.f32 1.5, %v1669
    %v1671 = vmul.f32 %v1666, %v1670
    %vm1672 = vweird.f32 %v1664
    %vm1673 = vweird.f32 %v1666
    %vm1674 = vmor %vm1672, %vm1673
    %v1675 = vsel %vm1674, %v1666, %v1671
    %v1676 = vrsqrt.pop %v1665
    %v1677 = vmul.f32 %v1676, %v1665
    %v1678 = vmul.f32 %v1677, %v1676
    %v1679 = vmul.f32 0.5, %v1678
    %v1680 = vsub.f32 1.5, %v1679
    %v1681 = vmul.f32 %v1676, %v1680
    %vm1682 = vweird.f32 %v1665
    %vm1683 = vweird.f32 %v1676
    %vm1684 = vmor %vm1682, %vm1683
    %v1685 = vsel %vm1684, %v1676, %v1681
    %v1686 = vmul.f32 %v1648, %v1675
    %v1687 = vmul.f32 %v1652, %v1685
    %s1688 = scalar_lea.vmem %s2, 1
    %v1689 = vld [vmem:[%s1688] sm:$0x1]
    %v1691 = vperm.slane %v1689, 0
    %v1693 = vmul.f32 %v1686, %v1691
    %v1694 = vmul.f32 %v1687, %v1691
    %s1695 = scalar_lea.vmem [#allocation2], 16
    %v1696 = vld [vmem:[%s1695] sm:$0xff]
    %v1697 = vld [vmem:[%s1695 + $0x8] sm:$0xff]
    %s1698 = scalar_lea.vmem %s4, 1
    %v1699 = vld [vmem:[%s1698] sm:$0x1]
    %v1701 = vperm.slane %v1699, 0
    %v1704 = vsel %vm148, %v1693, 0
    %v1707 = vsel %vm148, %v1694, 0
    %1709 = vmatpush.msra.mxu0 0.0
    %1710 = vmatpush.msra.mxu0 0.0
    %1711 = vmatpush.msra.mxu0 0.0
    %1712 = vmatpush.msra.mxu0 0.0
    %1713 = vmatpush.msra.mxu0 0.0
    %1714 = vmatpush.msra.mxu0 0.0
    %1715 = vmatpush.msra.mxu0 0.0
    %1716 = vmatpush.msra.mxu0 0.0
    %1717 = vmatpush.msra.mxu0 0.0
    %1718 = vmatpush.msra.mxu0 0.0
    %1719 = vmatpush.msra.mxu0 0.0
    %1720 = vmatpush.msra.mxu0 0.0
    %1721 = vmatpush.msra.mxu0 0.0
    %1722 = vmatpush.msra.mxu0 0.0
    %v1723 = vand.u32 %v1697, 4294901760
    %1724 = vmatpush.msra.mxu0 %v1723
    %v1725 = vand.u32 %v1696, 4294901760
    %1726 = vmatpush.msra.mxu0 %v1725
    %v1727 = vand.u32 %v1704, 4294901760
    %v1728 = vsub.f32 %v1704, %v1727
    %v1729 = vand.u32 %v1728, 4294901760
    %v1730 = vsub.f32 %v1728, %v1729
    %v1731 = vand.u32 %v1730, 4294901760
    %1732 = vmatmul.f32.gmra.mxu0 %v1731
    %v1733 = vpop.f32.mrf.mxu0
    %v1734 = vadd.f32 %v1701, %v1733
    %v1735 = vand.u32 %v1707, 4294901760
    %v1736 = vsub.f32 %v1707, %v1735
    %v1737 = vand.u32 %v1736, 4294901760
    %v1738 = vsub.f32 %v1736, %v1737
    %v1739 = vand.u32 %v1738, 4294901760
    %1740 = vmatmul.f32.gmra.mxu0 %v1739
    %v1741 = vpop.f32.mrf.mxu0
    %v1742 = vadd.f32 %v1701, %v1741
    %1743 = vdwg.mxu0
    %1744 = vmatpush.msra.mxu0 0.0
    %1745 = vmatpush.msra.mxu0 0.0
    %1746 = vmatpush.msra.mxu0 0.0
    %1747 = vmatpush.msra.mxu0 0.0
    %1748 = vmatpush.msra.mxu0 0.0
    %1749 = vmatpush.msra.mxu0 0.0
    %1750 = vmatpush.msra.mxu0 0.0
    %1751 = vmatpush.msra.mxu0 0.0
    %1752 = vmatpush.msra.mxu0 0.0
    %1753 = vmatpush.msra.mxu0 0.0
    %1754 = vmatpush.msra.mxu0 0.0
    %1755 = vmatpush.msra.mxu0 0.0
    %1756 = vmatpush.msra.mxu0 0.0
    %1757 = vmatpush.msra.mxu0 0.0
    %v1758 = vand.u32 %v1697, 4294901760
    %v1759 = vsub.f32 %v1697, %v1758
    %v1760 = vand.u32 %v1759, 4294901760
    %v1761 = vsub.f32 %v1759, %v1760
    %v1762 = vand.u32 %v1761, 4294901760
    %1763 = vmatpush.msra.mxu0 %v1762
    %v1764 = vand.u32 %v1696, 4294901760
    %v1765 = vsub.f32 %v1696, %v1764
    %v1766 = vand.u32 %v1765, 4294901760
    %v1767 = vsub.f32 %v1765, %v1766
    %v1768 = vand.u32 %v1767, 4294901760
    %1769 = vmatpush.msra.mxu0 %v1768
    %v1770 = vand.u32 %v1704, 4294901760
    %1771 = vmatmul.f32.gmra.mxu0 %v1770
    %v1772 = vpop.f32.mrf.mxu0
    %v1773 = vadd.f32 %v1734, %v1772
    %v1774 = vand.u32 %v1707, 4294901760
    %1775 = vmatmul.f32.gmra.mxu0 %v1774
    %v1776 = vpop.f32.mrf.mxu0
    %v1777 = vadd.f32 %v1742, %v1776
    %1778 = vdwg.mxu0
    %1779 = vmatpush.msra.mxu0 0.0
    %1780 = vmatpush.msra.mxu0 0.0
    %1781 = vmatpush.msra.mxu0 0.0
    %1782 = vmatpush.msra.mxu0 0.0
    %1783 = vmatpush.msra.mxu0 0.0
    %1784 = vmatpush.msra.mxu0 0.0
    %1785 = vmatpush.msra.mxu0 0.0
    %1786 = vmatpush.msra.mxu0 0.0
    %1787 = vmatpush.msra.mxu0 0.0
    %1788 = vmatpush.msra.mxu0 0.0
    %1789 = vmatpush.msra.mxu0 0.0
    %1790 = vmatpush.msra.mxu0 0.0
    %1791 = vmatpush.msra.mxu0 0.0
    %1792 = vmatpush.msra.mxu0 0.0
    %v1793 = vand.u32 %v1697, 4294901760
    %v1794 = vsub.f32 %v1697, %v1793
    %1795 = vmatpush.msra.mxu0 %v1794
    %v1796 = vand.u32 %v1696, 4294901760
    %v1797 = vsub.f32 %v1696, %v1796
    %1798 = vmatpush.msra.mxu0 %v1797
    %v1799 = vand.u32 %v1704, 4294901760
    %v1800 = vsub.f32 %v1704, %v1799
    %1801 = vmatmul.f32.gmra.mxu0 %v1800
    %v1802 = vpop.f32.mrf.mxu0
    %v1803 = vadd.f32 %v1773, %v1802
    %v1804 = vand.u32 %v1707, 4294901760
    %v1805 = vsub.f32 %v1707, %v1804
    %1806 = vmatmul.f32.gmra.mxu0 %v1805
    %v1807 = vpop.f32.mrf.mxu0
    %v1808 = vadd.f32 %v1777, %v1807
    %1809 = vdwg.mxu0
    %1810 = vmatpush.msra.mxu0 0.0
    %1811 = vmatpush.msra.mxu0 0.0
    %1812 = vmatpush.msra.mxu0 0.0
    %1813 = vmatpush.msra.mxu0 0.0
    %1814 = vmatpush.msra.mxu0 0.0
    %1815 = vmatpush.msra.mxu0 0.0
    %1816 = vmatpush.msra.mxu0 0.0
    %1817 = vmatpush.msra.mxu0 0.0
    %1818 = vmatpush.msra.mxu0 0.0
    %1819 = vmatpush.msra.mxu0 0.0
    %1820 = vmatpush.msra.mxu0 0.0
    %1821 = vmatpush.msra.mxu0 0.0
    %1822 = vmatpush.msra.mxu0 0.0
    %1823 = vmatpush.msra.mxu0 0.0
    %v1824 = vand.u32 %v1697, 4294901760
    %1825 = vmatpush.msra.mxu0 %v1824
    %v1826 = vand.u32 %v1696, 4294901760
    %1827 = vmatpush.msra.mxu0 %v1826
    %v1828 = vand.u32 %v1704, 4294901760
    %v1829 = vsub.f32 %v1704, %v1828
    %v1830 = vand.u32 %v1829, 4294901760
    %1831 = vmatmul.f32.gmra.mxu0 %v1830
    %v1832 = vpop.f32.mrf.mxu0
    %v1833 = vadd.f32 %v1803, %v1832
    %v1834 = vand.u32 %v1707, 4294901760
    %v1835 = vsub.f32 %v1707, %v1834
    %v1836 = vand.u32 %v1835, 4294901760
    %1837 = vmatmul.f32.gmra.mxu0 %v1836
    %v1838 = vpop.f32.mrf.mxu0
    %v1839 = vadd.f32 %v1808, %v1838
    %1840 = vdwg.mxu0
    %1841 = vmatpush.msra.mxu0 0.0
    %1842 = vmatpush.msra.mxu0 0.0
    %1843 = vmatpush.msra.mxu0 0.0
    %1844 = vmatpush.msra.mxu0 0.0
    %1845 = vmatpush.msra.mxu0 0.0
    %1846 = vmatpush.msra.mxu0 0.0
    %1847 = vmatpush.msra.mxu0 0.0
    %1848 = vmatpush.msra.mxu0 0.0
    %1849 = vmatpush.msra.mxu0 0.0
    %1850 = vmatpush.msra.mxu0 0.0
    %1851 = vmatpush.msra.mxu0 0.0
    %1852 = vmatpush.msra.mxu0 0.0
    %1853 = vmatpush.msra.mxu0 0.0
    %1854 = vmatpush.msra.mxu0 0.0
    %v1855 = vand.u32 %v1697, 4294901760
    %v1856 = vsub.f32 %v1697, %v1855
    %v1857 = vand.u32 %v1856, 4294901760
    %1858 = vmatpush.msra.mxu0 %v1857
    %v1859 = vand.u32 %v1696, 4294901760
    %v1860 = vsub.f32 %v1696, %v1859
    %v1861 = vand.u32 %v1860, 4294901760
    %1862 = vmatpush.msra.mxu0 %v1861
    %v1863 = vand.u32 %v1704, 4294901760
    %1864 = vmatmul.f32.gmra.mxu0 %v1863
    %v1865 = vpop.f32.mrf.mxu0
    %v1866 = vadd.f32 %v1833, %v1865
    %v1867 = vand.u32 %v1707, 4294901760
    %1868 = vmatmul.f32.gmra.mxu0 %v1867
    %v1869 = vpop.f32.mrf.mxu0
    %v1870 = vadd.f32 %v1839, %v1869
    %1871 = vdwg.mxu0
    %1872 = vmatpush.msra.mxu0 0.0
    %1873 = vmatpush.msra.mxu0 0.0
    %1874 = vmatpush.msra.mxu0 0.0
    %1875 = vmatpush.msra.mxu0 0.0
    %1876 = vmatpush.msra.mxu0 0.0
    %1877 = vmatpush.msra.mxu0 0.0
    %1878 = vmatpush.msra.mxu0 0.0
    %1879 = vmatpush.msra.mxu0 0.0
    %1880 = vmatpush.msra.mxu0 0.0
    %1881 = vmatpush.msra.mxu0 0.0
    %1882 = vmatpush.msra.mxu0 0.0
    %1883 = vmatpush.msra.mxu0 0.0
    %1884 = vmatpush.msra.mxu0 0.0
    %1885 = vmatpush.msra.mxu0 0.0
    %v1886 = vand.u32 %v1697, 4294901760
    %1887 = vmatpush.msra.mxu0 %v1886
    %v1888 = vand.u32 %v1696, 4294901760
    %1889 = vmatpush.msra.mxu0 %v1888
    %v1890 = vand.u32 %v1704, 4294901760
    %1891 = vmatmul.f32.gmra.mxu0 %v1890
    %v1892 = vpop.f32.mrf.mxu0
    %v1893 = vadd.f32 %v1866, %v1892
    %v1894 = vand.u32 %v1707, 4294901760
    %1895 = vmatmul.f32.gmra.mxu0 %v1894
    %v1896 = vpop.f32.mrf.mxu0
    %v1897 = vadd.f32 %v1870, %v1896
    %1898 = vdwg.mxu0
    %1901 = vrot.lane.b32.xlu0 %v1893, 96
    %v1902 = vpop.permute.xlu0 %1901
    %1903 = vrot.lane.b32.xlu0 %v1897, 96
    %v1904 = vpop.permute.xlu0 %1903
    %1907 = vrot.lane.b32.xlu0 %v1893, 64
    %v1908 = vpop.permute.xlu0 %1907
    %1909 = vrot.lane.b32.xlu0 %v1897, 64
    %v1910 = vpop.permute.xlu0 %1909
    %s1913 = scalar_lea.vmem [#allocation4], 16
    %v1914 = vld [vmem:[%s1913] sm:$0xff]
    %v1915 = vld [vmem:[%s1913 + $0x8] sm:$0xff]
    %s1916 = scalar_lea.vmem [#allocation6], 16
    %v1917 = vld [vmem:[%s1916] sm:$0xff]
    %v1918 = vld [vmem:[%s1916 + $0x8] sm:$0xff]
    %1920 = vset.pattern.permute.xlu0 0
    %1921 = vperm.xlu0 %1920, %v1917
    %v1922 = vpop.permute.xlu0 %1921
    %1925 = vset.pattern.permute.xlu0 0
    %1926 = vperm.xlu0 %1925, %v1918
    %v1927 = vpop.permute.xlu0 %1926
    %v1930 = vsel %vm528, %v1914, 0
    %v1933 = vsel %vm528, %v1915, 0
    %1935 = vmatpush.msra.mxu0 0.0
    %1936 = vmatpush.msra.mxu0 0.0
    %1937 = vmatpush.msra.mxu0 0.0
    %1938 = vmatpush.msra.mxu0 0.0
    %1939 = vmatpush.msra.mxu0 0.0
    %1940 = vmatpush.msra.mxu0 0.0
    %1941 = vmatpush.msra.mxu0 0.0
    %1942 = vmatpush.msra.mxu0 0.0
    %1943 = vmatpush.msra.mxu0 0.0
    %1944 = vmatpush.msra.mxu0 0.0
    %v1945 = vand.u32 %v1910, 4294901760
    %1946 = vmatpush.msra.mxu0 %v1945
    %v1947 = vand.u32 %v1908, 4294901760
    %1948 = vmatpush.msra.mxu0 %v1947
    %v1949 = vand.u32 %v1904, 4294901760
    %1950 = vmatpush.msra.mxu0 %v1949
    %v1951 = vand.u32 %v1902, 4294901760
    %1952 = vmatpush.msra.mxu0 %v1951
    %v1953 = vand.u32 %v1897, 4294901760
    %1954 = vmatpush.msra.mxu0 %v1953
    %v1955 = vand.u32 %v1893, 4294901760
    %1956 = vmatpush.msra.mxu0 %v1955
    %v1957 = vand.u32 %v1930, 4294901760
    %v1958 = vsub.f32 %v1930, %v1957
    %v1959 = vand.u32 %v1958, 4294901760
    %v1960 = vsub.f32 %v1958, %v1959
    %v1961 = vand.u32 %v1960, 4294901760
    %1962 = vmatmul.f32.gmra.mxu0 %v1961
    %v1963 = vpop.f32.mrf.mxu0
    %v1964 = vadd.f32 %v1922, %v1963
    %v1965 = vand.u32 %v1933, 4294901760
    %v1966 = vsub.f32 %v1933, %v1965
    %v1967 = vand.u32 %v1966, 4294901760
    %v1968 = vsub.f32 %v1966, %v1967
    %v1969 = vand.u32 %v1968, 4294901760
    %1970 = vmatmul.f32.gmra.mxu0 %v1969
    %v1971 = vpop.f32.mrf.mxu0
    %v1972 = vadd.f32 %v1927, %v1971
    %1973 = vdwg.mxu0
    %1974 = vmatpush.msra.mxu0 0.0
    %1975 = vmatpush.msra.mxu0 0.0
    %1976 = vmatpush.msra.mxu0 0.0
    %1977 = vmatpush.msra.mxu0 0.0
    %1978 = vmatpush.msra.mxu0 0.0
    %1979 = vmatpush.msra.mxu0 0.0
    %1980 = vmatpush.msra.mxu0 0.0
    %1981 = vmatpush.msra.mxu0 0.0
    %1982 = vmatpush.msra.mxu0 0.0
    %1983 = vmatpush.msra.mxu0 0.0
    %v1984 = vand.u32 %v1910, 4294901760
    %v1985 = vsub.f32 %v1910, %v1984
    %v1986 = vand.u32 %v1985, 4294901760
    %v1987 = vsub.f32 %v1985, %v1986
    %v1988 = vand.u32 %v1987, 4294901760
    %1989 = vmatpush.msra.mxu0 %v1988
    %v1990 = vand.u32 %v1908, 4294901760
    %v1991 = vsub.f32 %v1908, %v1990
    %v1992 = vand.u32 %v1991, 4294901760
    %v1993 = vsub.f32 %v1991, %v1992
    %v1994 = vand.u32 %v1993, 4294901760
    %1995 = vmatpush.msra.mxu0 %v1994
    %v1996 = vand.u32 %v1904, 4294901760
    %v1997 = vsub.f32 %v1904, %v1996
    %v1998 = vand.u32 %v1997, 4294901760
    %v1999 = vsub.f32 %v1997, %v1998
    %v2000 = vand.u32 %v1999, 4294901760
    %2001 = vmatpush.msra.mxu0 %v2000
    %v2002 = vand.u32 %v1902, 4294901760
    %v2003 = vsub.f32 %v1902, %v2002
    %v2004 = vand.u32 %v2003, 4294901760
    %v2005 = vsub.f32 %v2003, %v2004
    %v2006 = vand.u32 %v2005, 4294901760
    %2007 = vmatpush.msra.mxu0 %v2006
    %v2008 = vand.u32 %v1897, 4294901760
    %v2009 = vsub.f32 %v1897, %v2008
    %v2010 = vand.u32 %v2009, 4294901760
    %v2011 = vsub.f32 %v2009, %v2010
    %v2012 = vand.u32 %v2011, 4294901760
    %2013 = vmatpush.msra.mxu0 %v2012
    %v2014 = vand.u32 %v1893, 4294901760
    %v2015 = vsub.f32 %v1893, %v2014
    %v2016 = vand.u32 %v2015, 4294901760
    %v2017 = vsub.f32 %v2015, %v2016
    %v2018 = vand.u32 %v2017, 4294901760
    %2019 = vmatpush.msra.mxu0 %v2018
    %v2020 = vand.u32 %v1930, 4294901760
    %2021 = vmatmul.f32.gmra.mxu0 %v2020
    %v2022 = vpop.f32.mrf.mxu0
    %v2023 = vadd.f32 %v1964, %v2022
    %v2024 = vand.u32 %v1933, 4294901760
    %2025 = vmatmul.f32.gmra.mxu0 %v2024
    %v2026 = vpop.f32.mrf.mxu0
    %v2027 = vadd.f32 %v1972, %v2026
    %2028 = vdwg.mxu0
    %2029 = vmatpush.msra.mxu0 0.0
    %2030 = vmatpush.msra.mxu0 0.0
    %2031 = vmatpush.msra.mxu0 0.0
    %2032 = vmatpush.msra.mxu0 0.0
    %2033 = vmatpush.msra.mxu0 0.0
    %2034 = vmatpush.msra.mxu0 0.0
    %2035 = vmatpush.msra.mxu0 0.0
    %2036 = vmatpush.msra.mxu0 0.0
    %2037 = vmatpush.msra.mxu0 0.0
    %2038 = vmatpush.msra.mxu0 0.0
    %v2039 = vand.u32 %v1910, 4294901760
    %v2040 = vsub.f32 %v1910, %v2039
    %2041 = vmatpush.msra.mxu0 %v2040
    %v2042 = vand.u32 %v1908, 4294901760
    %v2043 = vsub.f32 %v1908, %v2042
    %2044 = vmatpush.msra.mxu0 %v2043
    %v2045 = vand.u32 %v1904, 4294901760
    %v2046 = vsub.f32 %v1904, %v2045
    %2047 = vmatpush.msra.mxu0 %v2046
    %v2048 = vand.u32 %v1902, 4294901760
    %v2049 = vsub.f32 %v1902, %v2048
    %2050 = vmatpush.msra.mxu0 %v2049
    %v2051 = vand.u32 %v1897, 4294901760
    %v2052 = vsub.f32 %v1897, %v2051
    %2053 = vmatpush.msra.mxu0 %v2052
    %v2054 = vand.u32 %v1893, 4294901760
    %v2055 = vsub.f32 %v1893, %v2054
    %2056 = vmatpush.msra.mxu0 %v2055
    %v2057 = vand.u32 %v1930, 4294901760
    %v2058 = vsub.f32 %v1930, %v2057
    %2059 = vmatmul.f32.gmra.mxu0 %v2058
    %v2060 = vpop.f32.mrf.mxu0
    %v2061 = vadd.f32 %v2023, %v2060
    %v2062 = vand.u32 %v1933, 4294901760
    %v2063 = vsub.f32 %v1933, %v2062
    %2064 = vmatmul.f32.gmra.mxu0 %v2063
    %v2065 = vpop.f32.mrf.mxu0
    %v2066 = vadd.f32 %v2027, %v2065
    %2067 = vdwg.mxu0
    %2068 = vmatpush.msra.mxu0 0.0
    %2069 = vmatpush.msra.mxu0 0.0
    %2070 = vmatpush.msra.mxu0 0.0
    %2071 = vmatpush.msra.mxu0 0.0
    %2072 = vmatpush.msra.mxu0 0.0
    %2073 = vmatpush.msra.mxu0 0.0
    %2074 = vmatpush.msra.mxu0 0.0
    %2075 = vmatpush.msra.mxu0 0.0
    %2076 = vmatpush.msra.mxu0 0.0
    %2077 = vmatpush.msra.mxu0 0.0
    %v2078 = vand.u32 %v1910, 4294901760
    %2079 = vmatpush.msra.mxu0 %v2078
    %v2080 = vand.u32 %v1908, 4294901760
    %2081 = vmatpush.msra.mxu0 %v2080
    %v2082 = vand.u32 %v1904, 4294901760
    %2083 = vmatpush.msra.mxu0 %v2082
    %v2084 = vand.u32 %v1902, 4294901760
    %2085 = vmatpush.msra.mxu0 %v2084
    %v2086 = vand.u32 %v1897, 4294901760
    %2087 = vmatpush.msra.mxu0 %v2086
    %v2088 = vand.u32 %v1893, 4294901760
    %2089 = vmatpush.msra.mxu0 %v2088
    %v2090 = vand.u32 %v1930, 4294901760
    %v2091 = vsub.f32 %v1930, %v2090
    %v2092 = vand.u32 %v2091, 4294901760
    %2093 = vmatmul.f32.gmra.mxu0 %v2092
    %v2094 = vpop.f32.mrf.mxu0
    %v2095 = vadd.f32 %v2061, %v2094
    %v2096 = vand.u32 %v1933, 4294901760
    %v2097 = vsub.f32 %v1933, %v2096
    %v2098 = vand.u32 %v2097, 4294901760
    %2099 = vmatmul.f32.gmra.mxu0 %v2098
    %v2100 = vpop.f32.mrf.mxu0
    %v2101 = vadd.f32 %v2066, %v2100
    %2102 = vdwg.mxu0
    %2103 = vmatpush.msra.mxu0 0.0
    %2104 = vmatpush.msra.mxu0 0.0
    %2105 = vmatpush.msra.mxu0 0.0
    %2106 = vmatpush.msra.mxu0 0.0
    %2107 = vmatpush.msra.mxu0 0.0
    %2108 = vmatpush.msra.mxu0 0.0
    %2109 = vmatpush.msra.mxu0 0.0
    %2110 = vmatpush.msra.mxu0 0.0
    %2111 = vmatpush.msra.mxu0 0.0
    %2112 = vmatpush.msra.mxu0 0.0
    %v2113 = vand.u32 %v1910, 4294901760
    %v2114 = vsub.f32 %v1910, %v2113
    %v2115 = vand.u32 %v2114, 4294901760
    %2116 = vmatpush.msra.mxu0 %v2115
    %v2117 = vand.u32 %v1908, 4294901760
    %v2118 = vsub.f32 %v1908, %v2117
    %v2119 = vand.u32 %v2118, 4294901760
    %2120 = vmatpush.msra.mxu0 %v2119
    %v2121 = vand.u32 %v1904, 4294901760
    %v2122 = vsub.f32 %v1904, %v2121
    %v2123 = vand.u32 %v2122, 4294901760
    %2124 = vmatpush.msra.mxu0 %v2123
    %v2125 = vand.u32 %v1902, 4294901760
    %v2126 = vsub.f32 %v1902, %v2125
    %v2127 = vand.u32 %v2126, 4294901760
    %2128 = vmatpush.msra.mxu0 %v2127
    %v2129 = vand.u32 %v1897, 4294901760
    %v2130 = vsub.f32 %v1897, %v2129
    %v2131 = vand.u32 %v2130, 4294901760
    %2132 = vmatpush.msra.mxu0 %v2131
    %v2133 = vand.u32 %v1893, 4294901760
    %v2134 = vsub.f32 %v1893, %v2133
    %v2135 = vand.u32 %v2134, 4294901760
    %2136 = vmatpush.msra.mxu0 %v2135
    %v2137 = vand.u32 %v1930, 4294901760
    %2138 = vmatmul.f32.gmra.mxu0 %v2137
    %v2139 = vpop.f32.mrf.mxu0
    %v2140 = vadd.f32 %v2095, %v2139
    %v2141 = vand.u32 %v1933, 4294901760
    %2142 = vmatmul.f32.gmra.mxu0 %v2141
    %v2143 = vpop.f32.mrf.mxu0
    %v2144 = vadd.f32 %v2101, %v2143
    %2145 = vdwg.mxu0
    %2146 = vmatpush.msra.mxu0 0.0
    %2147 = vmatpush.msra.mxu0 0.0
    %2148 = vmatpush.msra.mxu0 0.0
    %2149 = vmatpush.msra.mxu0 0.0
    %2150 = vmatpush.msra.mxu0 0.0
    %2151 = vmatpush.msra.mxu0 0.0
    %2152 = vmatpush.msra.mxu0 0.0
    %2153 = vmatpush.msra.mxu0 0.0
    %2154 = vmatpush.msra.mxu0 0.0
    %2155 = vmatpush.msra.mxu0 0.0
    %v2156 = vand.u32 %v1910, 4294901760
    %2157 = vmatpush.msra.mxu0 %v2156
    %v2158 = vand.u32 %v1908, 4294901760
    %2159 = vmatpush.msra.mxu0 %v2158
    %v2160 = vand.u32 %v1904, 4294901760
    %2161 = vmatpush.msra.mxu0 %v2160
    %v2162 = vand.u32 %v1902, 4294901760
    %2163 = vmatpush.msra.mxu0 %v2162
    %v2164 = vand.u32 %v1897, 4294901760
    %2165 = vmatpush.msra.mxu0 %v2164
    %v2166 = vand.u32 %v1893, 4294901760
    %2167 = vmatpush.msra.mxu0 %v2166
    %v2168 = vand.u32 %v1930, 4294901760
    %2169 = vmatmul.f32.gmra.mxu0 %v2168
    %v2170 = vpop.f32.mrf.mxu0
    %v2171 = vadd.f32 %v2140, %v2170
    %v2172 = vand.u32 %v1933, 4294901760
    %2173 = vmatmul.f32.gmra.mxu0 %v2172
    %v2174 = vpop.f32.mrf.mxu0
    %v2175 = vadd.f32 %v2144, %v2174
    %2176 = vdwg.mxu0
    %v2177 = vxor.u32 %v2171, 2147483648
    %v2178 = vxor.u32 %v2175, 2147483648
    %v2179 = vmul.f32 %v2177, 1.442695
    %v2180 = vpow.pop %v2179
    %v2181 = vmul.f32 %v2178, 1.442695
    %v2182 = vpow.pop %v2181
    %v2183 = vadd.f32 %v2180, 1.0
    %v2184 = vadd.f32 %v2182, 1.0
    %v2185 = vrcp.pop %v2183
    %v2186 = vmul.f32 %v2183, %v2185
    %v2187 = vsub.f32 1.0, %v2186
    %v2188 = vmul.f32 %v2185, %v2187
    %v2189 = vadd.f32 %v2185, %v2188
    %vm2190 = vweird.f32 %v2183
    %vm2191 = vweird.f32 %v2185
    %vm2192 = vmor %vm2190, %vm2191
    %v2193 = vsel %vm2192, %v2185, %v2189
    %v2194 = vand.u32 2147483647, %v2183
    %vm2195 = vcmp.eq.f32.partialorder %v2194, 8.507059e+37
    %v2196 = vand.u32 %v2183, 2147483648
    %v2197 = vor.u32 1.1754944e-38, %v2196
    %v2198 = vsel %vm2195, %v2197, %v2193
    %v2199 = vmul.f32 1.0, %v2198
    %v2200 = vrcp.pop %v2184
    %v2201 = vmul.f32 %v2184, %v2200
    %v2202 = vsub.f32 1.0, %v2201
    %v2203 = vmul.f32 %v2200, %v2202
    %v2204 = vadd.f32 %v2200, %v2203
    %vm2205 = vweird.f32 %v2184
    %vm2206 = vweird.f32 %v2200
    %vm2207 = vmor %vm2205, %vm2206
    %v2208 = vsel %vm2207, %v2200, %v2204
    %v2209 = vand.u32 2147483647, %v2184
    %vm2210 = vcmp.eq.f32.partialorder %v2209, 8.507059e+37
    %v2211 = vand.u32 %v2184, 2147483648
    %v2212 = vor.u32 1.1754944e-38, %v2211
    %v2213 = vsel %vm2210, %v2212, %v2208
    %v2214 = vmul.f32 1.0, %v2213
    %v2215 = vmul.f32 %v2171, %v2199
    %v2216 = vmul.f32 %v2175, %v2214
    %s2217 = scalar_lea.vmem [#allocation7], 32
    %v2218 = vld [vmem:[%s2217] sm:$0xff]
    %v2219 = vld [vmem:[%s2217 + $0x8] sm:$0xff]
    %v2220 = vld [vmem:[%s2217 + $0x10] sm:$0xff]
    %v2221 = vld [vmem:[%s2217 + $0x18] sm:$0xff]
    %s2222 = scalar_lea.vmem %s8, 1
    %v2223 = vld [vmem:[%s2222] sm:$0x1]
    %v2225 = vperm.slane %v2223, 0
    %v2228 = vsel %vm825, %v2215, 0
    %v2231 = vsel %vm825, %v2216, 0
    %2233 = vmatpush.msra.mxu0 0.0
    %2234 = vmatpush.msra.mxu0 0.0
    %2235 = vmatpush.msra.mxu0 0.0
    %2236 = vmatpush.msra.mxu0 0.0
    %2237 = vmatpush.msra.mxu0 0.0
    %2238 = vmatpush.msra.mxu0 0.0
    %2239 = vmatpush.msra.mxu0 0.0
    %2240 = vmatpush.msra.mxu0 0.0
    %2241 = vmatpush.msra.mxu0 0.0
    %2242 = vmatpush.msra.mxu0 0.0
    %2243 = vmatpush.msra.mxu0 0.0
    %2244 = vmatpush.msra.mxu0 0.0
    %v2245 = vand.u32 %v2221, 4294901760
    %2246 = vmatpush.msra.mxu0 %v2245
    %v2247 = vand.u32 %v2220, 4294901760
    %2248 = vmatpush.msra.mxu0 %v2247
    %v2249 = vand.u32 %v2219, 4294901760
    %2250 = vmatpush.msra.mxu0 %v2249
    %v2251 = vand.u32 %v2218, 4294901760
    %2252 = vmatpush.msra.mxu0 %v2251
    %v2253 = vand.u32 %v2228, 4294901760
    %v2254 = vsub.f32 %v2228, %v2253
    %v2255 = vand.u32 %v2254, 4294901760
    %v2256 = vsub.f32 %v2254, %v2255
    %v2257 = vand.u32 %v2256, 4294901760
    %2258 = vmatmul.f32.gmra.mxu0 %v2257
    %v2259 = vpop.f32.mrf.mxu0
    %v2260 = vadd.f32 %v2225, %v2259
    %v2261 = vand.u32 %v2231, 4294901760
    %v2262 = vsub.f32 %v2231, %v2261
    %v2263 = vand.u32 %v2262, 4294901760
    %v2264 = vsub.f32 %v2262, %v2263
    %v2265 = vand.u32 %v2264, 4294901760
    %2266 = vmatmul.f32.gmra.mxu0 %v2265
    %v2267 = vpop.f32.mrf.mxu0
    %v2268 = vadd.f32 %v2225, %v2267
    %2269 = vdwg.mxu0
    %2270 = vmatpush.msra.mxu0 0.0
    %2271 = vmatpush.msra.mxu0 0.0
    %2272 = vmatpush.msra.mxu0 0.0
    %2273 = vmatpush.msra.mxu0 0.0
    %2274 = vmatpush.msra.mxu0 0.0
    %2275 = vmatpush.msra.mxu0 0.0
    %2276 = vmatpush.msra.mxu0 0.0
    %2277 = vmatpush.msra.mxu0 0.0
    %2278 = vmatpush.msra.mxu0 0.0
    %2279 = vmatpush.msra.mxu0 0.0
    %2280 = vmatpush.msra.mxu0 0.0
    %2281 = vmatpush.msra.mxu0 0.0
    %v2282 = vand.u32 %v2221, 4294901760
    %v2283 = vsub.f32 %v2221, %v2282
    %v2284 = vand.u32 %v2283, 4294901760
    %v2285 = vsub.f32 %v2283, %v2284
    %v2286 = vand.u32 %v2285, 4294901760
    %2287 = vmatpush.msra.mxu0 %v2286
    %v2288 = vand.u32 %v2220, 4294901760
    %v2289 = vsub.f32 %v2220, %v2288
    %v2290 = vand.u32 %v2289, 4294901760
    %v2291 = vsub.f32 %v2289, %v2290
    %v2292 = vand.u32 %v2291, 4294901760
    %2293 = vmatpush.msra.mxu0 %v2292
    %v2294 = vand.u32 %v2219, 4294901760
    %v2295 = vsub.f32 %v2219, %v2294
    %v2296 = vand.u32 %v2295, 4294901760
    %v2297 = vsub.f32 %v2295, %v2296
    %v2298 = vand.u32 %v2297, 4294901760
    %2299 = vmatpush.msra.mxu0 %v2298
    %v2300 = vand.u32 %v2218, 4294901760
    %v2301 = vsub.f32 %v2218, %v2300
    %v2302 = vand.u32 %v2301, 4294901760
    %v2303 = vsub.f32 %v2301, %v2302
    %v2304 = vand.u32 %v2303, 4294901760
    %2305 = vmatpush.msra.mxu0 %v2304
    %v2306 = vand.u32 %v2228, 4294901760
    %2307 = vmatmul.f32.gmra.mxu0 %v2306
    %v2308 = vpop.f32.mrf.mxu0
    %v2309 = vadd.f32 %v2260, %v2308
    %v2310 = vand.u32 %v2231, 4294901760
    %2311 = vmatmul.f32.gmra.mxu0 %v2310
    %v2312 = vpop.f32.mrf.mxu0
    %v2313 = vadd.f32 %v2268, %v2312
    %2314 = vdwg.mxu0
    %2315 = vmatpush.msra.mxu0 0.0
    %2316 = vmatpush.msra.mxu0 0.0
    %2317 = vmatpush.msra.mxu0 0.0
    %2318 = vmatpush.msra.mxu0 0.0
    %2319 = vmatpush.msra.mxu0 0.0
    %2320 = vmatpush.msra.mxu0 0.0
    %2321 = vmatpush.msra.mxu0 0.0
    %2322 = vmatpush.msra.mxu0 0.0
    %2323 = vmatpush.msra.mxu0 0.0
    %2324 = vmatpush.msra.mxu0 0.0
    %2325 = vmatpush.msra.mxu0 0.0
    %2326 = vmatpush.msra.mxu0 0.0
    %v2327 = vand.u32 %v2221, 4294901760
    %v2328 = vsub.f32 %v2221, %v2327
    %2329 = vmatpush.msra.mxu0 %v2328
    %v2330 = vand.u32 %v2220, 4294901760
    %v2331 = vsub.f32 %v2220, %v2330
    %2332 = vmatpush.msra.mxu0 %v2331
    %v2333 = vand.u32 %v2219, 4294901760
    %v2334 = vsub.f32 %v2219, %v2333
    %2335 = vmatpush.msra.mxu0 %v2334
    %v2336 = vand.u32 %v2218, 4294901760
    %v2337 = vsub.f32 %v2218, %v2336
    %2338 = vmatpush.msra.mxu0 %v2337
    %v2339 = vand.u32 %v2228, 4294901760
    %v2340 = vsub.f32 %v2228, %v2339
    %2341 = vmatmul.f32.gmra.mxu0 %v2340
    %v2342 = vpop.f32.mrf.mxu0
    %v2343 = vadd.f32 %v2309, %v2342
    %v2344 = vand.u32 %v2231, 4294901760
    %v2345 = vsub.f32 %v2231, %v2344
    %2346 = vmatmul.f32.gmra.mxu0 %v2345
    %v2347 = vpop.f32.mrf.mxu0
    %v2348 = vadd.f32 %v2313, %v2347
    %2349 = vdwg.mxu0
    %2350 = vmatpush.msra.mxu0 0.0
    %2351 = vmatpush.msra.mxu0 0.0
    %2352 = vmatpush.msra.mxu0 0.0
    %2353 = vmatpush.msra.mxu0 0.0
    %2354 = vmatpush.msra.mxu0 0.0
    %2355 = vmatpush.msra.mxu0 0.0
    %2356 = vmatpush.msra.mxu0 0.0
    %2357 = vmatpush.msra.mxu0 0.0
    %2358 = vmatpush.msra.mxu0 0.0
    %2359 = vmatpush.msra.mxu0 0.0
    %2360 = vmatpush.msra.mxu0 0.0
    %2361 = vmatpush.msra.mxu0 0.0
    %v2362 = vand.u32 %v2221, 4294901760
    %2363 = vmatpush.msra.mxu0 %v2362
    %v2364 = vand.u32 %v2220, 4294901760
    %2365 = vmatpush.msra.mxu0 %v2364
    %v2366 = vand.u32 %v2219, 4294901760
    %2367 = vmatpush.msra.mxu0 %v2366
    %v2368 = vand.u32 %v2218, 4294901760
    %2369 = vmatpush.msra.mxu0 %v2368
    %v2370 = vand.u32 %v2228, 4294901760
    %v2371 = vsub.f32 %v2228, %v2370
    %v2372 = vand.u32 %v2371, 4294901760
    %2373 = vmatmul.f32.gmra.mxu0 %v2372
    %v2374 = vpop.f32.mrf.mxu0
    %v2375 = vadd.f32 %v2343, %v2374
    %v2376 = vand.u32 %v2231, 4294901760
    %v2377 = vsub.f32 %v2231, %v2376
    %v2378 = vand.u32 %v2377, 4294901760
    %2379 = vmatmul.f32.gmra.mxu0 %v2378
    %v2380 = vpop.f32.mrf.mxu0
    %v2381 = vadd.f32 %v2348, %v2380
    %2382 = vdwg.mxu0
    %2383 = vmatpush.msra.mxu0 0.0
    %2384 = vmatpush.msra.mxu0 0.0
    %2385 = vmatpush.msra.mxu0 0.0
    %2386 = vmatpush.msra.mxu0 0.0
    %2387 = vmatpush.msra.mxu0 0.0
    %2388 = vmatpush.msra.mxu0 0.0
    %2389 = vmatpush.msra.mxu0 0.0
    %2390 = vmatpush.msra.mxu0 0.0
    %2391 = vmatpush.msra.mxu0 0.0
    %2392 = vmatpush.msra.mxu0 0.0
    %2393 = vmatpush.msra.mxu0 0.0
    %2394 = vmatpush.msra.mxu0 0.0
    %v2395 = vand.u32 %v2221, 4294901760
    %v2396 = vsub.f32 %v2221, %v2395
    %v2397 = vand.u32 %v2396, 4294901760
    %2398 = vmatpush.msra.mxu0 %v2397
    %v2399 = vand.u32 %v2220, 4294901760
    %v2400 = vsub.f32 %v2220, %v2399
    %v2401 = vand.u32 %v2400, 4294901760
    %2402 = vmatpush.msra.mxu0 %v2401
    %v2403 = vand.u32 %v2219, 4294901760
    %v2404 = vsub.f32 %v2219, %v2403
    %v2405 = vand.u32 %v2404, 4294901760
    %2406 = vmatpush.msra.mxu0 %v2405
    %v2407 = vand.u32 %v2218, 4294901760
    %v2408 = vsub.f32 %v2218, %v2407
    %v2409 = vand.u32 %v2408, 4294901760
    %2410 = vmatpush.msra.mxu0 %v2409
    %v2411 = vand.u32 %v2228, 4294901760
    %2412 = vmatmul.f32.gmra.mxu0 %v2411
    %v2413 = vpop.f32.mrf.mxu0
    %v2414 = vadd.f32 %v2375, %v2413
    %v2415 = vand.u32 %v2231, 4294901760
    %2416 = vmatmul.f32.gmra.mxu0 %v2415
    %v2417 = vpop.f32.mrf.mxu0
    %v2418 = vadd.f32 %v2381, %v2417
    %2419 = vdwg.mxu0
    %2420 = vmatpush.msra.mxu0 0.0
    %2421 = vmatpush.msra.mxu0 0.0
    %2422 = vmatpush.msra.mxu0 0.0
    %2423 = vmatpush.msra.mxu0 0.0
    %2424 = vmatpush.msra.mxu0 0.0
    %2425 = vmatpush.msra.mxu0 0.0
    %2426 = vmatpush.msra.mxu0 0.0
    %2427 = vmatpush.msra.mxu0 0.0
    %2428 = vmatpush.msra.mxu0 0.0
    %2429 = vmatpush.msra.mxu0 0.0
    %2430 = vmatpush.msra.mxu0 0.0
    %2431 = vmatpush.msra.mxu0 0.0
    %v2432 = vand.u32 %v2221, 4294901760
    %2433 = vmatpush.msra.mxu0 %v2432
    %v2434 = vand.u32 %v2220, 4294901760
    %2435 = vmatpush.msra.mxu0 %v2434
    %v2436 = vand.u32 %v2219, 4294901760
    %2437 = vmatpush.msra.mxu0 %v2436
    %v2438 = vand.u32 %v2218, 4294901760
    %2439 = vmatpush.msra.mxu0 %v2438
    %v2440 = vand.u32 %v2228, 4294901760
    %2441 = vmatmul.f32.gmra.mxu0 %v2440
    %v2442 = vpop.f32.mrf.mxu0
    %v2443 = vadd.f32 %v2414, %v2442
    %v2444 = vand.u32 %v2231, 4294901760
    %2445 = vmatmul.f32.gmra.mxu0 %v2444
    %v2446 = vpop.f32.mrf.mxu0
    %v2447 = vadd.f32 %v2418, %v2446
    %2448 = vdwg.mxu0
    %s2449 = scalar_lea.vmem [#allocation9], 32
    %v2450 = vld [vmem:[%s2449] sm:$0xff]
    %v2451 = vld [vmem:[%s2449 + $0x8] sm:$0xff]
    %v2452 = vld [vmem:[%s2449 + $0x10] sm:$0xff]
    %v2453 = vld [vmem:[%s2449 + $0x18] sm:$0xff]
    %s2454 = scalar_lea.vmem %s10, 1
    %v2455 = vld [vmem:[%s2454] sm:$0x1]
    %v2457 = vperm.slane %v2455, 0
    %v2460 = vsel %vm825, %v2443, 0
    %v2463 = vsel %vm825, %v2447, 0
    %2465 = vmatpush.msra.mxu0 0.0
    %2466 = vmatpush.msra.mxu0 0.0
    %2467 = vmatpush.msra.mxu0 0.0
    %2468 = vmatpush.msra.mxu0 0.0
    %2469 = vmatpush.msra.mxu0 0.0
    %2470 = vmatpush.msra.mxu0 0.0
    %2471 = vmatpush.msra.mxu0 0.0
    %2472 = vmatpush.msra.mxu0 0.0
    %2473 = vmatpush.msra.mxu0 0.0
    %2474 = vmatpush.msra.mxu0 0.0
    %2475 = vmatpush.msra.mxu0 0.0
    %2476 = vmatpush.msra.mxu0 0.0
    %v2477 = vand.u32 %v2453, 4294901760
    %2478 = vmatpush.msra.mxu0 %v2477
    %v2479 = vand.u32 %v2452, 4294901760
    %2480 = vmatpush.msra.mxu0 %v2479
    %v2481 = vand.u32 %v2451, 4294901760
    %2482 = vmatpush.msra.mxu0 %v2481
    %v2483 = vand.u32 %v2450, 4294901760
    %2484 = vmatpush.msra.mxu0 %v2483
    %v2485 = vand.u32 %v2460, 4294901760
    %v2486 = vsub.f32 %v2460, %v2485
    %v2487 = vand.u32 %v2486, 4294901760
    %v2488 = vsub.f32 %v2486, %v2487
    %v2489 = vand.u32 %v2488, 4294901760
    %2490 = vmatmul.f32.gmra.mxu0 %v2489
    %v2491 = vpop.f32.mrf.mxu0
    %v2492 = vadd.f32 %v2457, %v2491
    %v2493 = vand.u32 %v2463, 4294901760
    %v2494 = vsub.f32 %v2463, %v2493
    %v2495 = vand.u32 %v2494, 4294901760
    %v2496 = vsub.f32 %v2494, %v2495
    %v2497 = vand.u32 %v2496, 4294901760
    %2498 = vmatmul.f32.gmra.mxu0 %v2497
    %v2499 = vpop.f32.mrf.mxu0
    %v2500 = vadd.f32 %v2457, %v2499
    %2501 = vdwg.mxu0
    %2502 = vmatpush.msra.mxu0 0.0
    %2503 = vmatpush.msra.mxu0 0.0
    %2504 = vmatpush.msra.mxu0 0.0
    %2505 = vmatpush.msra.mxu0 0.0
    %2506 = vmatpush.msra.mxu0 0.0
    %2507 = vmatpush.msra.mxu0 0.0
    %2508 = vmatpush.msra.mxu0 0.0
    %2509 = vmatpush.msra.mxu0 0.0
    %2510 = vmatpush.msra.mxu0 0.0
    %2511 = vmatpush.msra.mxu0 0.0
    %2512 = vmatpush.msra.mxu0 0.0
    %2513 = vmatpush.msra.mxu0 0.0
    %v2514 = vand.u32 %v2453, 4294901760
    %v2515 = vsub.f32 %v2453, %v2514
    %v2516 = vand.u32 %v2515, 4294901760
    %v2517 = vsub.f32 %v2515, %v2516
    %v2518 = vand.u32 %v2517, 4294901760
    %2519 = vmatpush.msra.mxu0 %v2518
    %v2520 = vand.u32 %v2452, 4294901760
    %v2521 = vsub.f32 %v2452, %v2520
    %v2522 = vand.u32 %v2521, 4294901760
    %v2523 = vsub.f32 %v2521, %v2522
    %v2524 = vand.u32 %v2523, 4294901760
    %2525 = vmatpush.msra.mxu0 %v2524
    %v2526 = vand.u32 %v2451, 4294901760
    %v2527 = vsub.f32 %v2451, %v2526
    %v2528 = vand.u32 %v2527, 4294901760
    %v2529 = vsub.f32 %v2527, %v2528
    %v2530 = vand.u32 %v2529, 4294901760
    %2531 = vmatpush.msra.mxu0 %v2530
    %v2532 = vand.u32 %v2450, 4294901760
    %v2533 = vsub.f32 %v2450, %v2532
    %v2534 = vand.u32 %v2533, 4294901760
    %v2535 = vsub.f32 %v2533, %v2534
    %v2536 = vand.u32 %v2535, 4294901760
    %2537 = vmatpush.msra.mxu0 %v2536
    %v2538 = vand.u32 %v2460, 4294901760
    %2539 = vmatmul.f32.gmra.mxu0 %v2538
    %v2540 = vpop.f32.mrf.mxu0
    %v2541 = vadd.f32 %v2492, %v2540
    %v2542 = vand.u32 %v2463, 4294901760
    %2543 = vmatmul.f32.gmra.mxu0 %v2542
    %v2544 = vpop.f32.mrf.mxu0
    %v2545 = vadd.f32 %v2500, %v2544
    %2546 = vdwg.mxu0
    %2547 = vmatpush.msra.mxu0 0.0
    %2548 = vmatpush.msra.mxu0 0.0
    %2549 = vmatpush.msra.mxu0 0.0
    %2550 = vmatpush.msra.mxu0 0.0
    %2551 = vmatpush.msra.mxu0 0.0
    %2552 = vmatpush.msra.mxu0 0.0
    %2553 = vmatpush.msra.mxu0 0.0
    %2554 = vmatpush.msra.mxu0 0.0
    %2555 = vmatpush.msra.mxu0 0.0
    %2556 = vmatpush.msra.mxu0 0.0
    %2557 = vmatpush.msra.mxu0 0.0
    %2558 = vmatpush.msra.mxu0 0.0
    %v2559 = vand.u32 %v2453, 4294901760
    %v2560 = vsub.f32 %v2453, %v2559
    %2561 = vmatpush.msra.mxu0 %v2560
    %v2562 = vand.u32 %v2452, 4294901760
    %v2563 = vsub.f32 %v2452, %v2562
    %2564 = vmatpush.msra.mxu0 %v2563
    %v2565 = vand.u32 %v2451, 4294901760
    %v2566 = vsub.f32 %v2451, %v2565
    %2567 = vmatpush.msra.mxu0 %v2566
    %v2568 = vand.u32 %v2450, 4294901760
    %v2569 = vsub.f32 %v2450, %v2568
    %2570 = vmatpush.msra.mxu0 %v2569
    %v2571 = vand.u32 %v2460, 4294901760
    %v2572 = vsub.f32 %v2460, %v2571
    %2573 = vmatmul.f32.gmra.mxu0 %v2572
    %v2574 = vpop.f32.mrf.mxu0
    %v2575 = vadd.f32 %v2541, %v2574
    %v2576 = vand.u32 %v2463, 4294901760
    %v2577 = vsub.f32 %v2463, %v2576
    %2578 = vmatmul.f32.gmra.mxu0 %v2577
    %v2579 = vpop.f32.mrf.mxu0
    %v2580 = vadd.f32 %v2545, %v2579
    %2581 = vdwg.mxu0
    %2582 = vmatpush.msra.mxu0 0.0
    %2583 = vmatpush.msra.mxu0 0.0
    %2584 = vmatpush.msra.mxu0 0.0
    %2585 = vmatpush.msra.mxu0 0.0
    %2586 = vmatpush.msra.mxu0 0.0
    %2587 = vmatpush.msra.mxu0 0.0
    %2588 = vmatpush.msra.mxu0 0.0
    %2589 = vmatpush.msra.mxu0 0.0
    %2590 = vmatpush.msra.mxu0 0.0
    %2591 = vmatpush.msra.mxu0 0.0
    %2592 = vmatpush.msra.mxu0 0.0
    %2593 = vmatpush.msra.mxu0 0.0
    %v2594 = vand.u32 %v2453, 4294901760
    %2595 = vmatpush.msra.mxu0 %v2594
    %v2596 = vand.u32 %v2452, 4294901760
    %2597 = vmatpush.msra.mxu0 %v2596
    %v2598 = vand.u32 %v2451, 4294901760
    %2599 = vmatpush.msra.mxu0 %v2598
    %v2600 = vand.u32 %v2450, 4294901760
    %2601 = vmatpush.msra.mxu0 %v2600
    %v2602 = vand.u32 %v2460, 4294901760
    %v2603 = vsub.f32 %v2460, %v2602
    %v2604 = vand.u32 %v2603, 4294901760
    %2605 = vmatmul.f32.gmra.mxu0 %v2604
    %v2606 = vpop.f32.mrf.mxu0
    %v2607 = vadd.f32 %v2575, %v2606
    %v2608 = vand.u32 %v2463, 4294901760
    %v2609 = vsub.f32 %v2463, %v2608
    %v2610 = vand.u32 %v2609, 4294901760
    %2611 = vmatmul.f32.gmra.mxu0 %v2610
    %v2612 = vpop.f32.mrf.mxu0
    %v2613 = vadd.f32 %v2580, %v2612
    %2614 = vdwg.mxu0
    %2615 = vmatpush.msra.mxu0 0.0
    %2616 = vmatpush.msra.mxu0 0.0
    %2617 = vmatpush.msra.mxu0 0.0
    %2618 = vmatpush.msra.mxu0 0.0
    %2619 = vmatpush.msra.mxu0 0.0
    %2620 = vmatpush.msra.mxu0 0.0
    %2621 = vmatpush.msra.mxu0 0.0
    %2622 = vmatpush.msra.mxu0 0.0
    %2623 = vmatpush.msra.mxu0 0.0
    %2624 = vmatpush.msra.mxu0 0.0
    %2625 = vmatpush.msra.mxu0 0.0
    %2626 = vmatpush.msra.mxu0 0.0
    %v2627 = vand.u32 %v2453, 4294901760
    %v2628 = vsub.f32 %v2453, %v2627
    %v2629 = vand.u32 %v2628, 4294901760
    %2630 = vmatpush.msra.mxu0 %v2629
    %v2631 = vand.u32 %v2452, 4294901760
    %v2632 = vsub.f32 %v2452, %v2631
    %v2633 = vand.u32 %v2632, 4294901760
    %2634 = vmatpush.msra.mxu0 %v2633
    %v2635 = vand.u32 %v2451, 4294901760
    %v2636 = vsub.f32 %v2451, %v2635
    %v2637 = vand.u32 %v2636, 4294901760
    %2638 = vmatpush.msra.mxu0 %v2637
    %v2639 = vand.u32 %v2450, 4294901760
    %v2640 = vsub.f32 %v2450, %v2639
    %v2641 = vand.u32 %v2640, 4294901760
    %2642 = vmatpush.msra.mxu0 %v2641
    %v2643 = vand.u32 %v2460, 4294901760
    %2644 = vmatmul.f32.gmra.mxu0 %v2643
    %v2645 = vpop.f32.mrf.mxu0
    %v2646 = vadd.f32 %v2607, %v2645
    %v2647 = vand.u32 %v2463, 4294901760
    %2648 = vmatmul.f32.gmra.mxu0 %v2647
    %v2649 = vpop.f32.mrf.mxu0
    %v2650 = vadd.f32 %v2613, %v2649
    %2651 = vdwg.mxu0
    %2652 = vmatpush.msra.mxu0 0.0
    %2653 = vmatpush.msra.mxu0 0.0
    %2654 = vmatpush.msra.mxu0 0.0
    %2655 = vmatpush.msra.mxu0 0.0
    %2656 = vmatpush.msra.mxu0 0.0
    %2657 = vmatpush.msra.mxu0 0.0
    %2658 = vmatpush.msra.mxu0 0.0
    %2659 = vmatpush.msra.mxu0 0.0
    %2660 = vmatpush.msra.mxu0 0.0
    %2661 = vmatpush.msra.mxu0 0.0
    %2662 = vmatpush.msra.mxu0 0.0
    %2663 = vmatpush.msra.mxu0 0.0
    %v2664 = vand.u32 %v2453, 4294901760
    %2665 = vmatpush.msra.mxu0 %v2664
    %v2666 = vand.u32 %v2452, 4294901760
    %2667 = vmatpush.msra.mxu0 %v2666
    %v2668 = vand.u32 %v2451, 4294901760
    %2669 = vmatpush.msra.mxu0 %v2668
    %v2670 = vand.u32 %v2450, 4294901760
    %2671 = vmatpush.msra.mxu0 %v2670
    %v2672 = vand.u32 %v2460, 4294901760
    %2673 = vmatmul.f32.gmra.mxu0 %v2672
    %v2674 = vpop.f32.mrf.mxu0
    %v2675 = vadd.f32 %v2646, %v2674
    %v2676 = vand.u32 %v2463, 4294901760
    %2677 = vmatmul.f32.gmra.mxu0 %v2676
    %v2678 = vpop.f32.mrf.mxu0
    %v2679 = vadd.f32 %v2650, %v2678
    %2680 = vdwg.mxu0
    %vm2681 = vcmp.gt.f32.partialorder %v2675, 20.0
    %vm2682 = vcmp.gt.f32.partialorder %v2679, 20.0
    %v2683 = vmin.f32 %v2675, 20.0
    %v2684 = vmin.f32 %v2679, 20.0
    %v2685 = vmul.f32 %v2683, 1.442695
    %v2686 = vpow.pop %v2685
    %v2687 = vmul.f32 %v2684, 1.442695
    %v2688 = vpow.pop %v2687
    %v2689 = vadd.f32 %v2686, 1.0
    %v2690 = vlog2.pop %v2689
    %v2691 = vmul.f32 %v2690, 0.6931472
    %v2692 = vmul.f32 -0.5, %v2686
    %v2693 = vadd.f32 %v2692, 1.0
    %v2694 = vmul.f32 %v2693, %v2686
    %v2695 = vand.u32 2147483647, %v2686
    %vm2696 = vcmp.lt.f32.partialorder %v2695, 0.0004427343
    %v2697 = vsel %vm2696, %v2694, %v2691
    %v2698 = vadd.f32 %v2688, 1.0
    %v2699 = vlog2.pop %v2698
    %v2700 = vmul.f32 %v2699, 0.6931472
    %v2701 = vmul.f32 -0.5, %v2688
    %v2702 = vadd.f32 %v2701, 1.0
    %v2703 = vmul.f32 %v2702, %v2688
    %v2704 = vand.u32 2147483647, %v2688
    %vm2705 = vcmp.lt.f32.partialorder %v2704, 0.0004427343
    %v2706 = vsel %vm2705, %v2703, %v2700
    %v2707 = vsel %vm2681, %v2675, %v2697
    %v2708 = vsel %vm2682, %v2679, %v2706
    %2711 = vrot.lane.b32.xlu0 %v2675, 112
    %v2712 = vpop.permute.xlu0 %2711
    %2713 = vrot.lane.b32.xlu0 %v2679, 112
    %v2714 = vpop.permute.xlu0 %2713
    %v2717 = vmul.f32 %v2675, %v2712
    %v2718 = vmul.f32 %v2679, %v2714
    %2721 = vrot.lane.b32.xlu0 %v2717, 96
    %v2722 = vpop.permute.xlu0 %2721
    %2723 = vrot.lane.b32.xlu0 %v2718, 96
    %v2724 = vpop.permute.xlu0 %2723
    %v2727 = vsel %vm148, %v2722, 0.0
    %2728 = vadd.xlane.f32.xlu0 %v2727
    %v2729 = vpop.xlane.xlu0 %2728
    %v2730 = vsel %vm148, %v2724, 0.0
    %2731 = vadd.xlane.f32.xlu0 %v2730
    %v2732 = vpop.xlane.xlu0 %2731
    %v2733 = vmul.f32 %v2443, %v2707
    %v2734 = vmul.f32 %v2447, %v2708
    %v2735 = vmul.f32 %v2733, %v2729
    %v2736 = vmul.f32 %v2734, %v2732
    %v2737 = vxor.u32 %v2735, 2147483648
    %v2738 = vxor.u32 %v2736, 2147483648
    %v2739 = vmul.f32 %v2737, 1.442695
    %v2740 = vpow.pop %v2739
    %v2741 = vmul.f32 %v2738, 1.442695
    %v2742 = vpow.pop %v2741
    %v2743 = vadd.f32 %v2740, 1.0
    %v2744 = vadd.f32 %v2742, 1.0
    %v2745 = vrcp.pop %v2743
    %v2746 = vmul.f32 %v2743, %v2745
    %v2747 = vsub.f32 1.0, %v2746
    %v2748 = vmul.f32 %v2745, %v2747
    %v2749 = vadd.f32 %v2745, %v2748
    %vm2750 = vweird.f32 %v2743
    %vm2751 = vweird.f32 %v2745
    %vm2752 = vmor %vm2750, %vm2751
    %v2753 = vsel %vm2752, %v2745, %v2749
    %v2754 = vand.u32 2147483647, %v2743
    %vm2755 = vcmp.eq.f32.partialorder %v2754, 8.507059e+37
    %v2756 = vand.u32 %v2743, 2147483648
    %v2757 = vor.u32 1.1754944e-38, %v2756
    %v2758 = vsel %vm2755, %v2757, %v2753
    %v2759 = vmul.f32 1.0, %v2758
    %v2760 = vrcp.pop %v2744
    %v2761 = vmul.f32 %v2744, %v2760
    %v2762 = vsub.f32 1.0, %v2761
    %v2763 = vmul.f32 %v2760, %v2762
    %v2764 = vadd.f32 %v2760, %v2763
    %vm2765 = vweird.f32 %v2744
    %vm2766 = vweird.f32 %v2760
    %vm2767 = vmor %vm2765, %vm2766
    %v2768 = vsel %vm2767, %v2760, %v2764
    %v2769 = vand.u32 2147483647, %v2744
    %vm2770 = vcmp.eq.f32.partialorder %v2769, 8.507059e+37
    %v2771 = vand.u32 %v2744, 2147483648
    %v2772 = vor.u32 1.1754944e-38, %v2771
    %v2773 = vsel %vm2770, %v2772, %v2768
    %v2774 = vmul.f32 1.0, %v2773
    %v2775 = vmul.f32 %v2735, %v2759
    %v2776 = vmul.f32 %v2736, %v2774
    %v2777 = vxor.u32 %v1893, 2147483648
    %v2778 = vxor.u32 %v1897, 2147483648
    %v2779 = vmul.f32 %v2777, 1.442695
    %v2780 = vpow.pop %v2779
    %v2781 = vmul.f32 %v2778, 1.442695
    %v2782 = vpow.pop %v2781
    %v2783 = vadd.f32 %v2780, 1.0
    %v2784 = vadd.f32 %v2782, 1.0
    %v2785 = vrcp.pop %v2783
    %v2786 = vmul.f32 %v2783, %v2785
    %v2787 = vsub.f32 1.0, %v2786
    %v2788 = vmul.f32 %v2785, %v2787
    %v2789 = vadd.f32 %v2785, %v2788
    %vm2790 = vweird.f32 %v2783
    %vm2791 = vweird.f32 %v2785
    %vm2792 = vmor %vm2790, %vm2791
    %v2793 = vsel %vm2792, %v2785, %v2789
    %v2794 = vand.u32 2147483647, %v2783
    %vm2795 = vcmp.eq.f32.partialorder %v2794, 8.507059e+37
    %v2796 = vand.u32 %v2783, 2147483648
    %v2797 = vor.u32 1.1754944e-38, %v2796
    %v2798 = vsel %vm2795, %v2797, %v2793
    %v2799 = vmul.f32 1.0, %v2798
    %v2800 = vrcp.pop %v2784
    %v2801 = vmul.f32 %v2784, %v2800
    %v2802 = vsub.f32 1.0, %v2801
    %v2803 = vmul.f32 %v2800, %v2802
    %v2804 = vadd.f32 %v2800, %v2803
    %vm2805 = vweird.f32 %v2784
    %vm2806 = vweird.f32 %v2800
    %vm2807 = vmor %vm2805, %vm2806
    %v2808 = vsel %vm2807, %v2800, %v2804
    %v2809 = vand.u32 2147483647, %v2784
    %vm2810 = vcmp.eq.f32.partialorder %v2809, 8.507059e+37
    %v2811 = vand.u32 %v2784, 2147483648
    %v2812 = vor.u32 1.1754944e-38, %v2811
    %v2813 = vsel %vm2810, %v2812, %v2808
    %v2814 = vmul.f32 1.0, %v2813
    %v2815 = vmul.f32 %v1893, %v2799
    %v2816 = vmul.f32 %v1897, %v2814
    %2819 = vrot.lane.b32.xlu0 %v2815, 32
    %v2820 = vpop.permute.xlu0 %2819
    %2821 = vrot.lane.b32.xlu0 %v2816, 32
    %v2822 = vpop.permute.xlu0 %2821
    %v2825 = vmul.f32 %v2775, %v2820
    %v2826 = vmul.f32 %v2776, %v2822
    %s2827 = scalar_lea.vmem %s11, 32
    %v2828 = vld [vmem:[%s2827] sm:$0xff]
    %v2829 = vld [vmem:[%s2827 + $0x8] sm:$0xff]
    %v2830 = vld [vmem:[%s2827 + $0x10] sm:$0xff]
    %v2831 = vld [vmem:[%s2827 + $0x18] sm:$0xff]
    %s2832 = scalar_lea.vmem %s12, 1
    %v2833 = vld [vmem:[%s2832] sm:$0x1]
    %v2835 = vperm.slane %v2833, 0
    %v2838 = vsel %vm825, %v2825, 0
    %v2841 = vsel %vm825, %v2826, 0
    %2843 = vmatpush.msra.mxu0 0.0
    %2844 = vmatpush.msra.mxu0 0.0
    %2845 = vmatpush.msra.mxu0 0.0
    %2846 = vmatpush.msra.mxu0 0.0
    %2847 = vmatpush.msra.mxu0 0.0
    %2848 = vmatpush.msra.mxu0 0.0
    %2849 = vmatpush.msra.mxu0 0.0
    %2850 = vmatpush.msra.mxu0 0.0
    %2851 = vmatpush.msra.mxu0 0.0
    %2852 = vmatpush.msra.mxu0 0.0
    %2853 = vmatpush.msra.mxu0 0.0
    %2854 = vmatpush.msra.mxu0 0.0
    %v2855 = vand.u32 %v2831, 4294901760
    %2856 = vmatpush.msra.mxu0 %v2855
    %v2857 = vand.u32 %v2830, 4294901760
    %2858 = vmatpush.msra.mxu0 %v2857
    %v2859 = vand.u32 %v2829, 4294901760
    %2860 = vmatpush.msra.mxu0 %v2859
    %v2861 = vand.u32 %v2828, 4294901760
    %2862 = vmatpush.msra.mxu0 %v2861
    %v2863 = vand.u32 %v2838, 4294901760
    %v2864 = vsub.f32 %v2838, %v2863
    %v2865 = vand.u32 %v2864, 4294901760
    %v2866 = vsub.f32 %v2864, %v2865
    %v2867 = vand.u32 %v2866, 4294901760
    %2868 = vmatmul.f32.gmra.mxu0 %v2867
    %v2869 = vpop.f32.mrf.mxu0
    %v2870 = vadd.f32 %v2835, %v2869
    %v2871 = vand.u32 %v2841, 4294901760
    %v2872 = vsub.f32 %v2841, %v2871
    %v2873 = vand.u32 %v2872, 4294901760
    %v2874 = vsub.f32 %v2872, %v2873
    %v2875 = vand.u32 %v2874, 4294901760
    %2876 = vmatmul.f32.gmra.mxu0 %v2875
    %v2877 = vpop.f32.mrf.mxu0
    %v2878 = vadd.f32 %v2835, %v2877
    %2879 = vdwg.mxu0
    %2880 = vmatpush.msra.mxu0 0.0
    %2881 = vmatpush.msra.mxu0 0.0
    %2882 = vmatpush.msra.mxu0 0.0
    %2883 = vmatpush.msra.mxu0 0.0
    %2884 = vmatpush.msra.mxu0 0.0
    %2885 = vmatpush.msra.mxu0 0.0
    %2886 = vmatpush.msra.mxu0 0.0
    %2887 = vmatpush.msra.mxu0 0.0
    %2888 = vmatpush.msra.mxu0 0.0
    %2889 = vmatpush.msra.mxu0 0.0
    %2890 = vmatpush.msra.mxu0 0.0
    %2891 = vmatpush.msra.mxu0 0.0
    %v2892 = vand.u32 %v2831, 4294901760
    %v2893 = vsub.f32 %v2831, %v2892
    %v2894 = vand.u32 %v2893, 4294901760
    %v2895 = vsub.f32 %v2893, %v2894
    %v2896 = vand.u32 %v2895, 4294901760
    %2897 = vmatpush.msra.mxu0 %v2896
    %v2898 = vand.u32 %v2830, 4294901760
    %v2899 = vsub.f32 %v2830, %v2898
    %v2900 = vand.u32 %v2899, 4294901760
    %v2901 = vsub.f32 %v2899, %v2900
    %v2902 = vand.u32 %v2901, 4294901760
    %2903 = vmatpush.msra.mxu0 %v2902
    %v2904 = vand.u32 %v2829, 4294901760
    %v2905 = vsub.f32 %v2829, %v2904
    %v2906 = vand.u32 %v2905, 4294901760
    %v2907 = vsub.f32 %v2905, %v2906
    %v2908 = vand.u32 %v2907, 4294901760
    %2909 = vmatpush.msra.mxu0 %v2908
    %v2910 = vand.u32 %v2828, 4294901760
    %v2911 = vsub.f32 %v2828, %v2910
    %v2912 = vand.u32 %v2911, 4294901760
    %v2913 = vsub.f32 %v2911, %v2912
    %v2914 = vand.u32 %v2913, 4294901760
    %2915 = vmatpush.msra.mxu0 %v2914
    %v2916 = vand.u32 %v2838, 4294901760
    %2917 = vmatmul.f32.gmra.mxu0 %v2916
    %v2918 = vpop.f32.mrf.mxu0
    %v2919 = vadd.f32 %v2870, %v2918
    %v2920 = vand.u32 %v2841, 4294901760
    %2921 = vmatmul.f32.gmra.mxu0 %v2920
    %v2922 = vpop.f32.mrf.mxu0
    %v2923 = vadd.f32 %v2878, %v2922
    %2924 = vdwg.mxu0
    %2925 = vmatpush.msra.mxu0 0.0
    %2926 = vmatpush.msra.mxu0 0.0
    %2927 = vmatpush.msra.mxu0 0.0
    %2928 = vmatpush.msra.mxu0 0.0
    %2929 = vmatpush.msra.mxu0 0.0
    %2930 = vmatpush.msra.mxu0 0.0
    %2931 = vmatpush.msra.mxu0 0.0
    %2932 = vmatpush.msra.mxu0 0.0
    %2933 = vmatpush.msra.mxu0 0.0
    %2934 = vmatpush.msra.mxu0 0.0
    %2935 = vmatpush.msra.mxu0 0.0
    %2936 = vmatpush.msra.mxu0 0.0
    %v2937 = vand.u32 %v2831, 4294901760
    %v2938 = vsub.f32 %v2831, %v2937
    %2939 = vmatpush.msra.mxu0 %v2938
    %v2940 = vand.u32 %v2830, 4294901760
    %v2941 = vsub.f32 %v2830, %v2940
    %2942 = vmatpush.msra.mxu0 %v2941
    %v2943 = vand.u32 %v2829, 4294901760
    %v2944 = vsub.f32 %v2829, %v2943
    %2945 = vmatpush.msra.mxu0 %v2944
    %v2946 = vand.u32 %v2828, 4294901760
    %v2947 = vsub.f32 %v2828, %v2946
    %2948 = vmatpush.msra.mxu0 %v2947
    %v2949 = vand.u32 %v2838, 4294901760
    %v2950 = vsub.f32 %v2838, %v2949
    %2951 = vmatmul.f32.gmra.mxu0 %v2950
    %v2952 = vpop.f32.mrf.mxu0
    %v2953 = vadd.f32 %v2919, %v2952
    %v2954 = vand.u32 %v2841, 4294901760
    %v2955 = vsub.f32 %v2841, %v2954
    %2956 = vmatmul.f32.gmra.mxu0 %v2955
    %v2957 = vpop.f32.mrf.mxu0
    %v2958 = vadd.f32 %v2923, %v2957
    %2959 = vdwg.mxu0
    %2960 = vmatpush.msra.mxu0 0.0
    %2961 = vmatpush.msra.mxu0 0.0
    %2962 = vmatpush.msra.mxu0 0.0
    %2963 = vmatpush.msra.mxu0 0.0
    %2964 = vmatpush.msra.mxu0 0.0
    %2965 = vmatpush.msra.mxu0 0.0
    %2966 = vmatpush.msra.mxu0 0.0
    %2967 = vmatpush.msra.mxu0 0.0
    %2968 = vmatpush.msra.mxu0 0.0
    %2969 = vmatpush.msra.mxu0 0.0
    %2970 = vmatpush.msra.mxu0 0.0
    %2971 = vmatpush.msra.mxu0 0.0
    %v2972 = vand.u32 %v2831, 4294901760
    %2973 = vmatpush.msra.mxu0 %v2972
    %v2974 = vand.u32 %v2830, 4294901760
    %2975 = vmatpush.msra.mxu0 %v2974
    %v2976 = vand.u32 %v2829, 4294901760
    %2977 = vmatpush.msra.mxu0 %v2976
    %v2978 = vand.u32 %v2828, 4294901760
    %2979 = vmatpush.msra.mxu0 %v2978
    %v2980 = vand.u32 %v2838, 4294901760
    %v2981 = vsub.f32 %v2838, %v2980
    %v2982 = vand.u32 %v2981, 4294901760
    %2983 = vmatmul.f32.gmra.mxu0 %v2982
    %v2984 = vpop.f32.mrf.mxu0
    %v2985 = vadd.f32 %v2953, %v2984
    %v2986 = vand.u32 %v2841, 4294901760
    %v2987 = vsub.f32 %v2841, %v2986
    %v2988 = vand.u32 %v2987, 4294901760
    %2989 = vmatmul.f32.gmra.mxu0 %v2988
    %v2990 = vpop.f32.mrf.mxu0
    %v2991 = vadd.f32 %v2958, %v2990
    %2992 = vdwg.mxu0
    %2993 = vmatpush.msra.mxu0 0.0
    %2994 = vmatpush.msra.mxu0 0.0
    %2995 = vmatpush.msra.mxu0 0.0
    %2996 = vmatpush.msra.mxu0 0.0
    %2997 = vmatpush.msra.mxu0 0.0
    %2998 = vmatpush.msra.mxu0 0.0
    %2999 = vmatpush.msra.mxu0 0.0
    %3000 = vmatpush.msra.mxu0 0.0
    %3001 = vmatpush.msra.mxu0 0.0
    %3002 = vmatpush.msra.mxu0 0.0
    %3003 = vmatpush.msra.mxu0 0.0
    %3004 = vmatpush.msra.mxu0 0.0
    %v3005 = vand.u32 %v2831, 4294901760
    %v3006 = vsub.f32 %v2831, %v3005
    %v3007 = vand.u32 %v3006, 4294901760
    %3008 = vmatpush.msra.mxu0 %v3007
    %v3009 = vand.u32 %v2830, 4294901760
    %v3010 = vsub.f32 %v2830, %v3009
    %v3011 = vand.u32 %v3010, 4294901760
    %3012 = vmatpush.msra.mxu0 %v3011
    %v3013 = vand.u32 %v2829, 4294901760
    %v3014 = vsub.f32 %v2829, %v3013
    %v3015 = vand.u32 %v3014, 4294901760
    %3016 = vmatpush.msra.mxu0 %v3015
    %v3017 = vand.u32 %v2828, 4294901760
    %v3018 = vsub.f32 %v2828, %v3017
    %v3019 = vand.u32 %v3018, 4294901760
    %3020 = vmatpush.msra.mxu0 %v3019
    %v3021 = vand.u32 %v2838, 4294901760
    %3022 = vmatmul.f32.gmra.mxu0 %v3021
    %v3023 = vpop.f32.mrf.mxu0
    %v3024 = vadd.f32 %v2985, %v3023
    %v3025 = vand.u32 %v2841, 4294901760
    %3026 = vmatmul.f32.gmra.mxu0 %v3025
    %v3027 = vpop.f32.mrf.mxu0
    %v3028 = vadd.f32 %v2991, %v3027
    %3029 = vdwg.mxu0
    %3030 = vmatpush.msra.mxu0 0.0
    %3031 = vmatpush.msra.mxu0 0.0
    %3032 = vmatpush.msra.mxu0 0.0
    %3033 = vmatpush.msra.mxu0 0.0
    %3034 = vmatpush.msra.mxu0 0.0
    %3035 = vmatpush.msra.mxu0 0.0
    %3036 = vmatpush.msra.mxu0 0.0
    %3037 = vmatpush.msra.mxu0 0.0
    %3038 = vmatpush.msra.mxu0 0.0
    %3039 = vmatpush.msra.mxu0 0.0
    %3040 = vmatpush.msra.mxu0 0.0
    %3041 = vmatpush.msra.mxu0 0.0
    %v3042 = vand.u32 %v2831, 4294901760
    %3043 = vmatpush.msra.mxu0 %v3042
    %v3044 = vand.u32 %v2830, 4294901760
    %3045 = vmatpush.msra.mxu0 %v3044
    %v3046 = vand.u32 %v2829, 4294901760
    %3047 = vmatpush.msra.mxu0 %v3046
    %v3048 = vand.u32 %v2828, 4294901760
    %3049 = vmatpush.msra.mxu0 %v3048
    %v3050 = vand.u32 %v2838, 4294901760
    %3051 = vmatmul.f32.gmra.mxu0 %v3050
    %v3052 = vpop.f32.mrf.mxu0
    %v3053 = vadd.f32 %v3024, %v3052
    %v3054 = vand.u32 %v2841, 4294901760
    %3055 = vmatmul.f32.gmra.mxu0 %v3054
    %v3056 = vpop.f32.mrf.mxu0
    %v3057 = vadd.f32 %v3028, %v3056
    %3058 = vdwg.mxu0
    %v3059 = vmul.f32 %v3053, %v3053
    %v3060 = vmul.f32 %v3057, %v3057
    %v3061 = vsel %vm148, %v3059, 0.0
    %3062 = vadd.xlane.f32.xlu0 %v3061
    %v3063 = vpop.xlane.xlu0 %3062
    %v3064 = vsel %vm148, %v3060, 0.0
    %3065 = vadd.xlane.f32.xlu0 %v3064
    %v3066 = vpop.xlane.xlu0 %3065
    %v3067 = vmul.f32 %v3063, %v161
    %v3068 = vmul.f32 %v3066, %v161
    %v3069 = vadd.f32 %v3067, 1e-05
    %v3070 = vadd.f32 %v3068, 1e-05
    %v3071 = vrsqrt.pop %v3069
    %v3072 = vmul.f32 %v3071, %v3069
    %v3073 = vmul.f32 %v3072, %v3071
    %v3074 = vmul.f32 0.5, %v3073
    %v3075 = vsub.f32 1.5, %v3074
    %v3076 = vmul.f32 %v3071, %v3075
    %vm3077 = vweird.f32 %v3069
    %vm3078 = vweird.f32 %v3071
    %vm3079 = vmor %vm3077, %vm3078
    %v3080 = vsel %vm3079, %v3071, %v3076
    %v3081 = vrsqrt.pop %v3070
    %v3082 = vmul.f32 %v3081, %v3070
    %v3083 = vmul.f32 %v3082, %v3081
    %v3084 = vmul.f32 0.5, %v3083
    %v3085 = vsub.f32 1.5, %v3084
    %v3086 = vmul.f32 %v3081, %v3085
    %vm3087 = vweird.f32 %v3070
    %vm3088 = vweird.f32 %v3081
    %vm3089 = vmor %vm3087, %vm3088
    %v3090 = vsel %vm3089, %v3081, %v3086
    %v3091 = vmul.f32 %v3053, %v3080
    %v3092 = vmul.f32 %v3057, %v3090
    %s3093 = scalar_lea.vmem %s2, 2
    %v3094 = vld [vmem:[%s3093] sm:$0x1]
    %v3096 = vperm.slane %v3094, 0
    %v3098 = vmul.f32 %v3091, %v3096
    %v3099 = vmul.f32 %v3092, %v3096
    %s3100 = scalar_lea.vmem [#allocation2], 32
    %v3101 = vld [vmem:[%s3100] sm:$0xff]
    %v3102 = vld [vmem:[%s3100 + $0x8] sm:$0xff]
    %s3103 = scalar_lea.vmem %s4, 2
    %v3104 = vld [vmem:[%s3103] sm:$0x1]
    %v3106 = vperm.slane %v3104, 0
    %v3109 = vsel %vm148, %v3098, 0
    %v3112 = vsel %vm148, %v3099, 0
    %3114 = vmatpush.msra.mxu0 0.0
    %3115 = vmatpush.msra.mxu0 0.0
    %3116 = vmatpush.msra.mxu0 0.0
    %3117 = vmatpush.msra.mxu0 0.0
    %3118 = vmatpush.msra.mxu0 0.0
    %3119 = vmatpush.msra.mxu0 0.0
    %3120 = vmatpush.msra.mxu0 0.0
    %3121 = vmatpush.msra.mxu0 0.0
    %3122 = vmatpush.msra.mxu0 0.0
    %3123 = vmatpush.msra.mxu0 0.0
    %3124 = vmatpush.msra.mxu0 0.0
    %3125 = vmatpush.msra.mxu0 0.0
    %3126 = vmatpush.msra.mxu0 0.0
    %3127 = vmatpush.msra.mxu0 0.0
    %v3128 = vand.u32 %v3102, 4294901760
    %3129 = vmatpush.msra.mxu0 %v3128
    %v3130 = vand.u32 %v3101, 4294901760
    %3131 = vmatpush.msra.mxu0 %v3130
    %v3132 = vand.u32 %v3109, 4294901760
    %v3133 = vsub.f32 %v3109, %v3132
    %v3134 = vand.u32 %v3133, 4294901760
    %v3135 = vsub.f32 %v3133, %v3134
    %v3136 = vand.u32 %v3135, 4294901760
    %3137 = vmatmul.f32.gmra.mxu0 %v3136
    %v3138 = vpop.f32.mrf.mxu0
    %v3139 = vadd.f32 %v3106, %v3138
    %v3140 = vand.u32 %v3112, 4294901760
    %v3141 = vsub.f32 %v3112, %v3140
    %v3142 = vand.u32 %v3141, 4294901760
    %v3143 = vsub.f32 %v3141, %v3142
    %v3144 = vand.u32 %v3143, 4294901760
    %3145 = vmatmul.f32.gmra.mxu0 %v3144
    %v3146 = vpop.f32.mrf.mxu0
    %v3147 = vadd.f32 %v3106, %v3146
    %3148 = vdwg.mxu0
    %3149 = vmatpush.msra.mxu0 0.0
    %3150 = vmatpush.msra.mxu0 0.0
    %3151 = vmatpush.msra.mxu0 0.0
    %3152 = vmatpush.msra.mxu0 0.0
    %3153 = vmatpush.msra.mxu0 0.0
    %3154 = vmatpush.msra.mxu0 0.0
    %3155 = vmatpush.msra.mxu0 0.0
    %3156 = vmatpush.msra.mxu0 0.0
    %3157 = vmatpush.msra.mxu0 0.0
    %3158 = vmatpush.msra.mxu0 0.0
    %3159 = vmatpush.msra.mxu0 0.0
    %3160 = vmatpush.msra.mxu0 0.0
    %3161 = vmatpush.msra.mxu0 0.0
    %3162 = vmatpush.msra.mxu0 0.0
    %v3163 = vand.u32 %v3102, 4294901760
    %v3164 = vsub.f32 %v3102, %v3163
    %v3165 = vand.u32 %v3164, 4294901760
    %v3166 = vsub.f32 %v3164, %v3165
    %v3167 = vand.u32 %v3166, 4294901760
    %3168 = vmatpush.msra.mxu0 %v3167
    %v3169 = vand.u32 %v3101, 4294901760
    %v3170 = vsub.f32 %v3101, %v3169
    %v3171 = vand.u32 %v3170, 4294901760
    %v3172 = vsub.f32 %v3170, %v3171
    %v3173 = vand.u32 %v3172, 4294901760
    %3174 = vmatpush.msra.mxu0 %v3173
    %v3175 = vand.u32 %v3109, 4294901760
    %3176 = vmatmul.f32.gmra.mxu0 %v3175
    %v3177 = vpop.f32.mrf.mxu0
    %v3178 = vadd.f32 %v3139, %v3177
    %v3179 = vand.u32 %v3112, 4294901760
    %3180 = vmatmul.f32.gmra.mxu0 %v3179
    %v3181 = vpop.f32.mrf.mxu0
    %v3182 = vadd.f32 %v3147, %v3181
    %3183 = vdwg.mxu0
    %3184 = vmatpush.msra.mxu0 0.0
    %3185 = vmatpush.msra.mxu0 0.0
    %3186 = vmatpush.msra.mxu0 0.0
    %3187 = vmatpush.msra.mxu0 0.0
    %3188 = vmatpush.msra.mxu0 0.0
    %3189 = vmatpush.msra.mxu0 0.0
    %3190 = vmatpush.msra.mxu0 0.0
    %3191 = vmatpush.msra.mxu0 0.0
    %3192 = vmatpush.msra.mxu0 0.0
    %3193 = vmatpush.msra.mxu0 0.0
    %3194 = vmatpush.msra.mxu0 0.0
    %3195 = vmatpush.msra.mxu0 0.0
    %3196 = vmatpush.msra.mxu0 0.0
    %3197 = vmatpush.msra.mxu0 0.0
    %v3198 = vand.u32 %v3102, 4294901760
    %v3199 = vsub.f32 %v3102, %v3198
    %3200 = vmatpush.msra.mxu0 %v3199
    %v3201 = vand.u32 %v3101, 4294901760
    %v3202 = vsub.f32 %v3101, %v3201
    %3203 = vmatpush.msra.mxu0 %v3202
    %v3204 = vand.u32 %v3109, 4294901760
    %v3205 = vsub.f32 %v3109, %v3204
    %3206 = vmatmul.f32.gmra.mxu0 %v3205
    %v3207 = vpop.f32.mrf.mxu0
    %v3208 = vadd.f32 %v3178, %v3207
    %v3209 = vand.u32 %v3112, 4294901760
    %v3210 = vsub.f32 %v3112, %v3209
    %3211 = vmatmul.f32.gmra.mxu0 %v3210
    %v3212 = vpop.f32.mrf.mxu0
    %v3213 = vadd.f32 %v3182, %v3212
    %3214 = vdwg.mxu0
    %3215 = vmatpush.msra.mxu0 0.0
    %3216 = vmatpush.msra.mxu0 0.0
    %3217 = vmatpush.msra.mxu0 0.0
    %3218 = vmatpush.msra.mxu0 0.0
    %3219 = vmatpush.msra.mxu0 0.0
    %3220 = vmatpush.msra.mxu0 0.0
    %3221 = vmatpush.msra.mxu0 0.0
    %3222 = vmatpush.msra.mxu0 0.0
    %3223 = vmatpush.msra.mxu0 0.0
    %3224 = vmatpush.msra.mxu0 0.0
    %3225 = vmatpush.msra.mxu0 0.0
    %3226 = vmatpush.msra.mxu0 0.0
    %3227 = vmatpush.msra.mxu0 0.0
    %3228 = vmatpush.msra.mxu0 0.0
    %v3229 = vand.u32 %v3102, 4294901760
    %3230 = vmatpush.msra.mxu0 %v3229
    %v3231 = vand.u32 %v3101, 4294901760
    %3232 = vmatpush.msra.mxu0 %v3231
    %v3233 = vand.u32 %v3109, 4294901760
    %v3234 = vsub.f32 %v3109, %v3233
    %v3235 = vand.u32 %v3234, 4294901760
    %3236 = vmatmul.f32.gmra.mxu0 %v3235
    %v3237 = vpop.f32.mrf.mxu0
    %v3238 = vadd.f32 %v3208, %v3237
    %v3239 = vand.u32 %v3112, 4294901760
    %v3240 = vsub.f32 %v3112, %v3239
    %v3241 = vand.u32 %v3240, 4294901760
    %3242 = vmatmul.f32.gmra.mxu0 %v3241
    %v3243 = vpop.f32.mrf.mxu0
    %v3244 = vadd.f32 %v3213, %v3243
    %3245 = vdwg.mxu0
    %3246 = vmatpush.msra.mxu0 0.0
    %3247 = vmatpush.msra.mxu0 0.0
    %3248 = vmatpush.msra.mxu0 0.0
    %3249 = vmatpush.msra.mxu0 0.0
    %3250 = vmatpush.msra.mxu0 0.0
    %3251 = vmatpush.msra.mxu0 0.0
    %3252 = vmatpush.msra.mxu0 0.0
    %3253 = vmatpush.msra.mxu0 0.0
    %3254 = vmatpush.msra.mxu0 0.0
    %3255 = vmatpush.msra.mxu0 0.0
    %3256 = vmatpush.msra.mxu0 0.0
    %3257 = vmatpush.msra.mxu0 0.0
    %3258 = vmatpush.msra.mxu0 0.0
    %3259 = vmatpush.msra.mxu0 0.0
    %v3260 = vand.u32 %v3102, 4294901760
    %v3261 = vsub.f32 %v3102, %v3260
    %v3262 = vand.u32 %v3261, 4294901760
    %3263 = vmatpush.msra.mxu0 %v3262
    %v3264 = vand.u32 %v3101, 4294901760
    %v3265 = vsub.f32 %v3101, %v3264
    %v3266 = vand.u32 %v3265, 4294901760
    %3267 = vmatpush.msra.mxu0 %v3266
    %v3268 = vand.u32 %v3109, 4294901760
    %3269 = vmatmul.f32.gmra.mxu0 %v3268
    %v3270 = vpop.f32.mrf.mxu0
    %v3271 = vadd.f32 %v3238, %v3270
    %v3272 = vand.u32 %v3112, 4294901760
    %3273 = vmatmul.f32.gmra.mxu0 %v3272
    %v3274 = vpop.f32.mrf.mxu0
    %v3275 = vadd.f32 %v3244, %v3274
    %3276 = vdwg.mxu0
    %3277 = vmatpush.msra.mxu0 0.0
    %3278 = vmatpush.msra.mxu0 0.0
    %3279 = vmatpush.msra.mxu0 0.0
    %3280 = vmatpush.msra.mxu0 0.0
    %3281 = vmatpush.msra.mxu0 0.0
    %3282 = vmatpush.msra.mxu0 0.0
    %3283 = vmatpush.msra.mxu0 0.0
    %3284 = vmatpush.msra.mxu0 0.0
    %3285 = vmatpush.msra.mxu0 0.0
    %3286 = vmatpush.msra.mxu0 0.0
    %3287 = vmatpush.msra.mxu0 0.0
    %3288 = vmatpush.msra.mxu0 0.0
    %3289 = vmatpush.msra.mxu0 0.0
    %3290 = vmatpush.msra.mxu0 0.0
    %v3291 = vand.u32 %v3102, 4294901760
    %3292 = vmatpush.msra.mxu0 %v3291
    %v3293 = vand.u32 %v3101, 4294901760
    %3294 = vmatpush.msra.mxu0 %v3293
    %v3295 = vand.u32 %v3109, 4294901760
    %3296 = vmatmul.f32.gmra.mxu0 %v3295
    %v3297 = vpop.f32.mrf.mxu0
    %v3298 = vadd.f32 %v3271, %v3297
    %v3299 = vand.u32 %v3112, 4294901760
    %3300 = vmatmul.f32.gmra.mxu0 %v3299
    %v3301 = vpop.f32.mrf.mxu0
    %v3302 = vadd.f32 %v3275, %v3301
    %3303 = vdwg.mxu0
    %3306 = vrot.lane.b32.xlu0 %v3298, 96
    %v3307 = vpop.permute.xlu0 %3306
    %3308 = vrot.lane.b32.xlu0 %v3302, 96
    %v3309 = vpop.permute.xlu0 %3308
    %3312 = vrot.lane.b32.xlu0 %v3298, 64
    %v3313 = vpop.permute.xlu0 %3312
    %3314 = vrot.lane.b32.xlu0 %v3302, 64
    %v3315 = vpop.permute.xlu0 %3314
    %s3318 = scalar_lea.vmem [#allocation4], 32
    %v3319 = vld [vmem:[%s3318] sm:$0xff]
    %v3320 = vld [vmem:[%s3318 + $0x8] sm:$0xff]
    %s3321 = scalar_lea.vmem [#allocation6], 32
    %v3322 = vld [vmem:[%s3321] sm:$0xff]
    %v3323 = vld [vmem:[%s3321 + $0x8] sm:$0xff]
    %3325 = vset.pattern.permute.xlu0 0
    %3326 = vperm.xlu0 %3325, %v3322
    %v3327 = vpop.permute.xlu0 %3326
    %3330 = vset.pattern.permute.xlu0 0
    %3331 = vperm.xlu0 %3330, %v3323
    %v3332 = vpop.permute.xlu0 %3331
    %v3335 = vsel %vm528, %v3319, 0
    %v3338 = vsel %vm528, %v3320, 0
    %3340 = vmatpush.msra.mxu0 0.0
    %3341 = vmatpush.msra.mxu0 0.0
    %3342 = vmatpush.msra.mxu0 0.0
    %3343 = vmatpush.msra.mxu0 0.0
    %3344 = vmatpush.msra.mxu0 0.0
    %3345 = vmatpush.msra.mxu0 0.0
    %3346 = vmatpush.msra.mxu0 0.0
    %3347 = vmatpush.msra.mxu0 0.0
    %3348 = vmatpush.msra.mxu0 0.0
    %3349 = vmatpush.msra.mxu0 0.0
    %v3350 = vand.u32 %v3315, 4294901760
    %3351 = vmatpush.msra.mxu0 %v3350
    %v3352 = vand.u32 %v3313, 4294901760
    %3353 = vmatpush.msra.mxu0 %v3352
    %v3354 = vand.u32 %v3309, 4294901760
    %3355 = vmatpush.msra.mxu0 %v3354
    %v3356 = vand.u32 %v3307, 4294901760
    %3357 = vmatpush.msra.mxu0 %v3356
    %v3358 = vand.u32 %v3302, 4294901760
    %3359 = vmatpush.msra.mxu0 %v3358
    %v3360 = vand.u32 %v3298, 4294901760
    %3361 = vmatpush.msra.mxu0 %v3360
    %v3362 = vand.u32 %v3335, 4294901760
    %v3363 = vsub.f32 %v3335, %v3362
    %v3364 = vand.u32 %v3363, 4294901760
    %v3365 = vsub.f32 %v3363, %v3364
    %v3366 = vand.u32 %v3365, 4294901760
    %3367 = vmatmul.f32.gmra.mxu0 %v3366
    %v3368 = vpop.f32.mrf.mxu0
    %v3369 = vadd.f32 %v3327, %v3368
    %v3370 = vand.u32 %v3338, 4294901760
    %v3371 = vsub.f32 %v3338, %v3370
    %v3372 = vand.u32 %v3371, 4294901760
    %v3373 = vsub.f32 %v3371, %v3372
    %v3374 = vand.u32 %v3373, 4294901760
    %3375 = vmatmul.f32.gmra.mxu0 %v3374
    %v3376 = vpop.f32.mrf.mxu0
    %v3377 = vadd.f32 %v3332, %v3376
    %3378 = vdwg.mxu0
    %3379 = vmatpush.msra.mxu0 0.0
    %3380 = vmatpush.msra.mxu0 0.0
    %3381 = vmatpush.msra.mxu0 0.0
    %3382 = vmatpush.msra.mxu0 0.0
    %3383 = vmatpush.msra.mxu0 0.0
    %3384 = vmatpush.msra.mxu0 0.0
    %3385 = vmatpush.msra.mxu0 0.0
    %3386 = vmatpush.msra.mxu0 0.0
    %3387 = vmatpush.msra.mxu0 0.0
    %3388 = vmatpush.msra.mxu0 0.0
    %v3389 = vand.u32 %v3315, 4294901760
    %v3390 = vsub.f32 %v3315, %v3389
    %v3391 = vand.u32 %v3390, 4294901760
    %v3392 = vsub.f32 %v3390, %v3391
    %v3393 = vand.u32 %v3392, 4294901760
    %3394 = vmatpush.msra.mxu0 %v3393
    %v3395 = vand.u32 %v3313, 4294901760
    %v3396 = vsub.f32 %v3313, %v3395
    %v3397 = vand.u32 %v3396, 4294901760
    %v3398 = vsub.f32 %v3396, %v3397
    %v3399 = vand.u32 %v3398, 4294901760
    %3400 = vmatpush.msra.mxu0 %v3399
    %v3401 = vand.u32 %v3309, 4294901760
    %v3402 = vsub.f32 %v3309, %v3401
    %v3403 = vand.u32 %v3402, 4294901760
    %v3404 = vsub.f32 %v3402, %v3403
    %v3405 = vand.u32 %v3404, 4294901760
    %3406 = vmatpush.msra.mxu0 %v3405
    %v3407 = vand.u32 %v3307, 4294901760
    %v3408 = vsub.f32 %v3307, %v3407
    %v3409 = vand.u32 %v3408, 4294901760
    %v3410 = vsub.f32 %v3408, %v3409
    %v3411 = vand.u32 %v3410, 4294901760
    %3412 = vmatpush.msra.mxu0 %v3411
    %v3413 = vand.u32 %v3302, 4294901760
    %v3414 = vsub.f32 %v3302, %v3413
    %v3415 = vand.u32 %v3414, 4294901760
    %v3416 = vsub.f32 %v3414, %v3415
    %v3417 = vand.u32 %v3416, 4294901760
    %3418 = vmatpush.msra.mxu0 %v3417
    %v3419 = vand.u32 %v3298, 4294901760
    %v3420 = vsub.f32 %v3298, %v3419
    %v3421 = vand.u32 %v3420, 4294901760
    %v3422 = vsub.f32 %v3420, %v3421
    %v3423 = vand.u32 %v3422, 4294901760
    %3424 = vmatpush.msra.mxu0 %v3423
    %v3425 = vand.u32 %v3335, 4294901760
    %3426 = vmatmul.f32.gmra.mxu0 %v3425
    %v3427 = vpop.f32.mrf.mxu0
    %v3428 = vadd.f32 %v3369, %v3427
    %v3429 = vand.u32 %v3338, 4294901760
    %3430 = vmatmul.f32.gmra.mxu0 %v3429
    %v3431 = vpop.f32.mrf.mxu0
    %v3432 = vadd.f32 %v3377, %v3431
    %3433 = vdwg.mxu0
    %3434 = vmatpush.msra.mxu0 0.0
    %3435 = vmatpush.msra.mxu0 0.0
    %3436 = vmatpush.msra.mxu0 0.0
    %3437 = vmatpush.msra.mxu0 0.0
    %3438 = vmatpush.msra.mxu0 0.0
    %3439 = vmatpush.msra.mxu0 0.0
    %3440 = vmatpush.msra.mxu0 0.0
    %3441 = vmatpush.msra.mxu0 0.0
    %3442 = vmatpush.msra.mxu0 0.0
    %3443 = vmatpush.msra.mxu0 0.0
    %v3444 = vand.u32 %v3315, 4294901760
    %v3445 = vsub.f32 %v3315, %v3444
    %3446 = vmatpush.msra.mxu0 %v3445
    %v3447 = vand.u32 %v3313, 4294901760
    %v3448 = vsub.f32 %v3313, %v3447
    %3449 = vmatpush.msra.mxu0 %v3448
    %v3450 = vand.u32 %v3309, 4294901760
    %v3451 = vsub.f32 %v3309, %v3450
    %3452 = vmatpush.msra.mxu0 %v3451
    %v3453 = vand.u32 %v3307, 4294901760
    %v3454 = vsub.f32 %v3307, %v3453
    %3455 = vmatpush.msra.mxu0 %v3454
    %v3456 = vand.u32 %v3302, 4294901760
    %v3457 = vsub.f32 %v3302, %v3456
    %3458 = vmatpush.msra.mxu0 %v3457
    %v3459 = vand.u32 %v3298, 4294901760
    %v3460 = vsub.f32 %v3298, %v3459
    %3461 = vmatpush.msra.mxu0 %v3460
    %v3462 = vand.u32 %v3335, 4294901760
    %v3463 = vsub.f32 %v3335, %v3462
    %3464 = vmatmul.f32.gmra.mxu0 %v3463
    %v3465 = vpop.f32.mrf.mxu0
    %v3466 = vadd.f32 %v3428, %v3465
    %v3467 = vand.u32 %v3338, 4294901760
    %v3468 = vsub.f32 %v3338, %v3467
    %3469 = vmatmul.f32.gmra.mxu0 %v3468
    %v3470 = vpop.f32.mrf.mxu0
    %v3471 = vadd.f32 %v3432, %v3470
    %3472 = vdwg.mxu0
    %3473 = vmatpush.msra.mxu0 0.0
    %3474 = vmatpush.msra.mxu0 0.0
    %3475 = vmatpush.msra.mxu0 0.0
    %3476 = vmatpush.msra.mxu0 0.0
    %3477 = vmatpush.msra.mxu0 0.0
    %3478 = vmatpush.msra.mxu0 0.0
    %3479 = vmatpush.msra.mxu0 0.0
    %3480 = vmatpush.msra.mxu0 0.0
    %3481 = vmatpush.msra.mxu0 0.0
    %3482 = vmatpush.msra.mxu0 0.0
    %v3483 = vand.u32 %v3315, 4294901760
    %3484 = vmatpush.msra.mxu0 %v3483
    %v3485 = vand.u32 %v3313, 4294901760
    %3486 = vmatpush.msra.mxu0 %v3485
    %v3487 = vand.u32 %v3309, 4294901760
    %3488 = vmatpush.msra.mxu0 %v3487
    %v3489 = vand.u32 %v3307, 4294901760
    %3490 = vmatpush.msra.mxu0 %v3489
    %v3491 = vand.u32 %v3302, 4294901760
    %3492 = vmatpush.msra.mxu0 %v3491
    %v3493 = vand.u32 %v3298, 4294901760
    %3494 = vmatpush.msra.mxu0 %v3493
    %v3495 = vand.u32 %v3335, 4294901760
    %v3496 = vsub.f32 %v3335, %v3495
    %v3497 = vand.u32 %v3496, 4294901760
    %3498 = vmatmul.f32.gmra.mxu0 %v3497
    %v3499 = vpop.f32.mrf.mxu0
    %v3500 = vadd.f32 %v3466, %v3499
    %v3501 = vand.u32 %v3338, 4294901760
    %v3502 = vsub.f32 %v3338, %v3501
    %v3503 = vand.u32 %v3502, 4294901760
    %3504 = vmatmul.f32.gmra.mxu0 %v3503
    %v3505 = vpop.f32.mrf.mxu0
    %v3506 = vadd.f32 %v3471, %v3505
    %3507 = vdwg.mxu0
    %3508 = vmatpush.msra.mxu0 0.0
    %3509 = vmatpush.msra.mxu0 0.0
    %3510 = vmatpush.msra.mxu0 0.0
    %3511 = vmatpush.msra.mxu0 0.0
    %3512 = vmatpush.msra.mxu0 0.0
    %3513 = vmatpush.msra.mxu0 0.0
    %3514 = vmatpush.msra.mxu0 0.0
    %3515 = vmatpush.msra.mxu0 0.0
    %3516 = vmatpush.msra.mxu0 0.0
    %3517 = vmatpush.msra.mxu0 0.0
    %v3518 = vand.u32 %v3315, 4294901760
    %v3519 = vsub.f32 %v3315, %v3518
    %v3520 = vand.u32 %v3519, 4294901760
    %3521 = vmatpush.msra.mxu0 %v3520
    %v3522 = vand.u32 %v3313, 4294901760
    %v3523 = vsub.f32 %v3313, %v3522
    %v3524 = vand.u32 %v3523, 4294901760
    %3525 = vmatpush.msra.mxu0 %v3524
    %v3526 = vand.u32 %v3309, 4294901760
    %v3527 = vsub.f32 %v3309, %v3526
    %v3528 = vand.u32 %v3527, 4294901760
    %3529 = vmatpush.msra.mxu0 %v3528
    %v3530 = vand.u32 %v3307, 4294901760
    %v3531 = vsub.f32 %v3307, %v3530
    %v3532 = vand.u32 %v3531, 4294901760
    %3533 = vmatpush.msra.mxu0 %v3532
    %v3534 = vand.u32 %v3302, 4294901760
    %v3535 = vsub.f32 %v3302, %v3534
    %v3536 = vand.u32 %v3535, 4294901760
    %3537 = vmatpush.msra.mxu0 %v3536
    %v3538 = vand.u32 %v3298, 4294901760
    %v3539 = vsub.f32 %v3298, %v3538
    %v3540 = vand.u32 %v3539, 4294901760
    %3541 = vmatpush.msra.mxu0 %v3540
    %v3542 = vand.u32 %v3335, 4294901760
    %3543 = vmatmul.f32.gmra.mxu0 %v3542
    %v3544 = vpop.f32.mrf.mxu0
    %v3545 = vadd.f32 %v3500, %v3544
    %v3546 = vand.u32 %v3338, 4294901760
    %3547 = vmatmul.f32.gmra.mxu0 %v3546
    %v3548 = vpop.f32.mrf.mxu0
    %v3549 = vadd.f32 %v3506, %v3548
    %3550 = vdwg.mxu0
    %3551 = vmatpush.msra.mxu0 0.0
    %3552 = vmatpush.msra.mxu0 0.0
    %3553 = vmatpush.msra.mxu0 0.0
    %3554 = vmatpush.msra.mxu0 0.0
    %3555 = vmatpush.msra.mxu0 0.0
    %3556 = vmatpush.msra.mxu0 0.0
    %3557 = vmatpush.msra.mxu0 0.0
    %3558 = vmatpush.msra.mxu0 0.0
    %3559 = vmatpush.msra.mxu0 0.0
    %3560 = vmatpush.msra.mxu0 0.0
    %v3561 = vand.u32 %v3315, 4294901760
    %3562 = vmatpush.msra.mxu0 %v3561
    %v3563 = vand.u32 %v3313, 4294901760
    %3564 = vmatpush.msra.mxu0 %v3563
    %v3565 = vand.u32 %v3309, 4294901760
    %3566 = vmatpush.msra.mxu0 %v3565
    %v3567 = vand.u32 %v3307, 4294901760
    %3568 = vmatpush.msra.mxu0 %v3567
    %v3569 = vand.u32 %v3302, 4294901760
    %3570 = vmatpush.msra.mxu0 %v3569
    %v3571 = vand.u32 %v3298, 4294901760
    %3572 = vmatpush.msra.mxu0 %v3571
    %v3573 = vand.u32 %v3335, 4294901760
    %3574 = vmatmul.f32.gmra.mxu0 %v3573
    %v3575 = vpop.f32.mrf.mxu0
    %v3576 = vadd.f32 %v3545, %v3575
    %v3577 = vand.u32 %v3338, 4294901760
    %3578 = vmatmul.f32.gmra.mxu0 %v3577
    %v3579 = vpop.f32.mrf.mxu0
    %v3580 = vadd.f32 %v3549, %v3579
    %3581 = vdwg.mxu0
    %v3582 = vxor.u32 %v3576, 2147483648
    %v3583 = vxor.u32 %v3580, 2147483648
    %v3584 = vmul.f32 %v3582, 1.442695
    %v3585 = vpow.pop %v3584
    %v3586 = vmul.f32 %v3583, 1.442695
    %v3587 = vpow.pop %v3586
    %v3588 = vadd.f32 %v3585, 1.0
    %v3589 = vadd.f32 %v3587, 1.0
    %v3590 = vrcp.pop %v3588
    %v3591 = vmul.f32 %v3588, %v3590
    %v3592 = vsub.f32 1.0, %v3591
    %v3593 = vmul.f32 %v3590, %v3592
    %v3594 = vadd.f32 %v3590, %v3593
    %vm3595 = vweird.f32 %v3588
    %vm3596 = vweird.f32 %v3590
    %vm3597 = vmor %vm3595, %vm3596
    %v3598 = vsel %vm3597, %v3590, %v3594
    %v3599 = vand.u32 2147483647, %v3588
    %vm3600 = vcmp.eq.f32.partialorder %v3599, 8.507059e+37
    %v3601 = vand.u32 %v3588, 2147483648
    %v3602 = vor.u32 1.1754944e-38, %v3601
    %v3603 = vsel %vm3600, %v3602, %v3598
    %v3604 = vmul.f32 1.0, %v3603
    %v3605 = vrcp.pop %v3589
    %v3606 = vmul.f32 %v3589, %v3605
    %v3607 = vsub.f32 1.0, %v3606
    %v3608 = vmul.f32 %v3605, %v3607
    %v3609 = vadd.f32 %v3605, %v3608
    %vm3610 = vweird.f32 %v3589
    %vm3611 = vweird.f32 %v3605
    %vm3612 = vmor %vm3610, %vm3611
    %v3613 = vsel %vm3612, %v3605, %v3609
    %v3614 = vand.u32 2147483647, %v3589
    %vm3615 = vcmp.eq.f32.partialorder %v3614, 8.507059e+37
    %v3616 = vand.u32 %v3589, 2147483648
    %v3617 = vor.u32 1.1754944e-38, %v3616
    %v3618 = vsel %vm3615, %v3617, %v3613
    %v3619 = vmul.f32 1.0, %v3618
    %v3620 = vmul.f32 %v3576, %v3604
    %v3621 = vmul.f32 %v3580, %v3619
    %s3622 = scalar_lea.vmem [#allocation7], 64
    %v3623 = vld [vmem:[%s3622] sm:$0xff]
    %v3624 = vld [vmem:[%s3622 + $0x8] sm:$0xff]
    %v3625 = vld [vmem:[%s3622 + $0x10] sm:$0xff]
    %v3626 = vld [vmem:[%s3622 + $0x18] sm:$0xff]
    %s3627 = scalar_lea.vmem %s8, 2
    %v3628 = vld [vmem:[%s3627] sm:$0x1]
    %v3630 = vperm.slane %v3628, 0
    %v3633 = vsel %vm825, %v3620, 0
    %v3636 = vsel %vm825, %v3621, 0
    %3638 = vmatpush.msra.mxu0 0.0
    %3639 = vmatpush.msra.mxu0 0.0
    %3640 = vmatpush.msra.mxu0 0.0
    %3641 = vmatpush.msra.mxu0 0.0
    %3642 = vmatpush.msra.mxu0 0.0
    %3643 = vmatpush.msra.mxu0 0.0
    %3644 = vmatpush.msra.mxu0 0.0
    %3645 = vmatpush.msra.mxu0 0.0
    %3646 = vmatpush.msra.mxu0 0.0
    %3647 = vmatpush.msra.mxu0 0.0
    %3648 = vmatpush.msra.mxu0 0.0
    %3649 = vmatpush.msra.mxu0 0.0
    %v3650 = vand.u32 %v3626, 4294901760
    %3651 = vmatpush.msra.mxu0 %v3650
    %v3652 = vand.u32 %v3625, 4294901760
    %3653 = vmatpush.msra.mxu0 %v3652
    %v3654 = vand.u32 %v3624, 4294901760
    %3655 = vmatpush.msra.mxu0 %v3654
    %v3656 = vand.u32 %v3623, 4294901760
    %3657 = vmatpush.msra.mxu0 %v3656
    %v3658 = vand.u32 %v3633, 4294901760
    %v3659 = vsub.f32 %v3633, %v3658
    %v3660 = vand.u32 %v3659, 4294901760
    %v3661 = vsub.f32 %v3659, %v3660
    %v3662 = vand.u32 %v3661, 4294901760
    %3663 = vmatmul.f32.gmra.mxu0 %v3662
    %v3664 = vpop.f32.mrf.mxu0
    %v3665 = vadd.f32 %v3630, %v3664
    %v3666 = vand.u32 %v3636, 4294901760
    %v3667 = vsub.f32 %v3636, %v3666
    %v3668 = vand.u32 %v3667, 4294901760
    %v3669 = vsub.f32 %v3667, %v3668
    %v3670 = vand.u32 %v3669, 4294901760
    %3671 = vmatmul.f32.gmra.mxu0 %v3670
    %v3672 = vpop.f32.mrf.mxu0
    %v3673 = vadd.f32 %v3630, %v3672
    %3674 = vdwg.mxu0
    %3675 = vmatpush.msra.mxu0 0.0
    %3676 = vmatpush.msra.mxu0 0.0
    %3677 = vmatpush.msra.mxu0 0.0
    %3678 = vmatpush.msra.mxu0 0.0
    %3679 = vmatpush.msra.mxu0 0.0
    %3680 = vmatpush.msra.mxu0 0.0
    %3681 = vmatpush.msra.mxu0 0.0
    %3682 = vmatpush.msra.mxu0 0.0
    %3683 = vmatpush.msra.mxu0 0.0
    %3684 = vmatpush.msra.mxu0 0.0
    %3685 = vmatpush.msra.mxu0 0.0
    %3686 = vmatpush.msra.mxu0 0.0
    %v3687 = vand.u32 %v3626, 4294901760
    %v3688 = vsub.f32 %v3626, %v3687
    %v3689 = vand.u32 %v3688, 4294901760
    %v3690 = vsub.f32 %v3688, %v3689
    %v3691 = vand.u32 %v3690, 4294901760
    %3692 = vmatpush.msra.mxu0 %v3691
    %v3693 = vand.u32 %v3625, 4294901760
    %v3694 = vsub.f32 %v3625, %v3693
    %v3695 = vand.u32 %v3694, 4294901760
    %v3696 = vsub.f32 %v3694, %v3695
    %v3697 = vand.u32 %v3696, 4294901760
    %3698 = vmatpush.msra.mxu0 %v3697
    %v3699 = vand.u32 %v3624, 4294901760
    %v3700 = vsub.f32 %v3624, %v3699
    %v3701 = vand.u32 %v3700, 4294901760
    %v3702 = vsub.f32 %v3700, %v3701
    %v3703 = vand.u32 %v3702, 4294901760
    %3704 = vmatpush.msra.mxu0 %v3703
    %v3705 = vand.u32 %v3623, 4294901760
    %v3706 = vsub.f32 %v3623, %v3705
    %v3707 = vand.u32 %v3706, 4294901760
    %v3708 = vsub.f32 %v3706, %v3707
    %v3709 = vand.u32 %v3708, 4294901760
    %3710 = vmatpush.msra.mxu0 %v3709
    %v3711 = vand.u32 %v3633, 4294901760
    %3712 = vmatmul.f32.gmra.mxu0 %v3711
    %v3713 = vpop.f32.mrf.mxu0
    %v3714 = vadd.f32 %v3665, %v3713
    %v3715 = vand.u32 %v3636, 4294901760
    %3716 = vmatmul.f32.gmra.mxu0 %v3715
    %v3717 = vpop.f32.mrf.mxu0
    %v3718 = vadd.f32 %v3673, %v3717
    %3719 = vdwg.mxu0
    %3720 = vmatpush.msra.mxu0 0.0
    %3721 = vmatpush.msra.mxu0 0.0
    %3722 = vmatpush.msra.mxu0 0.0
    %3723 = vmatpush.msra.mxu0 0.0
    %3724 = vmatpush.msra.mxu0 0.0
    %3725 = vmatpush.msra.mxu0 0.0
    %3726 = vmatpush.msra.mxu0 0.0
    %3727 = vmatpush.msra.mxu0 0.0
    %3728 = vmatpush.msra.mxu0 0.0
    %3729 = vmatpush.msra.mxu0 0.0
    %3730 = vmatpush.msra.mxu0 0.0
    %3731 = vmatpush.msra.mxu0 0.0
    %v3732 = vand.u32 %v3626, 4294901760
    %v3733 = vsub.f32 %v3626, %v3732
    %3734 = vmatpush.msra.mxu0 %v3733
    %v3735 = vand.u32 %v3625, 4294901760
    %v3736 = vsub.f32 %v3625, %v3735
    %3737 = vmatpush.msra.mxu0 %v3736
    %v3738 = vand.u32 %v3624, 4294901760
    %v3739 = vsub.f32 %v3624, %v3738
    %3740 = vmatpush.msra.mxu0 %v3739
    %v3741 = vand.u32 %v3623, 4294901760
    %v3742 = vsub.f32 %v3623, %v3741
    %3743 = vmatpush.msra.mxu0 %v3742
    %v3744 = vand.u32 %v3633, 4294901760
    %v3745 = vsub.f32 %v3633, %v3744
    %3746 = vmatmul.f32.gmra.mxu0 %v3745
    %v3747 = vpop.f32.mrf.mxu0
    %v3748 = vadd.f32 %v3714, %v3747
    %v3749 = vand.u32 %v3636, 4294901760
    %v3750 = vsub.f32 %v3636, %v3749
    %3751 = vmatmul.f32.gmra.mxu0 %v3750
    %v3752 = vpop.f32.mrf.mxu0
    %v3753 = vadd.f32 %v3718, %v3752
    %3754 = vdwg.mxu0
    %3755 = vmatpush.msra.mxu0 0.0
    %3756 = vmatpush.msra.mxu0 0.0
    %3757 = vmatpush.msra.mxu0 0.0
    %3758 = vmatpush.msra.mxu0 0.0
    %3759 = vmatpush.msra.mxu0 0.0
    %3760 = vmatpush.msra.mxu0 0.0
    %3761 = vmatpush.msra.mxu0 0.0
    %3762 = vmatpush.msra.mxu0 0.0
    %3763 = vmatpush.msra.mxu0 0.0
    %3764 = vmatpush.msra.mxu0 0.0
    %3765 = vmatpush.msra.mxu0 0.0
    %3766 = vmatpush.msra.mxu0 0.0
    %v3767 = vand.u32 %v3626, 4294901760
    %3768 = vmatpush.msra.mxu0 %v3767
    %v3769 = vand.u32 %v3625, 4294901760
    %3770 = vmatpush.msra.mxu0 %v3769
    %v3771 = vand.u32 %v3624, 4294901760
    %3772 = vmatpush.msra.mxu0 %v3771
    %v3773 = vand.u32 %v3623, 4294901760
    %3774 = vmatpush.msra.mxu0 %v3773
    %v3775 = vand.u32 %v3633, 4294901760
    %v3776 = vsub.f32 %v3633, %v3775
    %v3777 = vand.u32 %v3776, 4294901760
    %3778 = vmatmul.f32.gmra.mxu0 %v3777
    %v3779 = vpop.f32.mrf.mxu0
    %v3780 = vadd.f32 %v3748, %v3779
    %v3781 = vand.u32 %v3636, 4294901760
    %v3782 = vsub.f32 %v3636, %v3781
    %v3783 = vand.u32 %v3782, 4294901760
    %3784 = vmatmul.f32.gmra.mxu0 %v3783
    %v3785 = vpop.f32.mrf.mxu0
    %v3786 = vadd.f32 %v3753, %v3785
    %3787 = vdwg.mxu0
    %3788 = vmatpush.msra.mxu0 0.0
    %3789 = vmatpush.msra.mxu0 0.0
    %3790 = vmatpush.msra.mxu0 0.0
    %3791 = vmatpush.msra.mxu0 0.0
    %3792 = vmatpush.msra.mxu0 0.0
    %3793 = vmatpush.msra.mxu0 0.0
    %3794 = vmatpush.msra.mxu0 0.0
    %3795 = vmatpush.msra.mxu0 0.0
    %3796 = vmatpush.msra.mxu0 0.0
    %3797 = vmatpush.msra.mxu0 0.0
    %3798 = vmatpush.msra.mxu0 0.0
    %3799 = vmatpush.msra.mxu0 0.0
    %v3800 = vand.u32 %v3626, 4294901760
    %v3801 = vsub.f32 %v3626, %v3800
    %v3802 = vand.u32 %v3801, 4294901760
    %3803 = vmatpush.msra.mxu0 %v3802
    %v3804 = vand.u32 %v3625, 4294901760
    %v3805 = vsub.f32 %v3625, %v3804
    %v3806 = vand.u32 %v3805, 4294901760
    %3807 = vmatpush.msra.mxu0 %v3806
    %v3808 = vand.u32 %v3624, 4294901760
    %v3809 = vsub.f32 %v3624, %v3808
    %v3810 = vand.u32 %v3809, 4294901760
    %3811 = vmatpush.msra.mxu0 %v3810
    %v3812 = vand.u32 %v3623, 4294901760
    %v3813 = vsub.f32 %v3623, %v3812
    %v3814 = vand.u32 %v3813, 4294901760
    %3815 = vmatpush.msra.mxu0 %v3814
    %v3816 = vand.u32 %v3633, 4294901760
    %3817 = vmatmul.f32.gmra.mxu0 %v3816
    %v3818 = vpop.f32.mrf.mxu0
    %v3819 = vadd.f32 %v3780, %v3818
    %v3820 = vand.u32 %v3636, 4294901760
    %3821 = vmatmul.f32.gmra.mxu0 %v3820
    %v3822 = vpop.f32.mrf.mxu0
    %v3823 = vadd.f32 %v3786, %v3822
    %3824 = vdwg.mxu0
    %3825 = vmatpush.msra.mxu0 0.0
    %3826 = vmatpush.msra.mxu0 0.0
    %3827 = vmatpush.msra.mxu0 0.0
    %3828 = vmatpush.msra.mxu0 0.0
    %3829 = vmatpush.msra.mxu0 0.0
    %3830 = vmatpush.msra.mxu0 0.0
    %3831 = vmatpush.msra.mxu0 0.0
    %3832 = vmatpush.msra.mxu0 0.0
    %3833 = vmatpush.msra.mxu0 0.0
    %3834 = vmatpush.msra.mxu0 0.0
    %3835 = vmatpush.msra.mxu0 0.0
    %3836 = vmatpush.msra.mxu0 0.0
    %v3837 = vand.u32 %v3626, 4294901760
    %3838 = vmatpush.msra.mxu0 %v3837
    %v3839 = vand.u32 %v3625, 4294901760
    %3840 = vmatpush.msra.mxu0 %v3839
    %v3841 = vand.u32 %v3624, 4294901760
    %3842 = vmatpush.msra.mxu0 %v3841
    %v3843 = vand.u32 %v3623, 4294901760
    %3844 = vmatpush.msra.mxu0 %v3843
    %v3845 = vand.u32 %v3633, 4294901760
    %3846 = vmatmul.f32.gmra.mxu0 %v3845
    %v3847 = vpop.f32.mrf.mxu0
    %v3848 = vadd.f32 %v3819, %v3847
    %v3849 = vand.u32 %v3636, 4294901760
    %3850 = vmatmul.f32.gmra.mxu0 %v3849
    %v3851 = vpop.f32.mrf.mxu0
    %v3852 = vadd.f32 %v3823, %v3851
    %3853 = vdwg.mxu0
    %s3854 = scalar_lea.vmem [#allocation9], 64
    %v3855 = vld [vmem:[%s3854] sm:$0xff]
    %v3856 = vld [vmem:[%s3854 + $0x8] sm:$0xff]
    %v3857 = vld [vmem:[%s3854 + $0x10] sm:$0xff]
    %v3858 = vld [vmem:[%s3854 + $0x18] sm:$0xff]
    %s3859 = scalar_lea.vmem %s10, 2
    %v3860 = vld [vmem:[%s3859] sm:$0x1]
    %v3862 = vperm.slane %v3860, 0
    %v3865 = vsel %vm825, %v3848, 0
    %v3868 = vsel %vm825, %v3852, 0
    %3870 = vmatpush.msra.mxu0 0.0
    %3871 = vmatpush.msra.mxu0 0.0
    %3872 = vmatpush.msra.mxu0 0.0
    %3873 = vmatpush.msra.mxu0 0.0
    %3874 = vmatpush.msra.mxu0 0.0
    %3875 = vmatpush.msra.mxu0 0.0
    %3876 = vmatpush.msra.mxu0 0.0
    %3877 = vmatpush.msra.mxu0 0.0
    %3878 = vmatpush.msra.mxu0 0.0
    %3879 = vmatpush.msra.mxu0 0.0
    %3880 = vmatpush.msra.mxu0 0.0
    %3881 = vmatpush.msra.mxu0 0.0
    %v3882 = vand.u32 %v3858, 4294901760
    %3883 = vmatpush.msra.mxu0 %v3882
    %v3884 = vand.u32 %v3857, 4294901760
    %3885 = vmatpush.msra.mxu0 %v3884
    %v3886 = vand.u32 %v3856, 4294901760
    %3887 = vmatpush.msra.mxu0 %v3886
    %v3888 = vand.u32 %v3855, 4294901760
    %3889 = vmatpush.msra.mxu0 %v3888
    %v3890 = vand.u32 %v3865, 4294901760
    %v3891 = vsub.f32 %v3865, %v3890
    %v3892 = vand.u32 %v3891, 4294901760
    %v3893 = vsub.f32 %v3891, %v3892
    %v3894 = vand.u32 %v3893, 4294901760
    %3895 = vmatmul.f32.gmra.mxu0 %v3894
    %v3896 = vpop.f32.mrf.mxu0
    %v3897 = vadd.f32 %v3862, %v3896
    %v3898 = vand.u32 %v3868, 4294901760
    %v3899 = vsub.f32 %v3868, %v3898
    %v3900 = vand.u32 %v3899, 4294901760
    %v3901 = vsub.f32 %v3899, %v3900
    %v3902 = vand.u32 %v3901, 4294901760
    %3903 = vmatmul.f32.gmra.mxu0 %v3902
    %v3904 = vpop.f32.mrf.mxu0
    %v3905 = vadd.f32 %v3862, %v3904
    %3906 = vdwg.mxu0
    %3907 = vmatpush.msra.mxu0 0.0
    %3908 = vmatpush.msra.mxu0 0.0
    %3909 = vmatpush.msra.mxu0 0.0
    %3910 = vmatpush.msra.mxu0 0.0
    %3911 = vmatpush.msra.mxu0 0.0
    %3912 = vmatpush.msra.mxu0 0.0
    %3913 = vmatpush.msra.mxu0 0.0
    %3914 = vmatpush.msra.mxu0 0.0
    %3915 = vmatpush.msra.mxu0 0.0
    %3916 = vmatpush.msra.mxu0 0.0
    %3917 = vmatpush.msra.mxu0 0.0
    %3918 = vmatpush.msra.mxu0 0.0
    %v3919 = vand.u32 %v3858, 4294901760
    %v3920 = vsub.f32 %v3858, %v3919
    %v3921 = vand.u32 %v3920, 4294901760
    %v3922 = vsub.f32 %v3920, %v3921
    %v3923 = vand.u32 %v3922, 4294901760
    %3924 = vmatpush.msra.mxu0 %v3923
    %v3925 = vand.u32 %v3857, 4294901760
    %v3926 = vsub.f32 %v3857, %v3925
    %v3927 = vand.u32 %v3926, 4294901760
    %v3928 = vsub.f32 %v3926, %v3927
    %v3929 = vand.u32 %v3928, 4294901760
    %3930 = vmatpush.msra.mxu0 %v3929
    %v3931 = vand.u32 %v3856, 4294901760
    %v3932 = vsub.f32 %v3856, %v3931
    %v3933 = vand.u32 %v3932, 4294901760
    %v3934 = vsub.f32 %v3932, %v3933
    %v3935 = vand.u32 %v3934, 4294901760
    %3936 = vmatpush.msra.mxu0 %v3935
    %v3937 = vand.u32 %v3855, 4294901760
    %v3938 = vsub.f32 %v3855, %v3937
    %v3939 = vand.u32 %v3938, 4294901760
    %v3940 = vsub.f32 %v3938, %v3939
    %v3941 = vand.u32 %v3940, 4294901760
    %3942 = vmatpush.msra.mxu0 %v3941
    %v3943 = vand.u32 %v3865, 4294901760
    %3944 = vmatmul.f32.gmra.mxu0 %v3943
    %v3945 = vpop.f32.mrf.mxu0
    %v3946 = vadd.f32 %v3897, %v3945
    %v3947 = vand.u32 %v3868, 4294901760
    %3948 = vmatmul.f32.gmra.mxu0 %v3947
    %v3949 = vpop.f32.mrf.mxu0
    %v3950 = vadd.f32 %v3905, %v3949
    %3951 = vdwg.mxu0
    %3952 = vmatpush.msra.mxu0 0.0
    %3953 = vmatpush.msra.mxu0 0.0
    %3954 = vmatpush.msra.mxu0 0.0
    %3955 = vmatpush.msra.mxu0 0.0
    %3956 = vmatpush.msra.mxu0 0.0
    %3957 = vmatpush.msra.mxu0 0.0
    %3958 = vmatpush.msra.mxu0 0.0
    %3959 = vmatpush.msra.mxu0 0.0
    %3960 = vmatpush.msra.mxu0 0.0
    %3961 = vmatpush.msra.mxu0 0.0
    %3962 = vmatpush.msra.mxu0 0.0
    %3963 = vmatpush.msra.mxu0 0.0
    %v3964 = vand.u32 %v3858, 4294901760
    %v3965 = vsub.f32 %v3858, %v3964
    %3966 = vmatpush.msra.mxu0 %v3965
    %v3967 = vand.u32 %v3857, 4294901760
    %v3968 = vsub.f32 %v3857, %v3967
    %3969 = vmatpush.msra.mxu0 %v3968
    %v3970 = vand.u32 %v3856, 4294901760
    %v3971 = vsub.f32 %v3856, %v3970
    %3972 = vmatpush.msra.mxu0 %v3971
    %v3973 = vand.u32 %v3855, 4294901760
    %v3974 = vsub.f32 %v3855, %v3973
    %3975 = vmatpush.msra.mxu0 %v3974
    %v3976 = vand.u32 %v3865, 4294901760
    %v3977 = vsub.f32 %v3865, %v3976
    %3978 = vmatmul.f32.gmra.mxu0 %v3977
    %v3979 = vpop.f32.mrf.mxu0
    %v3980 = vadd.f32 %v3946, %v3979
    %v3981 = vand.u32 %v3868, 4294901760
    %v3982 = vsub.f32 %v3868, %v3981
    %3983 = vmatmul.f32.gmra.mxu0 %v3982
    %v3984 = vpop.f32.mrf.mxu0
    %v3985 = vadd.f32 %v3950, %v3984
    %3986 = vdwg.mxu0
    %3987 = vmatpush.msra.mxu0 0.0
    %3988 = vmatpush.msra.mxu0 0.0
    %3989 = vmatpush.msra.mxu0 0.0
    %3990 = vmatpush.msra.mxu0 0.0
    %3991 = vmatpush.msra.mxu0 0.0
    %3992 = vmatpush.msra.mxu0 0.0
    %3993 = vmatpush.msra.mxu0 0.0
    %3994 = vmatpush.msra.mxu0 0.0
    %3995 = vmatpush.msra.mxu0 0.0
    %3996 = vmatpush.msra.mxu0 0.0
    %3997 = vmatpush.msra.mxu0 0.0
    %3998 = vmatpush.msra.mxu0 0.0
    %v3999 = vand.u32 %v3858, 4294901760
    %4000 = vmatpush.msra.mxu0 %v3999
    %v4001 = vand.u32 %v3857, 4294901760
    %4002 = vmatpush.msra.mxu0 %v4001
    %v4003 = vand.u32 %v3856, 4294901760
    %4004 = vmatpush.msra.mxu0 %v4003
    %v4005 = vand.u32 %v3855, 4294901760
    %4006 = vmatpush.msra.mxu0 %v4005
    %v4007 = vand.u32 %v3865, 4294901760
    %v4008 = vsub.f32 %v3865, %v4007
    %v4009 = vand.u32 %v4008, 4294901760
    %4010 = vmatmul.f32.gmra.mxu0 %v4009
    %v4011 = vpop.f32.mrf.mxu0
    %v4012 = vadd.f32 %v3980, %v4011
    %v4013 = vand.u32 %v3868, 4294901760
    %v4014 = vsub.f32 %v3868, %v4013
    %v4015 = vand.u32 %v4014, 4294901760
    %4016 = vmatmul.f32.gmra.mxu0 %v4015
    %v4017 = vpop.f32.mrf.mxu0
    %v4018 = vadd.f32 %v3985, %v4017
    %4019 = vdwg.mxu0
    %4020 = vmatpush.msra.mxu0 0.0
    %4021 = vmatpush.msra.mxu0 0.0
    %4022 = vmatpush.msra.mxu0 0.0
    %4023 = vmatpush.msra.mxu0 0.0
    %4024 = vmatpush.msra.mxu0 0.0
    %4025 = vmatpush.msra.mxu0 0.0
    %4026 = vmatpush.msra.mxu0 0.0
    %4027 = vmatpush.msra.mxu0 0.0
    %4028 = vmatpush.msra.mxu0 0.0
    %4029 = vmatpush.msra.mxu0 0.0
    %4030 = vmatpush.msra.mxu0 0.0
    %4031 = vmatpush.msra.mxu0 0.0
    %v4032 = vand.u32 %v3858, 4294901760
    %v4033 = vsub.f32 %v3858, %v4032
    %v4034 = vand.u32 %v4033, 4294901760
    %4035 = vmatpush.msra.mxu0 %v4034
    %v4036 = vand.u32 %v3857, 4294901760
    %v4037 = vsub.f32 %v3857, %v4036
    %v4038 = vand.u32 %v4037, 4294901760
    %4039 = vmatpush.msra.mxu0 %v4038
    %v4040 = vand.u32 %v3856, 4294901760
    %v4041 = vsub.f32 %v3856, %v4040
    %v4042 = vand.u32 %v4041, 4294901760
    %4043 = vmatpush.msra.mxu0 %v4042
    %v4044 = vand.u32 %v3855, 4294901760
    %v4045 = vsub.f32 %v3855, %v4044
    %v4046 = vand.u32 %v4045, 4294901760
    %4047 = vmatpush.msra.mxu0 %v4046
    %v4048 = vand.u32 %v3865, 4294901760
    %4049 = vmatmul.f32.gmra.mxu0 %v4048
    %v4050 = vpop.f32.mrf.mxu0
    %v4051 = vadd.f32 %v4012, %v4050
    %v4052 = vand.u32 %v3868, 4294901760
    %4053 = vmatmul.f32.gmra.mxu0 %v4052
    %v4054 = vpop.f32.mrf.mxu0
    %v4055 = vadd.f32 %v4018, %v4054
    %4056 = vdwg.mxu0
    %4057 = vmatpush.msra.mxu0 0.0
    %4058 = vmatpush.msra.mxu0 0.0
    %4059 = vmatpush.msra.mxu0 0.0
    %4060 = vmatpush.msra.mxu0 0.0
    %4061 = vmatpush.msra.mxu0 0.0
    %4062 = vmatpush.msra.mxu0 0.0
    %4063 = vmatpush.msra.mxu0 0.0
    %4064 = vmatpush.msra.mxu0 0.0
    %4065 = vmatpush.msra.mxu0 0.0
    %4066 = vmatpush.msra.mxu0 0.0
    %4067 = vmatpush.msra.mxu0 0.0
    %4068 = vmatpush.msra.mxu0 0.0
    %v4069 = vand.u32 %v3858, 4294901760
    %4070 = vmatpush.msra.mxu0 %v4069
    %v4071 = vand.u32 %v3857, 4294901760
    %4072 = vmatpush.msra.mxu0 %v4071
    %v4073 = vand.u32 %v3856, 4294901760
    %4074 = vmatpush.msra.mxu0 %v4073
    %v4075 = vand.u32 %v3855, 4294901760
    %4076 = vmatpush.msra.mxu0 %v4075
    %v4077 = vand.u32 %v3865, 4294901760
    %4078 = vmatmul.f32.gmra.mxu0 %v4077
    %v4079 = vpop.f32.mrf.mxu0
    %v4080 = vadd.f32 %v4051, %v4079
    %v4081 = vand.u32 %v3868, 4294901760
    %4082 = vmatmul.f32.gmra.mxu0 %v4081
    %v4083 = vpop.f32.mrf.mxu0
    %v4084 = vadd.f32 %v4055, %v4083
    %4085 = vdwg.mxu0
    %vm4086 = vcmp.gt.f32.partialorder %v4080, 20.0
    %vm4087 = vcmp.gt.f32.partialorder %v4084, 20.0
    %v4088 = vmin.f32 %v4080, 20.0
    %v4089 = vmin.f32 %v4084, 20.0
    %v4090 = vmul.f32 %v4088, 1.442695
    %v4091 = vpow.pop %v4090
    %v4092 = vmul.f32 %v4089, 1.442695
    %v4093 = vpow.pop %v4092
    %v4094 = vadd.f32 %v4091, 1.0
    %v4095 = vlog2.pop %v4094
    %v4096 = vmul.f32 %v4095, 0.6931472
    %v4097 = vmul.f32 -0.5, %v4091
    %v4098 = vadd.f32 %v4097, 1.0
    %v4099 = vmul.f32 %v4098, %v4091
    %v4100 = vand.u32 2147483647, %v4091
    %vm4101 = vcmp.lt.f32.partialorder %v4100, 0.0004427343
    %v4102 = vsel %vm4101, %v4099, %v4096
    %v4103 = vadd.f32 %v4093, 1.0
    %v4104 = vlog2.pop %v4103
    %v4105 = vmul.f32 %v4104, 0.6931472
    %v4106 = vmul.f32 -0.5, %v4093
    %v4107 = vadd.f32 %v4106, 1.0
    %v4108 = vmul.f32 %v4107, %v4093
    %v4109 = vand.u32 2147483647, %v4093
    %vm4110 = vcmp.lt.f32.partialorder %v4109, 0.0004427343
    %v4111 = vsel %vm4110, %v4108, %v4105
    %v4112 = vsel %vm4086, %v4080, %v4102
    %v4113 = vsel %vm4087, %v4084, %v4111
    %4116 = vrot.lane.b32.xlu0 %v4080, 112
    %v4117 = vpop.permute.xlu0 %4116
    %4118 = vrot.lane.b32.xlu0 %v4084, 112
    %v4119 = vpop.permute.xlu0 %4118
    %v4122 = vmul.f32 %v4080, %v4117
    %v4123 = vmul.f32 %v4084, %v4119
    %4126 = vrot.lane.b32.xlu0 %v4122, 96
    %v4127 = vpop.permute.xlu0 %4126
    %4128 = vrot.lane.b32.xlu0 %v4123, 96
    %v4129 = vpop.permute.xlu0 %4128
    %v4132 = vsel %vm148, %v4127, 0.0
    %4133 = vadd.xlane.f32.xlu0 %v4132
    %v4134 = vpop.xlane.xlu0 %4133
    %v4135 = vsel %vm148, %v4129, 0.0
    %4136 = vadd.xlane.f32.xlu0 %v4135
    %v4137 = vpop.xlane.xlu0 %4136
    %v4138 = vmul.f32 %v3848, %v4112
    %v4139 = vmul.f32 %v3852, %v4113
    %v4140 = vmul.f32 %v4138, %v4134
    %v4141 = vmul.f32 %v4139, %v4137
    %v4142 = vxor.u32 %v4140, 2147483648
    %v4143 = vxor.u32 %v4141, 2147483648
    %v4144 = vmul.f32 %v4142, 1.442695
    %v4145 = vpow.pop %v4144
    %v4146 = vmul.f32 %v4143, 1.442695
    %v4147 = vpow.pop %v4146
    %v4148 = vadd.f32 %v4145, 1.0
    %v4149 = vadd.f32 %v4147, 1.0
    %v4150 = vrcp.pop %v4148
    %v4151 = vmul.f32 %v4148, %v4150
    %v4152 = vsub.f32 1.0, %v4151
    %v4153 = vmul.f32 %v4150, %v4152
    %v4154 = vadd.f32 %v4150, %v4153
    %vm4155 = vweird.f32 %v4148
    %vm4156 = vweird.f32 %v4150
    %vm4157 = vmor %vm4155, %vm4156
    %v4158 = vsel %vm4157, %v4150, %v4154
    %v4159 = vand.u32 2147483647, %v4148
    %vm4160 = vcmp.eq.f32.partialorder %v4159, 8.507059e+37
    %v4161 = vand.u32 %v4148, 2147483648
    %v4162 = vor.u32 1.1754944e-38, %v4161
    %v4163 = vsel %vm4160, %v4162, %v4158
    %v4164 = vmul.f32 1.0, %v4163
    %v4165 = vrcp.pop %v4149
    %v4166 = vmul.f32 %v4149, %v4165
    %v4167 = vsub.f32 1.0, %v4166
    %v4168 = vmul.f32 %v4165, %v4167
    %v4169 = vadd.f32 %v4165, %v4168
    %vm4170 = vweird.f32 %v4149
    %vm4171 = vweird.f32 %v4165
    %vm4172 = vmor %vm4170, %vm4171
    %v4173 = vsel %vm4172, %v4165, %v4169
    %v4174 = vand.u32 2147483647, %v4149
    %vm4175 = vcmp.eq.f32.partialorder %v4174, 8.507059e+37
    %v4176 = vand.u32 %v4149, 2147483648
    %v4177 = vor.u32 1.1754944e-38, %v4176
    %v4178 = vsel %vm4175, %v4177, %v4173
    %v4179 = vmul.f32 1.0, %v4178
    %v4180 = vmul.f32 %v4140, %v4164
    %v4181 = vmul.f32 %v4141, %v4179
    %v4182 = vxor.u32 %v3298, 2147483648
    %v4183 = vxor.u32 %v3302, 2147483648
    %v4184 = vmul.f32 %v4182, 1.442695
    %v4185 = vpow.pop %v4184
    %v4186 = vmul.f32 %v4183, 1.442695
    %v4187 = vpow.pop %v4186
    %v4188 = vadd.f32 %v4185, 1.0
    %v4189 = vadd.f32 %v4187, 1.0
    %v4190 = vrcp.pop %v4188
    %v4191 = vmul.f32 %v4188, %v4190
    %v4192 = vsub.f32 1.0, %v4191
    %v4193 = vmul.f32 %v4190, %v4192
    %v4194 = vadd.f32 %v4190, %v4193
    %vm4195 = vweird.f32 %v4188
    %vm4196 = vweird.f32 %v4190
    %vm4197 = vmor %vm4195, %vm4196
    %v4198 = vsel %vm4197, %v4190, %v4194
    %v4199 = vand.u32 2147483647, %v4188
    %vm4200 = vcmp.eq.f32.partialorder %v4199, 8.507059e+37
    %v4201 = vand.u32 %v4188, 2147483648
    %v4202 = vor.u32 1.1754944e-38, %v4201
    %v4203 = vsel %vm4200, %v4202, %v4198
    %v4204 = vmul.f32 1.0, %v4203
    %v4205 = vrcp.pop %v4189
    %v4206 = vmul.f32 %v4189, %v4205
    %v4207 = vsub.f32 1.0, %v4206
    %v4208 = vmul.f32 %v4205, %v4207
    %v4209 = vadd.f32 %v4205, %v4208
    %vm4210 = vweird.f32 %v4189
    %vm4211 = vweird.f32 %v4205
    %vm4212 = vmor %vm4210, %vm4211
    %v4213 = vsel %vm4212, %v4205, %v4209
    %v4214 = vand.u32 2147483647, %v4189
    %vm4215 = vcmp.eq.f32.partialorder %v4214, 8.507059e+37
    %v4216 = vand.u32 %v4189, 2147483648
    %v4217 = vor.u32 1.1754944e-38, %v4216
    %v4218 = vsel %vm4215, %v4217, %v4213
    %v4219 = vmul.f32 1.0, %v4218
    %v4220 = vmul.f32 %v3298, %v4204
    %v4221 = vmul.f32 %v3302, %v4219
    %4224 = vrot.lane.b32.xlu0 %v4220, 32
    %v4225 = vpop.permute.xlu0 %4224
    %4226 = vrot.lane.b32.xlu0 %v4221, 32
    %v4227 = vpop.permute.xlu0 %4226
    %v4230 = vmul.f32 %v4180, %v4225
    %v4231 = vmul.f32 %v4181, %v4227
    %s4232 = scalar_lea.vmem %s11, 64
    %v4233 = vld [vmem:[%s4232] sm:$0xff]
    %v4234 = vld [vmem:[%s4232 + $0x8] sm:$0xff]
    %v4235 = vld [vmem:[%s4232 + $0x10] sm:$0xff]
    %v4236 = vld [vmem:[%s4232 + $0x18] sm:$0xff]
    %s4237 = scalar_lea.vmem %s12, 2
    %v4238 = vld [vmem:[%s4237] sm:$0x1]
    %v4240 = vperm.slane %v4238, 0
    %v4243 = vsel %vm825, %v4230, 0
    %v4246 = vsel %vm825, %v4231, 0
    %4248 = vmatpush.msra.mxu0 0.0
    %4249 = vmatpush.msra.mxu0 0.0
    %4250 = vmatpush.msra.mxu0 0.0
    %4251 = vmatpush.msra.mxu0 0.0
    %4252 = vmatpush.msra.mxu0 0.0
    %4253 = vmatpush.msra.mxu0 0.0
    %4254 = vmatpush.msra.mxu0 0.0
    %4255 = vmatpush.msra.mxu0 0.0
    %4256 = vmatpush.msra.mxu0 0.0
    %4257 = vmatpush.msra.mxu0 0.0
    %4258 = vmatpush.msra.mxu0 0.0
    %4259 = vmatpush.msra.mxu0 0.0
    %v4260 = vand.u32 %v4236, 4294901760
    %4261 = vmatpush.msra.mxu0 %v4260
    %v4262 = vand.u32 %v4235, 4294901760
    %4263 = vmatpush.msra.mxu0 %v4262
    %v4264 = vand.u32 %v4234, 4294901760
    %4265 = vmatpush.msra.mxu0 %v4264
    %v4266 = vand.u32 %v4233, 4294901760
    %4267 = vmatpush.msra.mxu0 %v4266
    %v4268 = vand.u32 %v4243, 4294901760
    %v4269 = vsub.f32 %v4243, %v4268
    %v4270 = vand.u32 %v4269, 4294901760
    %v4271 = vsub.f32 %v4269, %v4270
    %v4272 = vand.u32 %v4271, 4294901760
    %4273 = vmatmul.f32.gmra.mxu0 %v4272
    %v4274 = vpop.f32.mrf.mxu0
    %v4275 = vadd.f32 %v4240, %v4274
    %v4276 = vand.u32 %v4246, 4294901760
    %v4277 = vsub.f32 %v4246, %v4276
    %v4278 = vand.u32 %v4277, 4294901760
    %v4279 = vsub.f32 %v4277, %v4278
    %v4280 = vand.u32 %v4279, 4294901760
    %4281 = vmatmul.f32.gmra.mxu0 %v4280
    %v4282 = vpop.f32.mrf.mxu0
    %v4283 = vadd.f32 %v4240, %v4282
    %4284 = vdwg.mxu0
    %4285 = vmatpush.msra.mxu0 0.0
    %4286 = vmatpush.msra.mxu0 0.0
    %4287 = vmatpush.msra.mxu0 0.0
    %4288 = vmatpush.msra.mxu0 0.0
    %4289 = vmatpush.msra.mxu0 0.0
    %4290 = vmatpush.msra.mxu0 0.0
    %4291 = vmatpush.msra.mxu0 0.0
    %4292 = vmatpush.msra.mxu0 0.0
    %4293 = vmatpush.msra.mxu0 0.0
    %4294 = vmatpush.msra.mxu0 0.0
    %4295 = vmatpush.msra.mxu0 0.0
    %4296 = vmatpush.msra.mxu0 0.0
    %v4297 = vand.u32 %v4236, 4294901760
    %v4298 = vsub.f32 %v4236, %v4297
    %v4299 = vand.u32 %v4298, 4294901760
    %v4300 = vsub.f32 %v4298, %v4299
    %v4301 = vand.u32 %v4300, 4294901760
    %4302 = vmatpush.msra.mxu0 %v4301
    %v4303 = vand.u32 %v4235, 4294901760
    %v4304 = vsub.f32 %v4235, %v4303
    %v4305 = vand.u32 %v4304, 4294901760
    %v4306 = vsub.f32 %v4304, %v4305
    %v4307 = vand.u32 %v4306, 4294901760
    %4308 = vmatpush.msra.mxu0 %v4307
    %v4309 = vand.u32 %v4234, 4294901760
    %v4310 = vsub.f32 %v4234, %v4309
    %v4311 = vand.u32 %v4310, 4294901760
    %v4312 = vsub.f32 %v4310, %v4311
    %v4313 = vand.u32 %v4312, 4294901760
    %4314 = vmatpush.msra.mxu0 %v4313
    %v4315 = vand.u32 %v4233, 4294901760
    %v4316 = vsub.f32 %v4233, %v4315
    %v4317 = vand.u32 %v4316, 4294901760
    %v4318 = vsub.f32 %v4316, %v4317
    %v4319 = vand.u32 %v4318, 4294901760
    %4320 = vmatpush.msra.mxu0 %v4319
    %v4321 = vand.u32 %v4243, 4294901760
    %4322 = vmatmul.f32.gmra.mxu0 %v4321
    %v4323 = vpop.f32.mrf.mxu0
    %v4324 = vadd.f32 %v4275, %v4323
    %v4325 = vand.u32 %v4246, 4294901760
    %4326 = vmatmul.f32.gmra.mxu0 %v4325
    %v4327 = vpop.f32.mrf.mxu0
    %v4328 = vadd.f32 %v4283, %v4327
    %4329 = vdwg.mxu0
    %4330 = vmatpush.msra.mxu0 0.0
    %4331 = vmatpush.msra.mxu0 0.0
    %4332 = vmatpush.msra.mxu0 0.0
    %4333 = vmatpush.msra.mxu0 0.0
    %4334 = vmatpush.msra.mxu0 0.0
    %4335 = vmatpush.msra.mxu0 0.0
    %4336 = vmatpush.msra.mxu0 0.0
    %4337 = vmatpush.msra.mxu0 0.0
    %4338 = vmatpush.msra.mxu0 0.0
    %4339 = vmatpush.msra.mxu0 0.0
    %4340 = vmatpush.msra.mxu0 0.0
    %4341 = vmatpush.msra.mxu0 0.0
    %v4342 = vand.u32 %v4236, 4294901760
    %v4343 = vsub.f32 %v4236, %v4342
    %4344 = vmatpush.msra.mxu0 %v4343
    %v4345 = vand.u32 %v4235, 4294901760
    %v4346 = vsub.f32 %v4235, %v4345
    %4347 = vmatpush.msra.mxu0 %v4346
    %v4348 = vand.u32 %v4234, 4294901760
    %v4349 = vsub.f32 %v4234, %v4348
    %4350 = vmatpush.msra.mxu0 %v4349
    %v4351 = vand.u32 %v4233, 4294901760
    %v4352 = vsub.f32 %v4233, %v4351
    %4353 = vmatpush.msra.mxu0 %v4352
    %v4354 = vand.u32 %v4243, 4294901760
    %v4355 = vsub.f32 %v4243, %v4354
    %4356 = vmatmul.f32.gmra.mxu0 %v4355
    %v4357 = vpop.f32.mrf.mxu0
    %v4358 = vadd.f32 %v4324, %v4357
    %v4359 = vand.u32 %v4246, 4294901760
    %v4360 = vsub.f32 %v4246, %v4359
    %4361 = vmatmul.f32.gmra.mxu0 %v4360
    %v4362 = vpop.f32.mrf.mxu0
    %v4363 = vadd.f32 %v4328, %v4362
    %4364 = vdwg.mxu0
    %4365 = vmatpush.msra.mxu0 0.0
    %4366 = vmatpush.msra.mxu0 0.0
    %4367 = vmatpush.msra.mxu0 0.0
    %4368 = vmatpush.msra.mxu0 0.0
    %4369 = vmatpush.msra.mxu0 0.0
    %4370 = vmatpush.msra.mxu0 0.0
    %4371 = vmatpush.msra.mxu0 0.0
    %4372 = vmatpush.msra.mxu0 0.0
    %4373 = vmatpush.msra.mxu0 0.0
    %4374 = vmatpush.msra.mxu0 0.0
    %4375 = vmatpush.msra.mxu0 0.0
    %4376 = vmatpush.msra.mxu0 0.0
    %v4377 = vand.u32 %v4236, 4294901760
    %4378 = vmatpush.msra.mxu0 %v4377
    %v4379 = vand.u32 %v4235, 4294901760
    %4380 = vmatpush.msra.mxu0 %v4379
    %v4381 = vand.u32 %v4234, 4294901760
    %4382 = vmatpush.msra.mxu0 %v4381
    %v4383 = vand.u32 %v4233, 4294901760
    %4384 = vmatpush.msra.mxu0 %v4383
    %v4385 = vand.u32 %v4243, 4294901760
    %v4386 = vsub.f32 %v4243, %v4385
    %v4387 = vand.u32 %v4386, 4294901760
    %4388 = vmatmul.f32.gmra.mxu0 %v4387
    %v4389 = vpop.f32.mrf.mxu0
    %v4390 = vadd.f32 %v4358, %v4389
    %v4391 = vand.u32 %v4246, 4294901760
    %v4392 = vsub.f32 %v4246, %v4391
    %v4393 = vand.u32 %v4392, 4294901760
    %4394 = vmatmul.f32.gmra.mxu0 %v4393
    %v4395 = vpop.f32.mrf.mxu0
    %v4396 = vadd.f32 %v4363, %v4395
    %4397 = vdwg.mxu0
    %4398 = vmatpush.msra.mxu0 0.0
    %4399 = vmatpush.msra.mxu0 0.0
    %4400 = vmatpush.msra.mxu0 0.0
    %4401 = vmatpush.msra.mxu0 0.0
    %4402 = vmatpush.msra.mxu0 0.0
    %4403 = vmatpush.msra.mxu0 0.0
    %4404 = vmatpush.msra.mxu0 0.0
    %4405 = vmatpush.msra.mxu0 0.0
    %4406 = vmatpush.msra.mxu0 0.0
    %4407 = vmatpush.msra.mxu0 0.0
    %4408 = vmatpush.msra.mxu0 0.0
    %4409 = vmatpush.msra.mxu0 0.0
    %v4410 = vand.u32 %v4236, 4294901760
    %v4411 = vsub.f32 %v4236, %v4410
    %v4412 = vand.u32 %v4411, 4294901760
    %4413 = vmatpush.msra.mxu0 %v4412
    %v4414 = vand.u32 %v4235, 4294901760
    %v4415 = vsub.f32 %v4235, %v4414
    %v4416 = vand.u32 %v4415, 4294901760
    %4417 = vmatpush.msra.mxu0 %v4416
    %v4418 = vand.u32 %v4234, 4294901760
    %v4419 = vsub.f32 %v4234, %v4418
    %v4420 = vand.u32 %v4419, 4294901760
    %4421 = vmatpush.msra.mxu0 %v4420
    %v4422 = vand.u32 %v4233, 4294901760
    %v4423 = vsub.f32 %v4233, %v4422
    %v4424 = vand.u32 %v4423, 4294901760
    %4425 = vmatpush.msra.mxu0 %v4424
    %v4426 = vand.u32 %v4243, 4294901760
    %4427 = vmatmul.f32.gmra.mxu0 %v4426
    %v4428 = vpop.f32.mrf.mxu0
    %v4429 = vadd.f32 %v4390, %v4428
    %v4430 = vand.u32 %v4246, 4294901760
    %4431 = vmatmul.f32.gmra.mxu0 %v4430
    %v4432 = vpop.f32.mrf.mxu0
    %v4433 = vadd.f32 %v4396, %v4432
    %4434 = vdwg.mxu0
    %4435 = vmatpush.msra.mxu0 0.0
    %4436 = vmatpush.msra.mxu0 0.0
    %4437 = vmatpush.msra.mxu0 0.0
    %4438 = vmatpush.msra.mxu0 0.0
    %4439 = vmatpush.msra.mxu0 0.0
    %4440 = vmatpush.msra.mxu0 0.0
    %4441 = vmatpush.msra.mxu0 0.0
    %4442 = vmatpush.msra.mxu0 0.0
    %4443 = vmatpush.msra.mxu0 0.0
    %4444 = vmatpush.msra.mxu0 0.0
    %4445 = vmatpush.msra.mxu0 0.0
    %4446 = vmatpush.msra.mxu0 0.0
    %v4447 = vand.u32 %v4236, 4294901760
    %4448 = vmatpush.msra.mxu0 %v4447
    %v4449 = vand.u32 %v4235, 4294901760
    %4450 = vmatpush.msra.mxu0 %v4449
    %v4451 = vand.u32 %v4234, 4294901760
    %4452 = vmatpush.msra.mxu0 %v4451
    %v4453 = vand.u32 %v4233, 4294901760
    %4454 = vmatpush.msra.mxu0 %v4453
    %v4455 = vand.u32 %v4243, 4294901760
    %4456 = vmatmul.f32.gmra.mxu0 %v4455
    %v4457 = vpop.f32.mrf.mxu0
    %v4458 = vadd.f32 %v4429, %v4457
    %v4459 = vand.u32 %v4246, 4294901760
    %4460 = vmatmul.f32.gmra.mxu0 %v4459
    %v4461 = vpop.f32.mrf.mxu0
    %v4462 = vadd.f32 %v4433, %v4461
    %4463 = vdwg.mxu0
    %v4464 = vld [vmem:[#allocation10] sm:$0xff]
    %v4465 = vld [vmem:[#allocation10 + $0x8] sm:$0xff]
    %v4466 = vld [vmem:[%s14] sm:$0x1]
    %v4468 = vperm.slane %v4466, 0
    %v4471 = vsel %vm148, %v4458, 0
    %v4474 = vsel %vm148, %v4462, 0
    %4476 = vmatpush.msra.mxu0 0.0
    %4477 = vmatpush.msra.mxu0 0.0
    %4478 = vmatpush.msra.mxu0 0.0
    %4479 = vmatpush.msra.mxu0 0.0
    %4480 = vmatpush.msra.mxu0 0.0
    %4481 = vmatpush.msra.mxu0 0.0
    %4482 = vmatpush.msra.mxu0 0.0
    %4483 = vmatpush.msra.mxu0 0.0
    %4484 = vmatpush.msra.mxu0 0.0
    %4485 = vmatpush.msra.mxu0 0.0
    %4486 = vmatpush.msra.mxu0 0.0
    %4487 = vmatpush.msra.mxu0 0.0
    %4488 = vmatpush.msra.mxu0 0.0
    %4489 = vmatpush.msra.mxu0 0.0
    %v4490 = vand.u32 %v4465, 4294901760
    %4491 = vmatpush.msra.mxu0 %v4490
    %v4492 = vand.u32 %v4464, 4294901760
    %4493 = vmatpush.msra.mxu0 %v4492
    %v4494 = vand.u32 %v4471, 4294901760
    %v4495 = vsub.f32 %v4471, %v4494
    %v4496 = vand.u32 %v4495, 4294901760
    %v4497 = vsub.f32 %v4495, %v4496
    %v4498 = vand.u32 %v4497, 4294901760
    %4499 = vmatmul.f32.gmra.mxu0 %v4498
    %v4500 = vpop.f32.mrf.mxu0
    %v4501 = vadd.f32 %v4468, %v4500
    %v4502 = vand.u32 %v4474, 4294901760
    %v4503 = vsub.f32 %v4474, %v4502
    %v4504 = vand.u32 %v4503, 4294901760
    %v4505 = vsub.f32 %v4503, %v4504
    %v4506 = vand.u32 %v4505, 4294901760
    %4507 = vmatmul.f32.gmra.mxu0 %v4506
    %v4508 = vpop.f32.mrf.mxu0
    %v4509 = vadd.f32 %v4468, %v4508
    %4510 = vdwg.mxu0
    %4511 = vmatpush.msra.mxu0 0.0
    %4512 = vmatpush.msra.mxu0 0.0
    %4513 = vmatpush.msra.mxu0 0.0
    %4514 = vmatpush.msra.mxu0 0.0
    %4515 = vmatpush.msra.mxu0 0.0
    %4516 = vmatpush.msra.mxu0 0.0
    %4517 = vmatpush.msra.mxu0 0.0
    %4518 = vmatpush.msra.mxu0 0.0
    %4519 = vmatpush.msra.mxu0 0.0
    %4520 = vmatpush.msra.mxu0 0.0
    %4521 = vmatpush.msra.mxu0 0.0
    %4522 = vmatpush.msra.mxu0 0.0
    %4523 = vmatpush.msra.mxu0 0.0
    %4524 = vmatpush.msra.mxu0 0.0
    %v4525 = vand.u32 %v4465, 4294901760
    %v4526 = vsub.f32 %v4465, %v4525
    %v4527 = vand.u32 %v4526, 4294901760
    %v4528 = vsub.f32 %v4526, %v4527
    %v4529 = vand.u32 %v4528, 4294901760
    %4530 = vmatpush.msra.mxu0 %v4529
    %v4531 = vand.u32 %v4464, 4294901760
    %v4532 = vsub.f32 %v4464, %v4531
    %v4533 = vand.u32 %v4532, 4294901760
    %v4534 = vsub.f32 %v4532, %v4533
    %v4535 = vand.u32 %v4534, 4294901760
    %4536 = vmatpush.msra.mxu0 %v4535
    %v4537 = vand.u32 %v4471, 4294901760
    %4538 = vmatmul.f32.gmra.mxu0 %v4537
    %v4539 = vpop.f32.mrf.mxu0
    %v4540 = vadd.f32 %v4501, %v4539
    %v4541 = vand.u32 %v4474, 4294901760
    %4542 = vmatmul.f32.gmra.mxu0 %v4541
    %v4543 = vpop.f32.mrf.mxu0
    %v4544 = vadd.f32 %v4509, %v4543
    %4545 = vdwg.mxu0
    %4546 = vmatpush.msra.mxu0 0.0
    %4547 = vmatpush.msra.mxu0 0.0
    %4548 = vmatpush.msra.mxu0 0.0
    %4549 = vmatpush.msra.mxu0 0.0
    %4550 = vmatpush.msra.mxu0 0.0
    %4551 = vmatpush.msra.mxu0 0.0
    %4552 = vmatpush.msra.mxu0 0.0
    %4553 = vmatpush.msra.mxu0 0.0
    %4554 = vmatpush.msra.mxu0 0.0
    %4555 = vmatpush.msra.mxu0 0.0
    %4556 = vmatpush.msra.mxu0 0.0
    %4557 = vmatpush.msra.mxu0 0.0
    %4558 = vmatpush.msra.mxu0 0.0
    %4559 = vmatpush.msra.mxu0 0.0
    %v4560 = vand.u32 %v4465, 4294901760
    %v4561 = vsub.f32 %v4465, %v4560
    %4562 = vmatpush.msra.mxu0 %v4561
    %v4563 = vand.u32 %v4464, 4294901760
    %v4564 = vsub.f32 %v4464, %v4563
    %4565 = vmatpush.msra.mxu0 %v4564
    %v4566 = vand.u32 %v4471, 4294901760
    %v4567 = vsub.f32 %v4471, %v4566
    %4568 = vmatmul.f32.gmra.mxu0 %v4567
    %v4569 = vpop.f32.mrf.mxu0
    %v4570 = vadd.f32 %v4540, %v4569
    %v4571 = vand.u32 %v4474, 4294901760
    %v4572 = vsub.f32 %v4474, %v4571
    %4573 = vmatmul.f32.gmra.mxu0 %v4572
    %v4574 = vpop.f32.mrf.mxu0
    %v4575 = vadd.f32 %v4544, %v4574
    %4576 = vdwg.mxu0
    %4577 = vmatpush.msra.mxu0 0.0
    %4578 = vmatpush.msra.mxu0 0.0
    %4579 = vmatpush.msra.mxu0 0.0
    %4580 = vmatpush.msra.mxu0 0.0
    %4581 = vmatpush.msra.mxu0 0.0
    %4582 = vmatpush.msra.mxu0 0.0
    %4583 = vmatpush.msra.mxu0 0.0
    %4584 = vmatpush.msra.mxu0 0.0
    %4585 = vmatpush.msra.mxu0 0.0
    %4586 = vmatpush.msra.mxu0 0.0
    %4587 = vmatpush.msra.mxu0 0.0
    %4588 = vmatpush.msra.mxu0 0.0
    %4589 = vmatpush.msra.mxu0 0.0
    %4590 = vmatpush.msra.mxu0 0.0
    %v4591 = vand.u32 %v4465, 4294901760
    %4592 = vmatpush.msra.mxu0 %v4591
    %v4593 = vand.u32 %v4464, 4294901760
    %4594 = vmatpush.msra.mxu0 %v4593
    %v4595 = vand.u32 %v4471, 4294901760
    %v4596 = vsub.f32 %v4471, %v4595
    %v4597 = vand.u32 %v4596, 4294901760
    %4598 = vmatmul.f32.gmra.mxu0 %v4597
    %v4599 = vpop.f32.mrf.mxu0
    %v4600 = vadd.f32 %v4570, %v4599
    %v4601 = vand.u32 %v4474, 4294901760
    %v4602 = vsub.f32 %v4474, %v4601
    %v4603 = vand.u32 %v4602, 4294901760
    %4604 = vmatmul.f32.gmra.mxu0 %v4603
    %v4605 = vpop.f32.mrf.mxu0
    %v4606 = vadd.f32 %v4575, %v4605
    %4607 = vdwg.mxu0
    %4608 = vmatpush.msra.mxu0 0.0
    %4609 = vmatpush.msra.mxu0 0.0
    %4610 = vmatpush.msra.mxu0 0.0
    %4611 = vmatpush.msra.mxu0 0.0
    %4612 = vmatpush.msra.mxu0 0.0
    %4613 = vmatpush.msra.mxu0 0.0
    %4614 = vmatpush.msra.mxu0 0.0
    %4615 = vmatpush.msra.mxu0 0.0
    %4616 = vmatpush.msra.mxu0 0.0
    %4617 = vmatpush.msra.mxu0 0.0
    %4618 = vmatpush.msra.mxu0 0.0
    %4619 = vmatpush.msra.mxu0 0.0
    %4620 = vmatpush.msra.mxu0 0.0
    %4621 = vmatpush.msra.mxu0 0.0
    %v4622 = vand.u32 %v4465, 4294901760
    %v4623 = vsub.f32 %v4465, %v4622
    %v4624 = vand.u32 %v4623, 4294901760
    %4625 = vmatpush.msra.mxu0 %v4624
    %v4626 = vand.u32 %v4464, 4294901760
    %v4627 = vsub.f32 %v4464, %v4626
    %v4628 = vand.u32 %v4627, 4294901760
    %4629 = vmatpush.msra.mxu0 %v4628
    %v4630 = vand.u32 %v4471, 4294901760
    %4631 = vmatmul.f32.gmra.mxu0 %v4630
    %v4632 = vpop.f32.mrf.mxu0
    %v4633 = vadd.f32 %v4600, %v4632
    %v4634 = vand.u32 %v4474, 4294901760
    %4635 = vmatmul.f32.gmra.mxu0 %v4634
    %v4636 = vpop.f32.mrf.mxu0
    %v4637 = vadd.f32 %v4606, %v4636
    %4638 = vdwg.mxu0
    %4639 = vmatpush.msra.mxu0 0.0
    %4640 = vmatpush.msra.mxu0 0.0
    %4641 = vmatpush.msra.mxu0 0.0
    %4642 = vmatpush.msra.mxu0 0.0
    %4643 = vmatpush.msra.mxu0 0.0
    %4644 = vmatpush.msra.mxu0 0.0
    %4645 = vmatpush.msra.mxu0 0.0
    %4646 = vmatpush.msra.mxu0 0.0
    %4647 = vmatpush.msra.mxu0 0.0
    %4648 = vmatpush.msra.mxu0 0.0
    %4649 = vmatpush.msra.mxu0 0.0
    %4650 = vmatpush.msra.mxu0 0.0
    %4651 = vmatpush.msra.mxu0 0.0
    %4652 = vmatpush.msra.mxu0 0.0
    %v4653 = vand.u32 %v4465, 4294901760
    %4654 = vmatpush.msra.mxu0 %v4653
    %v4655 = vand.u32 %v4464, 4294901760
    %4656 = vmatpush.msra.mxu0 %v4655
    %v4657 = vand.u32 %v4471, 4294901760
    %4658 = vmatmul.f32.gmra.mxu0 %v4657
    %v4659 = vpop.f32.mrf.mxu0
    %v4660 = vadd.f32 %v4633, %v4659
    %v4661 = vand.u32 %v4474, 4294901760
    %4662 = vmatmul.f32.gmra.mxu0 %v4661
    %v4663 = vpop.f32.mrf.mxu0
    %v4664 = vadd.f32 %v4637, %v4663
    %4665 = vdwg.mxu0
    %v4666 = vmul.f32 %v4660, %v221
    %v4667 = vmul.f32 %v4664, %v226
    %v4668 = vadd.f32 %v4666, %v169
    %v4669 = vadd.f32 %v4667, %v174
    %4670 = vst.msk [vmem:[%s15] sm:$0xff] %vm148, %v4668
    %4671 = vst.msk [vmem:[%s15 + $0x8] sm:$0xff] %vm148, %v4669
    // Predicated region
    $region86: #{_lambda_.1} parent=1 // pred_check
      _
    $region87: #{_lambda_.1} parent=1 // pred_check_branch
      %4673 = sbr.rel (0) target = $region89
    $region88: #{_lambda_.1} parent=1 // pred_region
      _
    $region89: #{_lambda_.1} parent=1 // pred_fallthru
      _
    // Predicated region
    $region90: #{_lambda_.1} parent=1 // pred_check
      _
    $region91: #{_lambda_.1} parent=1 // pred_check_branch
      %4675 = sbr.rel (0) target = $region93
    $region92: #{_lambda_.1} parent=1 // pred_region
      _
    $region93: #{_lambda_.1} parent=1 // pred_fallthru
      _
    %4676 = vsyncpa [#allocation3], 1
    %4677 = vsyncpa [#allocation5], 1
    %4678 = vsyncpa [#allocation8], 1
    %4679 = vsyncpa [#allocation11], 1

</llo_original>
